<compile_context>
chip_gen: v5e
topology: v5e:2x2
jax: 0.10.0
libtpu: 0.0.40
codegen_flags: <defaults>
</compile_context>

<pallas_src>
import functools

import jax
import jax.numpy as jnp
from jax import lax
from jax.experimental import pallas as pl
from jax.experimental.pallas import tpu as pltpu


# ---------------------------------------------------------------------------
# Kernel
# ---------------------------------------------------------------------------
def _ode_rk4_kernel(dt_ref, y0_ref, w1_ref, b1_ref, w2_ref, b2_ref, out_ref,
                    *, num_steps, unroll, tanh_bf16):
    """Integrate dy/dt = f(y) with torchdiffeq-style fixed-grid RK4 (3/8 rule).

    dt_ref : SMEM (T-1,)     per-step dt (scalar-prefetched)
    y0_ref : VMEM (bt, Fp)   initial flattened state tile (f32)
    w1_ref : VMEM (Fp, Hdp)  first linear layer (bf16)
    b1_ref : VMEM (1, Hdp)   (f32)
    w2_ref : VMEM (Hdp, Fp)  second linear layer (bf16)
    b2_ref : VMEM (1, Fp)    (f32)
    out_ref: VMEM (bt, Fp)   state at final time point (f32)
    """
    y0 = y0_ref[...]                      # f32
    w1 = w1_ref[...]                      # bf16
    w2 = w2_ref[...]                      # bf16
    b1 = b1_ref[...]                      # (1, Hdp) f32 — broadcasts in the add
    b2 = b2_ref[...]                      # (1, Fp)  f32 — broadcasts in the add

    def f(y_f32):
        # bf16 operands on the MXU, f32 accumulation.
        a = jnp.dot(y_f32.astype(jnp.bfloat16), w1,
                    preferred_element_type=jnp.float32) + b1
        if tanh_bf16:
            h = jnp.tanh(a.astype(jnp.bfloat16))          # bf16 EUP, feeds MXU directly
        else:
            h = jnp.tanh(a).astype(jnp.bfloat16)          # f32 EUP path (v5e)
        return jnp.dot(h, w2, preferred_element_type=jnp.float32) + b2

    one_third = jnp.float32(1.0 / 3.0)
    one_eighth = jnp.float32(0.125)

    def step(i, y):
        dt = dt_ref[i]
        # torchdiffeq 'rk4' = rk4_alt_step_func (Runge-Kutta 3/8 rule);
        # f() is t-independent, so only dt is needed.
        k1 = f(y)
        k2 = f(y + dt * k1 * one_third)
        k3 = f(y + dt * (k2 - k1 * one_third))
        k4 = f(y + dt * (k1 - k2 + k3))
        return y + (k1 + 3.0 * (k2 + k3) + k4) * (dt * one_eighth)

    y_final = lax.fori_loop(0, num_steps, step, y0, unroll=unroll)
    out_ref[...] = y_final.astype(out_ref.dtype)


# ---------------------------------------------------------------------------
# Hardware queries & sizing helpers
# ---------------------------------------------------------------------------
def _round_up(x, m):
    return ((x + m - 1) // m) * m


def _cdiv(a, b):
    return -(-a // b)


def _vmem_capacity_bytes():
    try:
        cap = int(pltpu.get_tpu_info().vmem_capacity_bytes)
        if cap > 0:
            return cap
    except Exception:
        pass
    return 64 * 1024 * 1024   # conservative fallback (v7x per-TC VMEM)


def _supports_bf16_eup():
    """v6e / v7x have bf16 VPU/EUP; v5e (and older) do not."""
    try:
        kind = jax.devices()[0].device_kind.lower()
    except Exception:
        return False
    for old in ("v2", "v3", "v4", "v5"):
        if old in kind:
            return False
    return True


def _choose_bt_cap(f_p, hd_p, vmem_cap, is_v7x_like):
    """Largest batch-tile cap whose resident state fits ~80% of VMEM."""
    weights = 2 * f_p * hd_p * 2 + (hd_p + f_p) * 4          # bf16 W1,W2 + f32 biases
    budget = int(0.8 * vmem_cap)
    cap = 128 if is_v7x_like else 256                        # MXU M dim target
    while cap > 8:
        io = 2 * 2 * cap * f_p * 4                           # double-buffered y0 + out
        live = 6 * cap * max(f_p, hd_p) * 4                  # RK4 k's + temps (f32)
        if weights + io + live <= budget:
            break
        cap //= 2
    return max(cap, 8)


def _vmem_limit_bytes(bt, f_p, hd_p, vmem_cap):
    weights = 2 * f_p * hd_p * 2 + (hd_p + f_p) * 4
    io = 2 * 2 * bt * f_p * 4
    live = 8 * bt * max(f_p, hd_p) * 4
    est = int(1.5 * (weights + io + live))
    ceiling = int(0.9 * vmem_cap)                            # never exceed physical VMEM
    return min(ceiling, max(16 * 1024 * 1024, est))


def _pick_unroll(num_steps):
    if num_steps <= 8:
        return max(num_steps, 1)
    if num_steps % 4 == 0:
        return 4
    if num_steps % 2 == 0:
        return 2
    return 1


# ---------------------------------------------------------------------------
# Wrapper (ODEBlock.forward)
# ---------------------------------------------------------------------------
def ode_block_forward(z, timepts, params):
    """ODEBlock.forward:  z (B,C,H,W,D), timepts (T,) -> (B,C,H,W,D)."""
    B, C, H, W, D = z.shape
    F = C * H * W * D
    flat = z.reshape(B, F).astype(jnp.float32)           # == torch z.reshape(B, -1)
    w1, b1, w2, b2 = params
    Hd = w1.shape[1]
    T = int(timepts.shape[0])

    if T < 2:                                             # out[-1] == initial state
        return z

    num_steps = T - 1

    vmem_cap = _vmem_capacity_bytes()
    is_v7x_like = vmem_cap <= 64 * 1024 * 1024            # 2 TCs, 64 MiB VMEM each
    tanh_bf16 = _supports_bf16_eup()

    # --- Pad F and Hd to lane multiples (128). Zero padding keeps padded state 0.
    Fp = _round_up(F, 128)
    Hdp = _round_up(Hd, 128)
    w1p = jnp.pad(w1.astype(jnp.bfloat16), ((0, Fp - F), (0, Hdp - Hd)))
    b1p = jnp.pad(b1.astype(jnp.float32), ((0, 0), (0, Hdp - Hd)))
    w2p = jnp.pad(w2.astype(jnp.bfloat16), ((0, Hdp - Hd), (0, Fp - F)))
    b2p = jnp.pad(b2.astype(jnp.float32), ((0, 0), (0, Fp - F)))

    # --- Pad-minimizing batch tiling; shard across both TCs on v7x.
    bt_cap = _choose_bt_cap(Fp, Hdp, vmem_cap, is_v7x_like)
    B8 = _round_up(B, 8)
    num_tiles = _cdiv(B8, bt_cap)
    if is_v7x_like and B8 >= 16:
        num_tiles = max(num_tiles, 2)
        if num_tiles % 2:
            num_tiles += 1
    bt = _round_up(_cdiv(B, num_tiles), 8)
    padded_B = bt * num_tiles
    flat_p = jnp.pad(flat, ((0, padded_B - B), (0, Fp - F)))

    # --- Precomputed per-step dt (scalar-prefetched to SMEM).
    dts = (timepts[1:] - timepts[:-1]).astype(jnp.float32)

    kernel = functools.partial(
        _ode_rk4_kernel,
        num_steps=num_steps,
        unroll=_pick_unroll(num_steps),
        tanh_bf16=tanh_bf16,
    )

    grid_spec = pltpu.PrefetchScalarGridSpec(
        num_scalar_prefetch=1,                 # dt array -> SMEM, first kernel arg
        grid=(num_tiles,),
        in_specs=[
            pl.BlockSpec((bt, Fp), lambda i, dt: (i, 0)),     # y0 tile
            pl.BlockSpec((Fp, Hdp), lambda i, dt: (0, 0)),    # W1 (shared, resident)
            pl.BlockSpec((1, Hdp), lambda i, dt: (0, 0)),     # b1 (shared)
            pl.BlockSpec((Hdp, Fp), lambda i, dt: (0, 0)),    # W2 (shared, resident)
            pl.BlockSpec((1, Fp), lambda i, dt: (0, 0)),      # b2 (shared)
        ],
        out_specs=pl.BlockSpec((bt, Fp), lambda i, dt: (i, 0)),
    )

    # Advisory cost estimate: 4 f-evals/step, 2 matmuls/f-eval, 2*M*K*N flops each.
    flops = int(num_steps * 16 * padded_B * Fp * Hdp)
    transcendentals = int(num_steps * 4 * padded_B * Hdp)
    bytes_accessed = int(2 * Fp * Hdp * 2 + (Hdp + Fp) * 4 + 2 * padded_B * Fp * 4)
    cost = pl.CostEstimate(flops=flops, transcendentals=transcendentals,
                           bytes_accessed=bytes_accessed)

    out_flat = pl.pallas_call(
        kernel,
        out_shape=jax.ShapeDtypeStruct((padded_B, Fp), jnp.float32),
        grid_spec=grid_spec,
        compiler_params=pltpu.CompilerParams(
            dimension_semantics=("parallel",),
            vmem_limit_bytes=_vmem_limit_bytes(bt, Fp, Hdp, vmem_cap),
        ),
        cost_estimate=cost,
    )(dts, flat_p, w1p, b1p, w2p, b2p)

    return out_flat[:B, :F].reshape(B, C, H, W, D)


# ---------------------------------------------------------------------------
# ODE-function parameters & pure-JAX reference (same precision policy)
# ---------------------------------------------------------------------------
def init_ode_func_params(key, flat_dim, hidden_dim):
    """Deterministic init of the MLP ODE function (Linear -> tanh -> Linear)."""
    k1, k2 = jax.random.split(key)
    scale1 = 1.0 / jnp.sqrt(jnp.float32(flat_dim))
    scale2 = 1.0 / jnp.sqrt(jnp.float32(hidden_dim))
    w1 = jax.random.normal(k1, (flat_dim, hidden_dim), jnp.float32) * scale1
    b1 = jnp.zeros((1, hidden_dim), jnp.float32)
    w2 = jax.random.normal(k2, (hidden_dim, flat_dim), jnp.float32) * scale2
    b2 = jnp.zeros((1, flat_dim), jnp.float32)
    return w1, b1, w2, b2


def _reference_rk4(flat, timepts, params, tanh_bf16):
    """Pure-JAX RK4 (3/8 rule) with the same bf16-matmul precision policy."""
    w1, b1, w2, b2 = params
    w1b, w2b = w1.astype(jnp.bfloat16), w2.astype(jnp.bfloat16)

    def f(y):
        a = jnp.dot(y.astype(jnp.bfloat16), w1b,
                    preferred_element_type=jnp.float32) + b1
        h = jnp.tanh(a.astype(jnp.bfloat16)) if tanh_bf16 else jnp.tanh(a).astype(jnp.bfloat16)
        return jnp.dot(h, w2b, preferred_element_type=jnp.float32) + b2

    y = flat
    for i in range(timepts.shape[0] - 1):
        dt = timepts[i + 1] - timepts[i]
        k1 = f(y)
        k2 = f(y + dt * k1 / 3.0)
        k3 = f(y + dt * (k2 - k1 / 3.0))
        k4 = f(y + dt * (k1 - k2 + k3))
        y = y + (k1 + 3.0 * (k2 + k3) + k4) * (dt / 8.0)
    return y


# ---------------------------------------------------------------------------
# Demo
# ---------------------------------------------------------------------------
if __name__ == "__main__":
    # Small shapes consistent with the 5-D (B, C, H, W, D) input of ODEBlock.
    B, C, H, W, D = 2, 4, 8, 8, 4          # flat dim F = 1024
    HIDDEN = 128
    T = 5                                   # 5 time points -> 4 RK4 steps

    key = jax.random.PRNGKey(0)
    kz, kp = jax.random.split(key)

    z = jax.random.normal(kz, (B, C, H, W, D), jnp.float32)
    timepts = jnp.linspace(0.0, 1.0, T, dtype=jnp.float32)
    params = init_ode_func_params(kp, C * H * W * D, HIDDEN)

    out = ode_block_forward(z, timepts, params)
    jax.block_until_ready(out)

    assert out.shape == (B, C, H, W, D)
    assert out.dtype == jnp.float32
    assert bool(jnp.all(jnp.isfinite(out)))

    # Validate against a pure-JAX reference using the same precision policy.
    ref = _reference_rk4(z.reshape(B, -1).astype(jnp.float32), timepts, params,
                         _supports_bf16_eup()).reshape(B, C, H, W, D)
    assert bool(jnp.allclose(out, ref, rtol=5e-2, atol=5e-2)), (
        float(jnp.max(jnp.abs(out - ref))))

    print("KERNEL_OK")
</pallas_src>

<mosaic_0001>
module attributes {stable_mosaic.version = 11 : i64} {
  func.func @_ode_rk4_kernel(%arg0: i32, %arg1: memref<4xf32, #tpu.memory_space<smem>>, %arg2: memref<8x1024xf32, #tpu.memory_space<vmem>>, %arg3: memref<1024x128xbf16, #tpu.memory_space<vmem>>, %arg4: memref<1x128xf32, #tpu.memory_space<vmem>>, %arg5: memref<128x1024xbf16, #tpu.memory_space<vmem>>, %arg6: memref<1x1024xf32, #tpu.memory_space<vmem>>, %arg7: memref<8x1024xf32, #tpu.memory_space<vmem>>) attributes {dimension_semantics = [#tpu.dimension_semantics<parallel>], iteration_bounds = array<i64: 1>, scalar_prefetch = 1 : i64, scratch_operands = 0 : i64, tpu.core_type = #tpu.core_type<tc>, window_params = [{transform_indices = @transform_0, window_bounds = array<i64: 8, 1024>}, {pipeline_mode = #tpu.pipeline_mode<synchronous>, transform_indices = @transform_1, window_bounds = array<i64: 1024, 128>}, {pipeline_mode = #tpu.pipeline_mode<synchronous>, transform_indices = @transform_2, window_bounds = array<i64: 1, 128>}, {pipeline_mode = #tpu.pipeline_mode<synchronous>, transform_indices = @transform_3, window_bounds = array<i64: 128, 1024>}, {pipeline_mode = #tpu.pipeline_mode<synchronous>, transform_indices = @transform_4, window_bounds = array<i64: 1, 1024>}, {transform_indices = @transform_5, window_bounds = array<i64: 8, 1024>}]} {
    %c0 = arith.constant 0 : index
    %c0_0 = arith.constant 0 : index
    %0 = vector.load %arg2[%c0, %c0_0] : memref<8x1024xf32, #tpu.memory_space<vmem>>, vector<8x1024xf32>
    %c0_1 = arith.constant 0 : index
    %c0_2 = arith.constant 0 : index
    %1 = vector.load %arg3[%c0_1, %c0_2] : memref<1024x128xbf16, #tpu.memory_space<vmem>>, vector<1024x128xbf16>
    %c0_3 = arith.constant 0 : index
    %c0_4 = arith.constant 0 : index
    %2 = vector.load %arg5[%c0_3, %c0_4] : memref<128x1024xbf16, #tpu.memory_space<vmem>>, vector<128x1024xbf16>
    %c0_5 = arith.constant 0 : index
    %c0_6 = arith.constant 0 : index
    %3 = vector.load %arg4[%c0_5, %c0_6] : memref<1x128xf32, #tpu.memory_space<vmem>>, vector<1x128xf32>
    %c0_7 = arith.constant 0 : index
    %c0_8 = arith.constant 0 : index
    %4 = vector.load %arg6[%c0_7, %c0_8] : memref<1x1024xf32, #tpu.memory_space<vmem>>, vector<1x1024xf32>
    %cst = arith.constant 0.333333343 : f32
    %cst_9 = arith.constant 1.250000e-01 : f32
    %c0_i32 = arith.constant 0 : i32
    %5 = arith.index_cast %c0_i32 : i32 to index
    %6 = memref.load %arg1[%5] : memref<4xf32, #tpu.memory_space<smem>>
    %7 = arith.truncf %0 : vector<8x1024xf32> to vector<8x1024xbf16>
    %cst_10 = arith.constant dense<0.000000e+00> : vector<8x128xf32>
    %8 = tpu.matmul %7, %1, %cst_10 {dimension_numbers = #tpu.dot_dimension_numbers<[1], [0], [0], [1], [0, 0, 1, 1], [], []>} : vector<8x1024xbf16>, vector<1024x128xbf16>, vector<8x128xf32> -> vector<8x128xf32>
    %9 = vector.broadcast %3 : vector<1x128xf32> to vector<8x128xf32>
    %10 = arith.addf %8, %9 : vector<8x128xf32>
    %11 = arith.truncf %10 : vector<8x128xf32> to vector<8x128xbf16>
    %12 = math.tanh %11 : vector<8x128xbf16>
    %cst_11 = arith.constant dense<0.000000e+00> : vector<8x1024xf32>
    %13 = tpu.matmul %12, %2, %cst_11 {dimension_numbers = #tpu.dot_dimension_numbers<[1], [0], [0], [1], [0, 0, 1, 1], [], []>} : vector<8x128xbf16>, vector<128x1024xbf16>, vector<8x1024xf32> -> vector<8x1024xf32>
    %14 = vector.broadcast %4 : vector<1x1024xf32> to vector<8x1024xf32>
    %15 = arith.addf %13, %14 : vector<8x1024xf32>
    %16 = vector.broadcast %6 : f32 to vector<8x1024xf32>
    %17 = arith.mulf %16, %15 : vector<8x1024xf32>
    %18 = vector.broadcast %cst : f32 to vector<8x1024xf32>
    %19 = arith.mulf %17, %18 : vector<8x1024xf32>
    %20 = arith.addf %0, %19 : vector<8x1024xf32>
    %21 = arith.truncf %20 : vector<8x1024xf32> to vector<8x1024xbf16>
    %cst_12 = arith.constant dense<0.000000e+00> : vector<8x128xf32>
    %22 = tpu.matmul %21, %1, %cst_12 {dimension_numbers = #tpu.dot_dimension_numbers<[1], [0], [0], [1], [0, 0, 1, 1], [], []>} : vector<8x1024xbf16>, vector<1024x128xbf16>, vector<8x128xf32> -> vector<8x128xf32>
    %23 = vector.broadcast %3 : vector<1x128xf32> to vector<8x128xf32>
    %24 = arith.addf %22, %23 : vector<8x128xf32>
    %25 = arith.truncf %24 : vector<8x128xf32> to vector<8x128xbf16>
    %26 = math.tanh %25 : vector<8x128xbf16>
    %cst_13 = arith.constant dense<0.000000e+00> : vector<8x1024xf32>
    %27 = tpu.matmul %26, %2, %cst_13 {dimension_numbers = #tpu.dot_dimension_numbers<[1], [0], [0], [1], [0, 0, 1, 1], [], []>} : vector<8x128xbf16>, vector<128x1024xbf16>, vector<8x1024xf32> -> vector<8x1024xf32>
    %28 = vector.broadcast %4 : vector<1x1024xf32> to vector<8x1024xf32>
    %29 = arith.addf %27, %28 : vector<8x1024xf32>
    %30 = vector.broadcast %cst : f32 to vector<8x1024xf32>
    %31 = arith.mulf %15, %30 : vector<8x1024xf32>
    %32 = arith.subf %29, %31 : vector<8x1024xf32>
    %33 = vector.broadcast %6 : f32 to vector<8x1024xf32>
    %34 = arith.mulf %33, %32 : vector<8x1024xf32>
    %35 = arith.addf %0, %34 : vector<8x1024xf32>
    %36 = arith.truncf %35 : vector<8x1024xf32> to vector<8x1024xbf16>
    %cst_14 = arith.constant dense<0.000000e+00> : vector<8x128xf32>
    %37 = tpu.matmul %36, %1, %cst_14 {dimension_numbers = #tpu.dot_dimension_numbers<[1], [0], [0], [1], [0, 0, 1, 1], [], []>} : vector<8x1024xbf16>, vector<1024x128xbf16>, vector<8x128xf32> -> vector<8x128xf32>
    %38 = vector.broadcast %3 : vector<1x128xf32> to vector<8x128xf32>
    %39 = arith.addf %37, %38 : vector<8x128xf32>
    %40 = arith.truncf %39 : vector<8x128xf32> to vector<8x128xbf16>
    %41 = math.tanh %40 : vector<8x128xbf16>
    %cst_15 = arith.constant dense<0.000000e+00> : vector<8x1024xf32>
    %42 = tpu.matmul %41, %2, %cst_15 {dimension_numbers = #tpu.dot_dimension_numbers<[1], [0], [0], [1], [0, 0, 1, 1], [], []>} : vector<8x128xbf16>, vector<128x1024xbf16>, vector<8x1024xf32> -> vector<8x1024xf32>
    %43 = vector.broadcast %4 : vector<1x1024xf32> to vector<8x1024xf32>
    %44 = arith.addf %42, %43 : vector<8x1024xf32>
    %45 = arith.subf %15, %29 : vector<8x1024xf32>
    %46 = arith.addf %45, %44 : vector<8x1024xf32>
    %47 = vector.broadcast %6 : f32 to vector<8x1024xf32>
    %48 = arith.mulf %47, %46 : vector<8x1024xf32>
    %49 = arith.addf %0, %48 : vector<8x1024xf32>
    %50 = arith.truncf %49 : vector<8x1024xf32> to vector<8x1024xbf16>
    %cst_16 = arith.constant dense<0.000000e+00> : vector<8x128xf32>
    %51 = tpu.matmul %50, %1, %cst_16 {dimension_numbers = #tpu.dot_dimension_numbers<[1], [0], [0], [1], [0, 0, 1, 1], [], []>} : vector<8x1024xbf16>, vector<1024x128xbf16>, vector<8x128xf32> -> vector<8x128xf32>
    %52 = vector.broadcast %3 : vector<1x128xf32> to vector<8x128xf32>
    %53 = arith.addf %51, %52 : vector<8x128xf32>
    %54 = arith.truncf %53 : vector<8x128xf32> to vector<8x128xbf16>
    %55 = math.tanh %54 : vector<8x128xbf16>
    %cst_17 = arith.constant dense<0.000000e+00> : vector<8x1024xf32>
    %56 = tpu.matmul %55, %2, %cst_17 {dimension_numbers = #tpu.dot_dimension_numbers<[1], [0], [0], [1], [0, 0, 1, 1], [], []>} : vector<8x128xbf16>, vector<128x1024xbf16>, vector<8x1024xf32> -> vector<8x1024xf32>
    %57 = vector.broadcast %4 : vector<1x1024xf32> to vector<8x1024xf32>
    %58 = arith.addf %56, %57 : vector<8x1024xf32>
    %59 = arith.addf %29, %44 : vector<8x1024xf32>
    %cst_18 = arith.constant 3.000000e+00 : f32
    %60 = vector.broadcast %cst_18 : f32 to vector<8x1024xf32>
    %61 = arith.mulf %60, %59 : vector<8x1024xf32>
    %62 = arith.addf %15, %61 : vector<8x1024xf32>
    %63 = arith.addf %62, %58 : vector<8x1024xf32>
    %64 = arith.mulf %6, %cst_9 : f32
    %65 = vector.broadcast %64 : f32 to vector<8x1024xf32>
    %66 = arith.mulf %63, %65 : vector<8x1024xf32>
    %67 = arith.addf %0, %66 : vector<8x1024xf32>
    %c1_i32 = arith.constant 1 : i32
    %68 = arith.index_cast %c1_i32 : i32 to index
    %69 = memref.load %arg1[%68] : memref<4xf32, #tpu.memory_space<smem>>
    %70 = arith.truncf %67 : vector<8x1024xf32> to vector<8x1024xbf16>
    %cst_19 = arith.constant dense<0.000000e+00> : vector<8x128xf32>
    %71 = tpu.matmul %70, %1, %cst_19 {dimension_numbers = #tpu.dot_dimension_numbers<[1], [0], [0], [1], [0, 0, 1, 1], [], []>} : vector<8x1024xbf16>, vector<1024x128xbf16>, vector<8x128xf32> -> vector<8x128xf32>
    %72 = vector.broadcast %3 : vector<1x128xf32> to vector<8x128xf32>
    %73 = arith.addf %71, %72 : vector<8x128xf32>
    %74 = arith.truncf %73 : vector<8x128xf32> to vector<8x128xbf16>
    %75 = math.tanh %74 : vector<8x128xbf16>
    %cst_20 = arith.constant dense<0.000000e+00> : vector<8x1024xf32>
    %76 = tpu.matmul %75, %2, %cst_20 {dimension_numbers = #tpu.dot_dimension_numbers<[1], [0], [0], [1], [0, 0, 1, 1], [], []>} : vector<8x128xbf16>, vector<128x1024xbf16>, vector<8x1024xf32> -> vector<8x1024xf32>
    %77 = vector.broadcast %4 : vector<1x1024xf32> to vector<8x1024xf32>
    %78 = arith.addf %76, %77 : vector<8x1024xf32>
    %79 = vector.broadcast %69 : f32 to vector<8x1024xf32>
    %80 = arith.mulf %79, %78 : vector<8x1024xf32>
    %81 = vector.broadcast %cst : f32 to vector<8x1024xf32>
    %82 = arith.mulf %80, %81 : vector<8x1024xf32>
    %83 = arith.addf %67, %82 : vector<8x1024xf32>
    %84 = arith.truncf %83 : vector<8x1024xf32> to vector<8x1024xbf16>
    %cst_21 = arith.constant dense<0.000000e+00> : vector<8x128xf32>
    %85 = tpu.matmul %84, %1, %cst_21 {dimension_numbers = #tpu.dot_dimension_numbers<[1], [0], [0], [1], [0, 0, 1, 1], [], []>} : vector<8x1024xbf16>, vector<1024x128xbf16>, vector<8x128xf32> -> vector<8x128xf32>
    %86 = vector.broadcast %3 : vector<1x128xf32> to vector<8x128xf32>
    %87 = arith.addf %85, %86 : vector<8x128xf32>
    %88 = arith.truncf %87 : vector<8x128xf32> to vector<8x128xbf16>
    %89 = math.tanh %88 : vector<8x128xbf16>
    %cst_22 = arith.constant dense<0.000000e+00> : vector<8x1024xf32>
    %90 = tpu.matmul %89, %2, %cst_22 {dimension_numbers = #tpu.dot_dimension_numbers<[1], [0], [0], [1], [0, 0, 1, 1], [], []>} : vector<8x128xbf16>, vector<128x1024xbf16>, vector<8x1024xf32> -> vector<8x1024xf32>
    %91 = vector.broadcast %4 : vector<1x1024xf32> to vector<8x1024xf32>
    %92 = arith.addf %90, %91 : vector<8x1024xf32>
    %93 = vector.broadcast %cst : f32 to vector<8x1024xf32>
    %94 = arith.mulf %78, %93 : vector<8x1024xf32>
    %95 = arith.subf %92, %94 : vector<8x1024xf32>
    %96 = vector.broadcast %69 : f32 to vector<8x1024xf32>
    %97 = arith.mulf %96, %95 : vector<8x1024xf32>
    %98 = arith.addf %67, %97 : vector<8x1024xf32>
    %99 = arith.truncf %98 : vector<8x1024xf32> to vector<8x1024xbf16>
    %cst_23 = arith.constant dense<0.000000e+00> : vector<8x128xf32>
    %100 = tpu.matmul %99, %1, %cst_23 {dimension_numbers = #tpu.dot_dimension_numbers<[1], [0], [0], [1], [0, 0, 1, 1], [], []>} : vector<8x1024xbf16>, vector<1024x128xbf16>, vector<8x128xf32> -> vector<8x128xf32>
    %101 = vector.broadcast %3 : vector<1x128xf32> to vector<8x128xf32>
    %102 = arith.addf %100, %101 : vector<8x128xf32>
    %103 = arith.truncf %102 : vector<8x128xf32> to vector<8x128xbf16>
    %104 = math.tanh %103 : vector<8x128xbf16>
    %cst_24 = arith.constant dense<0.000000e+00> : vector<8x1024xf32>
    %105 = tpu.matmul %104, %2, %cst_24 {dimension_numbers = #tpu.dot_dimension_numbers<[1], [0], [0], [1], [0, 0, 1, 1], [], []>} : vector<8x128xbf16>, vector<128x1024xbf16>, vector<8x1024xf32> -> vector<8x1024xf32>
    %106 = vector.broadcast %4 : vector<1x1024xf32> to vector<8x1024xf32>
    %107 = arith.addf %105, %106 : vector<8x1024xf32>
    %108 = arith.subf %78, %92 : vector<8x1024xf32>
    %109 = arith.addf %108, %107 : vector<8x1024xf32>
    %110 = vector.broadcast %69 : f32 to vector<8x1024xf32>
    %111 = arith.mulf %110, %109 : vector<8x1024xf32>
    %112 = arith.addf %67, %111 : vector<8x1024xf32>
    %113 = arith.truncf %112 : vector<8x1024xf32> to vector<8x1024xbf16>
    %cst_25 = arith.constant dense<0.000000e+00> : vector<8x128xf32>
    %114 = tpu.matmul %113, %1, %cst_25 {dimension_numbers = #tpu.dot_dimension_numbers<[1], [0], [0], [1], [0, 0, 1, 1], [], []>} : vector<8x1024xbf16>, vector<1024x128xbf16>, vector<8x128xf32> -> vector<8x128xf32>
    %115 = vector.broadcast %3 : vector<1x128xf32> to vector<8x128xf32>
    %116 = arith.addf %114, %115 : vector<8x128xf32>
    %117 = arith.truncf %116 : vector<8x128xf32> to vector<8x128xbf16>
    %118 = math.tanh %117 : vector<8x128xbf16>
    %cst_26 = arith.constant dense<0.000000e+00> : vector<8x1024xf32>
    %119 = tpu.matmul %118, %2, %cst_26 {dimension_numbers = #tpu.dot_dimension_numbers<[1], [0], [0], [1], [0, 0, 1, 1], [], []>} : vector<8x128xbf16>, vector<128x1024xbf16>, vector<8x1024xf32> -> vector<8x1024xf32>
    %120 = vector.broadcast %4 : vector<1x1024xf32> to vector<8x1024xf32>
    %121 = arith.addf %119, %120 : vector<8x1024xf32>
    %122 = arith.addf %92, %107 : vector<8x1024xf32>
    %cst_27 = arith.constant 3.000000e+00 : f32
    %123 = vector.broadcast %cst_27 : f32 to vector<8x1024xf32>
    %124 = arith.mulf %123, %122 : vector<8x1024xf32>
    %125 = arith.addf %78, %124 : vector<8x1024xf32>
    %126 = arith.addf %125, %121 : vector<8x1024xf32>
    %127 = arith.mulf %69, %cst_9 : f32
    %128 = vector.broadcast %127 : f32 to vector<8x1024xf32>
    %129 = arith.mulf %126, %128 : vector<8x1024xf32>
    %130 = arith.addf %67, %129 : vector<8x1024xf32>
    %c2_i32 = arith.constant 2 : i32
    %131 = arith.index_cast %c2_i32 : i32 to index
    %132 = memref.load %arg1[%131] : memref<4xf32, #tpu.memory_space<smem>>
    %133 = arith.truncf %130 : vector<8x1024xf32> to vector<8x1024xbf16>
    %cst_28 = arith.constant dense<0.000000e+00> : vector<8x128xf32>
    %134 = tpu.matmul %133, %1, %cst_28 {dimension_numbers = #tpu.dot_dimension_numbers<[1], [0], [0], [1], [0, 0, 1, 1], [], []>} : vector<8x1024xbf16>, vector<1024x128xbf16>, vector<8x128xf32> -> vector<8x128xf32>
    %135 = vector.broadcast %3 : vector<1x128xf32> to vector<8x128xf32>
    %136 = arith.addf %134, %135 : vector<8x128xf32>
    %137 = arith.truncf %136 : vector<8x128xf32> to vector<8x128xbf16>
    %138 = math.tanh %137 : vector<8x128xbf16>
    %cst_29 = arith.constant dense<0.000000e+00> : vector<8x1024xf32>
    %139 = tpu.matmul %138, %2, %cst_29 {dimension_numbers = #tpu.dot_dimension_numbers<[1], [0], [0], [1], [0, 0, 1, 1], [], []>} : vector<8x128xbf16>, vector<128x1024xbf16>, vector<8x1024xf32> -> vector<8x1024xf32>
    %140 = vector.broadcast %4 : vector<1x1024xf32> to vector<8x1024xf32>
    %141 = arith.addf %139, %140 : vector<8x1024xf32>
    %142 = vector.broadcast %132 : f32 to vector<8x1024xf32>
    %143 = arith.mulf %142, %141 : vector<8x1024xf32>
    %144 = vector.broadcast %cst : f32 to vector<8x1024xf32>
    %145 = arith.mulf %143, %144 : vector<8x1024xf32>
    %146 = arith.addf %130, %145 : vector<8x1024xf32>
    %147 = arith.truncf %146 : vector<8x1024xf32> to vector<8x1024xbf16>
    %cst_30 = arith.constant dense<0.000000e+00> : vector<8x128xf32>
    %148 = tpu.matmul %147, %1, %cst_30 {dimension_numbers = #tpu.dot_dimension_numbers<[1], [0], [0], [1], [0, 0, 1, 1], [], []>} : vector<8x1024xbf16>, vector<1024x128xbf16>, vector<8x128xf32> -> vector<8x128xf32>
    %149 = vector.broadcast %3 : vector<1x128xf32> to vector<8x128xf32>
    %150 = arith.addf %148, %149 : vector<8x128xf32>
    %151 = arith.truncf %150 : vector<8x128xf32> to vector<8x128xbf16>
    %152 = math.tanh %151 : vector<8x128xbf16>
    %cst_31 = arith.constant dense<0.000000e+00> : vector<8x1024xf32>
    %153 = tpu.matmul %152, %2, %cst_31 {dimension_numbers = #tpu.dot_dimension_numbers<[1], [0], [0], [1], [0, 0, 1, 1], [], []>} : vector<8x128xbf16>, vector<128x1024xbf16>, vector<8x1024xf32> -> vector<8x1024xf32>
    %154 = vector.broadcast %4 : vector<1x1024xf32> to vector<8x1024xf32>
    %155 = arith.addf %153, %154 : vector<8x1024xf32>
    %156 = vector.broadcast %cst : f32 to vector<8x1024xf32>
    %157 = arith.mulf %141, %156 : vector<8x1024xf32>
    %158 = arith.subf %155, %157 : vector<8x1024xf32>
    %159 = vector.broadcast %132 : f32 to vector<8x1024xf32>
    %160 = arith.mulf %159, %158 : vector<8x1024xf32>
    %161 = arith.addf %130, %160 : vector<8x1024xf32>
    %162 = arith.truncf %161 : vector<8x1024xf32> to vector<8x1024xbf16>
    %cst_32 = arith.constant dense<0.000000e+00> : vector<8x128xf32>
    %163 = tpu.matmul %162, %1, %cst_32 {dimension_numbers = #tpu.dot_dimension_numbers<[1], [0], [0], [1], [0, 0, 1, 1], [], []>} : vector<8x1024xbf16>, vector<1024x128xbf16>, vector<8x128xf32> -> vector<8x128xf32>
    %164 = vector.broadcast %3 : vector<1x128xf32> to vector<8x128xf32>
    %165 = arith.addf %163, %164 : vector<8x128xf32>
    %166 = arith.truncf %165 : vector<8x128xf32> to vector<8x128xbf16>
    %167 = math.tanh %166 : vector<8x128xbf16>
    %cst_33 = arith.constant dense<0.000000e+00> : vector<8x1024xf32>
    %168 = tpu.matmul %167, %2, %cst_33 {dimension_numbers = #tpu.dot_dimension_numbers<[1], [0], [0], [1], [0, 0, 1, 1], [], []>} : vector<8x128xbf16>, vector<128x1024xbf16>, vector<8x1024xf32> -> vector<8x1024xf32>
    %169 = vector.broadcast %4 : vector<1x1024xf32> to vector<8x1024xf32>
    %170 = arith.addf %168, %169 : vector<8x1024xf32>
    %171 = arith.subf %141, %155 : vector<8x1024xf32>
    %172 = arith.addf %171, %170 : vector<8x1024xf32>
    %173 = vector.broadcast %132 : f32 to vector<8x1024xf32>
    %174 = arith.mulf %173, %172 : vector<8x1024xf32>
    %175 = arith.addf %130, %174 : vector<8x1024xf32>
    %176 = arith.truncf %175 : vector<8x1024xf32> to vector<8x1024xbf16>
    %cst_34 = arith.constant dense<0.000000e+00> : vector<8x128xf32>
    %177 = tpu.matmul %176, %1, %cst_34 {dimension_numbers = #tpu.dot_dimension_numbers<[1], [0], [0], [1], [0, 0, 1, 1], [], []>} : vector<8x1024xbf16>, vector<1024x128xbf16>, vector<8x128xf32> -> vector<8x128xf32>
    %178 = vector.broadcast %3 : vector<1x128xf32> to vector<8x128xf32>
    %179 = arith.addf %177, %178 : vector<8x128xf32>
    %180 = arith.truncf %179 : vector<8x128xf32> to vector<8x128xbf16>
    %181 = math.tanh %180 : vector<8x128xbf16>
    %cst_35 = arith.constant dense<0.000000e+00> : vector<8x1024xf32>
    %182 = tpu.matmul %181, %2, %cst_35 {dimension_numbers = #tpu.dot_dimension_numbers<[1], [0], [0], [1], [0, 0, 1, 1], [], []>} : vector<8x128xbf16>, vector<128x1024xbf16>, vector<8x1024xf32> -> vector<8x1024xf32>
    %183 = vector.broadcast %4 : vector<1x1024xf32> to vector<8x1024xf32>
    %184 = arith.addf %182, %183 : vector<8x1024xf32>
    %185 = arith.addf %155, %170 : vector<8x1024xf32>
    %cst_36 = arith.constant 3.000000e+00 : f32
    %186 = vector.broadcast %cst_36 : f32 to vector<8x1024xf32>
    %187 = arith.mulf %186, %185 : vector<8x1024xf32>
    %188 = arith.addf %141, %187 : vector<8x1024xf32>
    %189 = arith.addf %188, %184 : vector<8x1024xf32>
    %190 = arith.mulf %132, %cst_9 : f32
    %191 = vector.broadcast %190 : f32 to vector<8x1024xf32>
    %192 = arith.mulf %189, %191 : vector<8x1024xf32>
    %193 = arith.addf %130, %192 : vector<8x1024xf32>
    %c3_i32 = arith.constant 3 : i32
    %194 = arith.index_cast %c3_i32 : i32 to index
    %195 = memref.load %arg1[%194] : memref<4xf32, #tpu.memory_space<smem>>
    %196 = arith.truncf %193 : vector<8x1024xf32> to vector<8x1024xbf16>
    %cst_37 = arith.constant dense<0.000000e+00> : vector<8x128xf32>
    %197 = tpu.matmul %196, %1, %cst_37 {dimension_numbers = #tpu.dot_dimension_numbers<[1], [0], [0], [1], [0, 0, 1, 1], [], []>} : vector<8x1024xbf16>, vector<1024x128xbf16>, vector<8x128xf32> -> vector<8x128xf32>
    %198 = vector.broadcast %3 : vector<1x128xf32> to vector<8x128xf32>
    %199 = arith.addf %197, %198 : vector<8x128xf32>
    %200 = arith.truncf %199 : vector<8x128xf32> to vector<8x128xbf16>
    %201 = math.tanh %200 : vector<8x128xbf16>
    %cst_38 = arith.constant dense<0.000000e+00> : vector<8x1024xf32>
    %202 = tpu.matmul %201, %2, %cst_38 {dimension_numbers = #tpu.dot_dimension_numbers<[1], [0], [0], [1], [0, 0, 1, 1], [], []>} : vector<8x128xbf16>, vector<128x1024xbf16>, vector<8x1024xf32> -> vector<8x1024xf32>
    %203 = vector.broadcast %4 : vector<1x1024xf32> to vector<8x1024xf32>
    %204 = arith.addf %202, %203 : vector<8x1024xf32>
    %205 = vector.broadcast %195 : f32 to vector<8x1024xf32>
    %206 = arith.mulf %205, %204 : vector<8x1024xf32>
    %207 = vector.broadcast %cst : f32 to vector<8x1024xf32>
    %208 = arith.mulf %206, %207 : vector<8x1024xf32>
    %209 = arith.addf %193, %208 : vector<8x1024xf32>
    %210 = arith.truncf %209 : vector<8x1024xf32> to vector<8x1024xbf16>
    %cst_39 = arith.constant dense<0.000000e+00> : vector<8x128xf32>
    %211 = tpu.matmul %210, %1, %cst_39 {dimension_numbers = #tpu.dot_dimension_numbers<[1], [0], [0], [1], [0, 0, 1, 1], [], []>} : vector<8x1024xbf16>, vector<1024x128xbf16>, vector<8x128xf32> -> vector<8x128xf32>
    %212 = vector.broadcast %3 : vector<1x128xf32> to vector<8x128xf32>
    %213 = arith.addf %211, %212 : vector<8x128xf32>
    %214 = arith.truncf %213 : vector<8x128xf32> to vector<8x128xbf16>
    %215 = math.tanh %214 : vector<8x128xbf16>
    %cst_40 = arith.constant dense<0.000000e+00> : vector<8x1024xf32>
    %216 = tpu.matmul %215, %2, %cst_40 {dimension_numbers = #tpu.dot_dimension_numbers<[1], [0], [0], [1], [0, 0, 1, 1], [], []>} : vector<8x128xbf16>, vector<128x1024xbf16>, vector<8x1024xf32> -> vector<8x1024xf32>
    %217 = vector.broadcast %4 : vector<1x1024xf32> to vector<8x1024xf32>
    %218 = arith.addf %216, %217 : vector<8x1024xf32>
    %219 = vector.broadcast %cst : f32 to vector<8x1024xf32>
    %220 = arith.mulf %204, %219 : vector<8x1024xf32>
    %221 = arith.subf %218, %220 : vector<8x1024xf32>
    %222 = vector.broadcast %195 : f32 to vector<8x1024xf32>
    %223 = arith.mulf %222, %221 : vector<8x1024xf32>
    %224 = arith.addf %193, %223 : vector<8x1024xf32>
    %225 = arith.truncf %224 : vector<8x1024xf32> to vector<8x1024xbf16>
    %cst_41 = arith.constant dense<0.000000e+00> : vector<8x128xf32>
    %226 = tpu.matmul %225, %1, %cst_41 {dimension_numbers = #tpu.dot_dimension_numbers<[1], [0], [0], [1], [0, 0, 1, 1], [], []>} : vector<8x1024xbf16>, vector<1024x128xbf16>, vector<8x128xf32> -> vector<8x128xf32>
    %227 = vector.broadcast %3 : vector<1x128xf32> to vector<8x128xf32>
    %228 = arith.addf %226, %227 : vector<8x128xf32>
    %229 = arith.truncf %228 : vector<8x128xf32> to vector<8x128xbf16>
    %230 = math.tanh %229 : vector<8x128xbf16>
    %cst_42 = arith.constant dense<0.000000e+00> : vector<8x1024xf32>
    %231 = tpu.matmul %230, %2, %cst_42 {dimension_numbers = #tpu.dot_dimension_numbers<[1], [0], [0], [1], [0, 0, 1, 1], [], []>} : vector<8x128xbf16>, vector<128x1024xbf16>, vector<8x1024xf32> -> vector<8x1024xf32>
    %232 = vector.broadcast %4 : vector<1x1024xf32> to vector<8x1024xf32>
    %233 = arith.addf %231, %232 : vector<8x1024xf32>
    %234 = arith.subf %204, %218 : vector<8x1024xf32>
    %235 = arith.addf %234, %233 : vector<8x1024xf32>
    %236 = vector.broadcast %195 : f32 to vector<8x1024xf32>
    %237 = arith.mulf %236, %235 : vector<8x1024xf32>
    %238 = arith.addf %193, %237 : vector<8x1024xf32>
    %239 = arith.truncf %238 : vector<8x1024xf32> to vector<8x1024xbf16>
    %cst_43 = arith.constant dense<0.000000e+00> : vector<8x128xf32>
    %240 = tpu.matmul %239, %1, %cst_43 {dimension_numbers = #tpu.dot_dimension_numbers<[1], [0], [0], [1], [0, 0, 1, 1], [], []>} : vector<8x1024xbf16>, vector<1024x128xbf16>, vector<8x128xf32> -> vector<8x128xf32>
    %241 = vector.broadcast %3 : vector<1x128xf32> to vector<8x128xf32>
    %242 = arith.addf %240, %241 : vector<8x128xf32>
    %243 = arith.truncf %242 : vector<8x128xf32> to vector<8x128xbf16>
    %244 = math.tanh %243 : vector<8x128xbf16>
    %cst_44 = arith.constant dense<0.000000e+00> : vector<8x1024xf32>
    %245 = tpu.matmul %244, %2, %cst_44 {dimension_numbers = #tpu.dot_dimension_numbers<[1], [0], [0], [1], [0, 0, 1, 1], [], []>} : vector<8x128xbf16>, vector<128x1024xbf16>, vector<8x1024xf32> -> vector<8x1024xf32>
    %246 = vector.broadcast %4 : vector<1x1024xf32> to vector<8x1024xf32>
    %247 = arith.addf %245, %246 : vector<8x1024xf32>
    %248 = arith.addf %218, %233 : vector<8x1024xf32>
    %cst_45 = arith.constant 3.000000e+00 : f32
    %249 = vector.broadcast %cst_45 : f32 to vector<8x1024xf32>
    %250 = arith.mulf %249, %248 : vector<8x1024xf32>
    %251 = arith.addf %204, %250 : vector<8x1024xf32>
    %252 = arith.addf %251, %247 : vector<8x1024xf32>
    %253 = arith.mulf %195, %cst_9 : f32
    %254 = vector.broadcast %253 : f32 to vector<8x1024xf32>
    %255 = arith.mulf %252, %254 : vector<8x1024xf32>
    %256 = arith.addf %193, %255 : vector<8x1024xf32>
    %c4_i32 = arith.constant 4 : i32
    %c0_46 = arith.constant 0 : index
    %c0_47 = arith.constant 0 : index
    %257 = vector.load %arg7[%c0_46, %c0_47] : memref<8x1024xf32, #tpu.memory_space<vmem>>, vector<8x1024xf32>
    tpu.vector_store %arg7[%c0_46, %c0_47], %256 {strides = array<i32>} : memref<8x1024xf32, #tpu.memory_space<vmem>>, vector<8x1024xf32>,
    return
  }
  func.func @transform_0(%arg0: i32, %arg1: memref<4xf32, #tpu.memory_space<smem>>) -> (i32, i32) {
    %c0_i32 = arith.constant 0 : i32
    %c0_i32_0 = arith.constant 0 : i32
    return %arg0, %c0_i32 : i32, i32
  }
  func.func @transform_1(%arg0: i32, %arg1: memref<4xf32, #tpu.memory_space<smem>>) -> (i32, i32) {
    %c0_i32 = arith.constant 0 : i32
    %c0_i32_0 = arith.constant 0 : i32
    %c0_i32_1 = arith.constant 0 : i32
    return %c0_i32, %c0_i32_0 : i32, i32
  }
  func.func @transform_2(%arg0: i32, %arg1: memref<4xf32, #tpu.memory_space<smem>>) -> (i32, i32) {
    %c0_i32 = arith.constant 0 : i32
    %c0_i32_0 = arith.constant 0 : i32
    %c0_i32_1 = arith.constant 0 : i32
    return %c0_i32, %c0_i32_0 : i32, i32
  }
  func.func @transform_3(%arg0: i32, %arg1: memref<4xf32, #tpu.memory_space<smem>>) -> (i32, i32) {
    %c0_i32 = arith.constant 0 : i32
    %c0_i32_0 = arith.constant 0 : i32
    %c0_i32_1 = arith.constant 0 : i32
    return %c0_i32, %c0_i32_0 : i32, i32
  }
  func.func @transform_4(%arg0: i32, %arg1: memref<4xf32, #tpu.memory_space<smem>>) -> (i32, i32) {
    %c0_i32 = arith.constant 0 : i32
    %c0_i32_0 = arith.constant 0 : i32
    %c0_i32_1 = arith.constant 0 : i32
    return %c0_i32, %c0_i32_0 : i32, i32
  }
  func.func @transform_5(%arg0: i32, %arg1: memref<4xf32, #tpu.memory_space<smem>>) -> (i32, i32) {
    %c0_i32 = arith.constant 0 : i32
    %c0_i32_0 = arith.constant 0 : i32
    return %arg0, %c0_i32 : i32, i32
  }
}

</mosaic_0001>

<llo_original>
// kernel: tpu_custom_call.1
$region0: #{tpu_custom_call.1}
  #allocation0 [shape = 'u32[]', space=smem, size = 0x4, offset = 0x4, fixed_abs, tag = 'smem constant byte address 0x4 - core index']
  #allocation1 [shape = 'u32[72,128]{1,0:T(1,128)}', space=vmem, size = 0x9000, scoped, tag = 'internal scratch']
  #allocation2 [shape = 's32[1]{0}', space=sflag, size = 0x4, scoped, tag = 'scoped memory for tpu_custom_call.1']
  #allocation3 [shape = 'u8[512]{0}', space=smem, size = 0x200, scoped, tag = 'prefetched SMEM operand 0']
  %s0 = inlined_call_operand.hbm [shape: f32[4], index: 0, kind: input, shape index: {}]
  %s1 = inlined_call_operand.hbm [shape: f32[8,1024], index: 1, kind: input, shape index: {}]
  %s2 = inlined_call_operand.hbm [shape: bf16[1024,128], index: 2, kind: input, shape index: {}]
  %s3 = inlined_call_operand.vmem [shape: f32[1,128], index: 3, kind: input, shape index: {}]
  %s4 = inlined_call_operand.hbm [shape: bf16[128,1024], index: 4, kind: input, shape index: {}]
  %s5 = inlined_call_operand.hbm [shape: f32[1,1024], index: 5, kind: input, shape index: {}]
  %s6 = inlined_call_operand.hbm [shape: f32[8,1024], index: 6, kind: output, shape index: {}]
  %s7 = sld [smem:[#allocation0]]
  $region46: #{tpu_custom_call.1} parent=0
    _
  %s9 = ssub.s32 1, %s7
  %s10 = scalar_select 0, %s9, %s7
  %s12 = sshll.u32 %s0, 4
  %s13 = int_to_ptr.hbm [resolvable:$true] %s12
  %15 = dma.hbm_to_smem %s13, 16, [#allocation3], [#allocation2]
  %17 = dma.done [#allocation2], 16
  %18 = sfence
  $region1: #{tpu_custom_call.1} parent=0
    #allocation4 [shape = 'u8[32768]{0}', space=vmem, size = 0x8000, scoped, tag = 'input window, operand 1, single buffered']
    #allocation5 [shape = 's32[1]{0}', space=sflag, size = 0x4, scoped, tag = 'scoped memory for tpu_custom_call.1']
    #allocation6 [shape = 's32[1]{0}', space=sflag, size = 0x4, scoped, tag = 'scoped memory for tpu_custom_call.1']
    #allocation7 [shape = 'u8[262144]{0}', space=vmem, size = 0x40000, scoped, tag = 'input window, operand 2, single buffered']
    #allocation8 [shape = 's32[1]{0}', space=sflag, size = 0x4, scoped, tag = 'scoped memory for tpu_custom_call.1']
    #allocation9 [shape = 'u8[262144]{0}', space=vmem, size = 0x40000, scoped, tag = 'input window, operand 4, single buffered']
    #allocation10 [shape = 'u8[4096]{0}', space=vmem, size = 0x1000, scoped, tag = 'input window, operand 5, single buffered']
    #allocation11 [shape = 's32[1]{0}', space=sflag, size = 0x4, scoped, tag = 'scoped memory for tpu_custom_call.1']
    #allocation12 [shape = 'u8[32768]{0}', space=vmem, size = 0x8000, scoped, tag = 'output window, operand 0, single buffered']
    %19 = vsyncpa [#allocation5], 0
    %20 = vsyncpa [#allocation8], 0
    %21 = vsyncpa [#allocation11], 0
    %22 = vsyncpa [#allocation6], 0
    // Predicated region
    $region2: #{tpu_custom_call.1} parent=1 // pred_check
      _
    $region3: #{tpu_custom_call.1} parent=1 // pred_check_branch
      %24 = sbr.rel (0) target = $region5
    $region4: #{tpu_custom_call.1} parent=1 // pred_region
      %26 = vsyncadd [#allocation5], 0
      %s28 = sshll.u32 %s1, 4
      %s29 = int_to_ptr.hbm [resolvable:$true] %s28
      %s30 = sshll.u32 [#allocation4], 4
      %s31 = int_to_ptr.vmem [resolvable:$true] %s30
      %33 = dma.hbm_to_vmem [thread:$0]  %s29, 1024, %s31, [#allocation5]
    $region5: #{tpu_custom_call.1} parent=1 // pred_fallthru
      _
    // Predicated region
    $region6: #{tpu_custom_call.1} parent=1 // pred_check
      _
    $region7: #{tpu_custom_call.1} parent=1 // pred_check_branch
      %35 = sbr.rel (0) target = $region9
    $region8: #{tpu_custom_call.1} parent=1 // pred_region
      %37 = vsyncadd [#allocation8], 0
      %s38 = sshll.u32 %s2, 4
      %s39 = int_to_ptr.hbm [resolvable:$true] %s38
      %s40 = sshll.u32 [#allocation7], 4
      %s41 = int_to_ptr.vmem [resolvable:$true] %s40
      %46 = dma.hbm_to_vmem [thread:$0]  %s39, 8192, %s41, [#allocation8], 64, 64, 4
    $region9: #{tpu_custom_call.1} parent=1 // pred_fallthru
      _
    // Predicated region
    $region10: #{tpu_custom_call.1} parent=1 // pred_check
      _
    $region11: #{tpu_custom_call.1} parent=1 // pred_check_branch
      %48 = sbr.rel (0) target = $region13
    $region12: #{tpu_custom_call.1} parent=1 // pred_region
      _
    $region13: #{tpu_custom_call.1} parent=1 // pred_fallthru
      _
    // Predicated region
    $region14: #{tpu_custom_call.1} parent=1 // pred_check
      _
    $region15: #{tpu_custom_call.1} parent=1 // pred_check_branch
      %50 = sbr.rel (0) target = $region17
    $region16: #{tpu_custom_call.1} parent=1 // pred_region
      %52 = vsyncadd [#allocation8], 0
      %s53 = sshll.u32 %s4, 4
      %s54 = int_to_ptr.hbm [resolvable:$true] %s53
      %s55 = sshll.u32 [#allocation9], 4
      %s56 = int_to_ptr.vmem [resolvable:$true] %s55
      %61 = dma.hbm_to_vmem [thread:$0]  %s54, 8192, %s56, [#allocation8], 512, 512, 32
    $region17: #{tpu_custom_call.1} parent=1 // pred_fallthru
      _
    // Predicated region
    $region18: #{tpu_custom_call.1} parent=1 // pred_check
      _
    $region19: #{tpu_custom_call.1} parent=1 // pred_check_branch
      %63 = sbr.rel (0) target = $region21
    $region20: #{tpu_custom_call.1} parent=1 // pred_region
      %65 = vsyncadd [#allocation11], 0
      %s67 = sshll.u32 %s5, 4
      %s68 = int_to_ptr.hbm [resolvable:$true] %s67
      %s69 = sshll.u32 [#allocation10], 4
      %s70 = int_to_ptr.vmem [resolvable:$true] %s69
      %72 = dma.hbm_to_vmem [thread:$0]  %s68, 128, %s70, [#allocation11]
    $region21: #{tpu_custom_call.1} parent=1 // pred_fallthru
      _
    // Predicated region
    $region22: #{tpu_custom_call.1} parent=1 // pred_check
      _
    $region23: #{tpu_custom_call.1} parent=1 // pred_check_branch
      %74 = sbr.rel (0) target = $region25
    $region24: #{tpu_custom_call.1} parent=1 // pred_region
      %76 = dma.done [#allocation5], 1024
    $region25: #{tpu_custom_call.1} parent=1 // pred_fallthru
      _
    // Predicated region
    $region26: #{tpu_custom_call.1} parent=1 // pred_check
      _
    $region27: #{tpu_custom_call.1} parent=1 // pred_check_branch
      %78 = sbr.rel (0) target = $region29
    $region28: #{tpu_custom_call.1} parent=1 // pred_region
      %80 = dma.done [#allocation8], 8192
    $region29: #{tpu_custom_call.1} parent=1 // pred_fallthru
      _
    // Predicated region
    $region30: #{tpu_custom_call.1} parent=1 // pred_check
      _
    $region31: #{tpu_custom_call.1} parent=1 // pred_check_branch
      %82 = sbr.rel (0) target = $region33
    $region32: #{tpu_custom_call.1} parent=1 // pred_region
      %84 = dma.done [#allocation8], 8192
    $region33: #{tpu_custom_call.1} parent=1 // pred_fallthru
      _
    // Predicated region
    $region34: #{tpu_custom_call.1} parent=1 // pred_check
      _
    $region35: #{tpu_custom_call.1} parent=1 // pred_check_branch
      %86 = sbr.rel (0) target = $region37
    $region36: #{tpu_custom_call.1} parent=1 // pred_region
      %88 = dma.done [#allocation11], 128
    $region37: #{tpu_custom_call.1} parent=1 // pred_fallthru
      _
    %v89 = vld [vmem:[#allocation4] sm:$0xff]
    %v90 = vld [vmem:[#allocation4 + $0x8] sm:$0xff]
    %v91 = vld [vmem:[#allocation4 + $0x10] sm:$0xff]
    %v92 = vld [vmem:[#allocation4 + $0x18] sm:$0xff]
    %v93 = vld [vmem:[#allocation4 + $0x20] sm:$0xff]
    %v94 = vld [vmem:[#allocation4 + $0x28] sm:$0xff]
    %v95 = vld [vmem:[#allocation4 + $0x30] sm:$0xff]
    %v96 = vld [vmem:[#allocation4 + $0x38] sm:$0xff]
    %v97 = vld [vmem:[#allocation7] sm:$0xf]
    %v98 = vld [vmem:[#allocation7 + $0x4] sm:$0xf]
    %v99 = vld [vmem:[#allocation7 + $0x8] sm:$0xf]
    %v100 = vld [vmem:[#allocation7 + $0xc] sm:$0xf]
    %v101 = vld [vmem:[#allocation7 + $0x10] sm:$0xf]
    %v102 = vld [vmem:[#allocation7 + $0x14] sm:$0xf]
    %v103 = vld [vmem:[#allocation7 + $0x18] sm:$0xf]
    %v104 = vld [vmem:[#allocation7 + $0x1c] sm:$0xf]
    %v105 = vld [vmem:[#allocation7 + $0x20] sm:$0xf]
    %v106 = vld [vmem:[#allocation7 + $0x24] sm:$0xf]
    %v107 = vld [vmem:[#allocation7 + $0x28] sm:$0xf]
    %v108 = vld [vmem:[#allocation7 + $0x2c] sm:$0xf]
    %v109 = vld [vmem:[#allocation7 + $0x30] sm:$0xf]
    %v110 = vld [vmem:[#allocation7 + $0x34] sm:$0xf]
    %v111 = vld [vmem:[#allocation7 + $0x38] sm:$0xf]
    %v112 = vld [vmem:[#allocation7 + $0x3c] sm:$0xf]
    %v113 = vld [vmem:[#allocation7 + $0x40] sm:$0xf]
    %v114 = vld [vmem:[#allocation7 + $0x44] sm:$0xf]
    %v115 = vld [vmem:[#allocation7 + $0x48] sm:$0xf]
    %v116 = vld [vmem:[#allocation7 + $0x4c] sm:$0xf]
    %v117 = vld [vmem:[#allocation7 + $0x50] sm:$0xf]
    %v118 = vld [vmem:[#allocation7 + $0x54] sm:$0xf]
    %v119 = vld [vmem:[#allocation7 + $0x58] sm:$0xf]
    %v120 = vld [vmem:[#allocation7 + $0x5c] sm:$0xf]
    %v121 = vld [vmem:[#allocation7 + $0x60] sm:$0xf]
    %v122 = vld [vmem:[#allocation7 + $0x64] sm:$0xf]
    %v123 = vld [vmem:[#allocation7 + $0x68] sm:$0xf]
    %v124 = vld [vmem:[#allocation7 + $0x6c] sm:$0xf]
    %v125 = vld [vmem:[#allocation7 + $0x70] sm:$0xf]
    %v126 = vld [vmem:[#allocation7 + $0x74] sm:$0xf]
    %v127 = vld [vmem:[#allocation7 + $0x78] sm:$0xf]
    %v128 = vld [vmem:[#allocation7 + $0x7c] sm:$0xf]
    %v129 = vld [vmem:[#allocation7 + $0x80] sm:$0xf]
    %v130 = vld [vmem:[#allocation7 + $0x84] sm:$0xf]
    %v131 = vld [vmem:[#allocation7 + $0x88] sm:$0xf]
    %v132 = vld [vmem:[#allocation7 + $0x8c] sm:$0xf]
    %v133 = vld [vmem:[#allocation7 + $0x90] sm:$0xf]
    %v134 = vld [vmem:[#allocation7 + $0x94] sm:$0xf]
    %v135 = vld [vmem:[#allocation7 + $0x98] sm:$0xf]
    %v136 = vld [vmem:[#allocation7 + $0x9c] sm:$0xf]
    %v137 = vld [vmem:[#allocation7 + $0xa0] sm:$0xf]
    %v138 = vld [vmem:[#allocation7 + $0xa4] sm:$0xf]
    %v139 = vld [vmem:[#allocation7 + $0xa8] sm:$0xf]
    %v140 = vld [vmem:[#allocation7 + $0xac] sm:$0xf]
    %v141 = vld [vmem:[#allocation7 + $0xb0] sm:$0xf]
    %v142 = vld [vmem:[#allocation7 + $0xb4] sm:$0xf]
    %v143 = vld [vmem:[#allocation7 + $0xb8] sm:$0xf]
    %v144 = vld [vmem:[#allocation7 + $0xbc] sm:$0xf]
    %v145 = vld [vmem:[#allocation7 + $0xc0] sm:$0xf]
    %v146 = vld [vmem:[#allocation7 + $0xc4] sm:$0xf]
    %v147 = vld [vmem:[#allocation7 + $0xc8] sm:$0xf]
    %v148 = vld [vmem:[#allocation7 + $0xcc] sm:$0xf]
    %v149 = vld [vmem:[#allocation7 + $0xd0] sm:$0xf]
    %v150 = vld [vmem:[#allocation7 + $0xd4] sm:$0xf]
    %v151 = vld [vmem:[#allocation7 + $0xd8] sm:$0xf]
    %v152 = vld [vmem:[#allocation7 + $0xdc] sm:$0xf]
    %v153 = vld [vmem:[#allocation7 + $0xe0] sm:$0xf]
    %v154 = vld [vmem:[#allocation7 + $0xe4] sm:$0xf]
    %v155 = vld [vmem:[#allocation7 + $0xe8] sm:$0xf]
    %v156 = vld [vmem:[#allocation7 + $0xec] sm:$0xf]
    %v157 = vld [vmem:[#allocation7 + $0xf0] sm:$0xf]
    %v158 = vld [vmem:[#allocation7 + $0xf4] sm:$0xf]
    %v159 = vld [vmem:[#allocation7 + $0xf8] sm:$0xf]
    %v160 = vld [vmem:[#allocation7 + $0xfc] sm:$0xf]
    %v161 = vld [vmem:[#allocation7 + $0x100] sm:$0xf]
    %v162 = vld [vmem:[#allocation7 + $0x104] sm:$0xf]
    %v163 = vld [vmem:[#allocation7 + $0x108] sm:$0xf]
    %v164 = vld [vmem:[#allocation7 + $0x10c] sm:$0xf]
    %v165 = vld [vmem:[#allocation7 + $0x110] sm:$0xf]
    %v166 = vld [vmem:[#allocation7 + $0x114] sm:$0xf]
    %v167 = vld [vmem:[#allocation7 + $0x118] sm:$0xf]
    %v168 = vld [vmem:[#allocation7 + $0x11c] sm:$0xf]
    %v169 = vld [vmem:[#allocation7 + $0x120] sm:$0xf]
    %v170 = vld [vmem:[#allocation7 + $0x124] sm:$0xf]
    %v171 = vld [vmem:[#allocation7 + $0x128] sm:$0xf]
    %v172 = vld [vmem:[#allocation7 + $0x12c] sm:$0xf]
    %v173 = vld [vmem:[#allocation7 + $0x130] sm:$0xf]
    %v174 = vld [vmem:[#allocation7 + $0x134] sm:$0xf]
    %v175 = vld [vmem:[#allocation7 + $0x138] sm:$0xf]
    %v176 = vld [vmem:[#allocation7 + $0x13c] sm:$0xf]
    %v177 = vld [vmem:[#allocation7 + $0x140] sm:$0xf]
    %v178 = vld [vmem:[#allocation7 + $0x144] sm:$0xf]
    %v179 = vld [vmem:[#allocation7 + $0x148] sm:$0xf]
    %v180 = vld [vmem:[#allocation7 + $0x14c] sm:$0xf]
    %v181 = vld [vmem:[#allocation7 + $0x150] sm:$0xf]
    %v182 = vld [vmem:[#allocation7 + $0x154] sm:$0xf]
    %v183 = vld [vmem:[#allocation7 + $0x158] sm:$0xf]
    %v184 = vld [vmem:[#allocation7 + $0x15c] sm:$0xf]
    %v185 = vld [vmem:[#allocation7 + $0x160] sm:$0xf]
    %v186 = vld [vmem:[#allocation7 + $0x164] sm:$0xf]
    %v187 = vld [vmem:[#allocation7 + $0x168] sm:$0xf]
    %v188 = vld [vmem:[#allocation7 + $0x16c] sm:$0xf]
    %v189 = vld [vmem:[#allocation7 + $0x170] sm:$0xf]
    %v190 = vld [vmem:[#allocation7 + $0x174] sm:$0xf]
    %v191 = vld [vmem:[#allocation7 + $0x178] sm:$0xf]
    %v192 = vld [vmem:[#allocation7 + $0x17c] sm:$0xf]
    %v193 = vld [vmem:[#allocation7 + $0x180] sm:$0xf]
    %v194 = vld [vmem:[#allocation7 + $0x184] sm:$0xf]
    %v195 = vld [vmem:[#allocation7 + $0x188] sm:$0xf]
    %v196 = vld [vmem:[#allocation7 + $0x18c] sm:$0xf]
    %v197 = vld [vmem:[#allocation7 + $0x190] sm:$0xf]
    %v198 = vld [vmem:[#allocation7 + $0x194] sm:$0xf]
    %v199 = vld [vmem:[#allocation7 + $0x198] sm:$0xf]
    %v200 = vld [vmem:[#allocation7 + $0x19c] sm:$0xf]
    %v201 = vld [vmem:[#allocation7 + $0x1a0] sm:$0xf]
    %v202 = vld [vmem:[#allocation7 + $0x1a4] sm:$0xf]
    %v203 = vld [vmem:[#allocation7 + $0x1a8] sm:$0xf]
    %v204 = vld [vmem:[#allocation7 + $0x1ac] sm:$0xf]
    %v205 = vld [vmem:[#allocation7 + $0x1b0] sm:$0xf]
    %v206 = vld [vmem:[#allocation7 + $0x1b4] sm:$0xf]
    %v207 = vld [vmem:[#allocation7 + $0x1b8] sm:$0xf]
    %v208 = vld [vmem:[#allocation7 + $0x1bc] sm:$0xf]
    %v209 = vld [vmem:[#allocation7 + $0x1c0] sm:$0xf]
    %v210 = vld [vmem:[#allocation7 + $0x1c4] sm:$0xf]
    %v211 = vld [vmem:[#allocation7 + $0x1c8] sm:$0xf]
    %v212 = vld [vmem:[#allocation7 + $0x1cc] sm:$0xf]
    %v213 = vld [vmem:[#allocation7 + $0x1d0] sm:$0xf]
    %v214 = vld [vmem:[#allocation7 + $0x1d4] sm:$0xf]
    %v215 = vld [vmem:[#allocation7 + $0x1d8] sm:$0xf]
    %v216 = vld [vmem:[#allocation7 + $0x1dc] sm:$0xf]
    %v217 = vld [vmem:[#allocation7 + $0x1e0] sm:$0xf]
    %v218 = vld [vmem:[#allocation7 + $0x1e4] sm:$0xf]
    %v219 = vld [vmem:[#allocation7 + $0x1e8] sm:$0xf]
    %v220 = vld [vmem:[#allocation7 + $0x1ec] sm:$0xf]
    %v221 = vld [vmem:[#allocation7 + $0x1f0] sm:$0xf]
    %v222 = vld [vmem:[#allocation7 + $0x1f4] sm:$0xf]
    %v223 = vld [vmem:[#allocation7 + $0x1f8] sm:$0xf]
    %v224 = vld [vmem:[#allocation7 + $0x1fc] sm:$0xf]
    %v225 = vld [vmem:[#allocation9] sm:$0xff]
    %v226 = vld [vmem:[#allocation9 + $0x8] sm:$0xff]
    %v227 = vld [vmem:[#allocation9 + $0x10] sm:$0xff]
    %v228 = vld [vmem:[#allocation9 + $0x18] sm:$0xff]
    %v229 = vld [vmem:[#allocation9 + $0x20] sm:$0xff]
    %v230 = vld [vmem:[#allocation9 + $0x28] sm:$0xff]
    %v231 = vld [vmem:[#allocation9 + $0x30] sm:$0xff]
    %v232 = vld [vmem:[#allocation9 + $0x38] sm:$0xff]
    %v233 = vld [vmem:[#allocation9 + $0x40] sm:$0xff]
    %v234 = vld [vmem:[#allocation9 + $0x48] sm:$0xff]
    %v235 = vld [vmem:[#allocation9 + $0x50] sm:$0xff]
    %v236 = vld [vmem:[#allocation9 + $0x58] sm:$0xff]
    %v237 = vld [vmem:[#allocation9 + $0x60] sm:$0xff]
    %v238 = vld [vmem:[#allocation9 + $0x68] sm:$0xff]
    %v239 = vld [vmem:[#allocation9 + $0x70] sm:$0xff]
    %v240 = vld [vmem:[#allocation9 + $0x78] sm:$0xff]
    %v241 = vld [vmem:[#allocation9 + $0x80] sm:$0xff]
    %v242 = vld [vmem:[#allocation9 + $0x88] sm:$0xff]
    %v243 = vld [vmem:[#allocation9 + $0x90] sm:$0xff]
    %v244 = vld [vmem:[#allocation9 + $0x98] sm:$0xff]
    %v245 = vld [vmem:[#allocation9 + $0xa0] sm:$0xff]
    %v246 = vld [vmem:[#allocation9 + $0xa8] sm:$0xff]
    %v247 = vld [vmem:[#allocation9 + $0xb0] sm:$0xff]
    %v248 = vld [vmem:[#allocation9 + $0xb8] sm:$0xff]
    %v249 = vld [vmem:[#allocation9 + $0xc0] sm:$0xff]
    %v250 = vld [vmem:[#allocation9 + $0xc8] sm:$0xff]
    %v251 = vld [vmem:[#allocation9 + $0xd0] sm:$0xff]
    %v252 = vld [vmem:[#allocation9 + $0xd8] sm:$0xff]
    %v253 = vld [vmem:[#allocation9 + $0xe0] sm:$0xff]
    %v254 = vld [vmem:[#allocation9 + $0xe8] sm:$0xff]
    %v255 = vld [vmem:[#allocation9 + $0xf0] sm:$0xff]
    %v256 = vld [vmem:[#allocation9 + $0xf8] sm:$0xff]
    %v257 = vld [vmem:[#allocation9 + $0x100] sm:$0xff]
    %v258 = vld [vmem:[#allocation9 + $0x108] sm:$0xff]
    %v259 = vld [vmem:[#allocation9 + $0x110] sm:$0xff]
    %v260 = vld [vmem:[#allocation9 + $0x118] sm:$0xff]
    %v261 = vld [vmem:[#allocation9 + $0x120] sm:$0xff]
    %v262 = vld [vmem:[#allocation9 + $0x128] sm:$0xff]
    %v263 = vld [vmem:[#allocation9 + $0x130] sm:$0xff]
    %v264 = vld [vmem:[#allocation9 + $0x138] sm:$0xff]
    %v265 = vld [vmem:[#allocation9 + $0x140] sm:$0xff]
    %v266 = vld [vmem:[#allocation9 + $0x148] sm:$0xff]
    %v267 = vld [vmem:[#allocation9 + $0x150] sm:$0xff]
    %v268 = vld [vmem:[#allocation9 + $0x158] sm:$0xff]
    %v269 = vld [vmem:[#allocation9 + $0x160] sm:$0xff]
    %v270 = vld [vmem:[#allocation9 + $0x168] sm:$0xff]
    %v271 = vld [vmem:[#allocation9 + $0x170] sm:$0xff]
    %v272 = vld [vmem:[#allocation9 + $0x178] sm:$0xff]
    %v273 = vld [vmem:[#allocation9 + $0x180] sm:$0xff]
    %v274 = vld [vmem:[#allocation9 + $0x188] sm:$0xff]
    %v275 = vld [vmem:[#allocation9 + $0x190] sm:$0xff]
    %v276 = vld [vmem:[#allocation9 + $0x198] sm:$0xff]
    %v277 = vld [vmem:[#allocation9 + $0x1a0] sm:$0xff]
    %v278 = vld [vmem:[#allocation9 + $0x1a8] sm:$0xff]
    %v279 = vld [vmem:[#allocation9 + $0x1b0] sm:$0xff]
    %v280 = vld [vmem:[#allocation9 + $0x1b8] sm:$0xff]
    %v281 = vld [vmem:[#allocation9 + $0x1c0] sm:$0xff]
    %v282 = vld [vmem:[#allocation9 + $0x1c8] sm:$0xff]
    %v283 = vld [vmem:[#allocation9 + $0x1d0] sm:$0xff]
    %v284 = vld [vmem:[#allocation9 + $0x1d8] sm:$0xff]
    %v285 = vld [vmem:[#allocation9 + $0x1e0] sm:$0xff]
    %v286 = vld [vmem:[#allocation9 + $0x1e8] sm:$0xff]
    %v287 = vld [vmem:[#allocation9 + $0x1f0] sm:$0xff]
    %v288 = vld [vmem:[#allocation9 + $0x1f8] sm:$0xff]
    %v289 = vld [vmem:[%s3] sm:$0x1]
    %v290 = vld [vmem:[#allocation10] sm:$0xff]
    %s291 = sld [smem:[#allocation3]]
    %v292 = vpack.c.bf16 %v89, %v89
    %v293 = vpack.c.bf16 %v90, %v90
    %v294 = vpack.c.bf16 %v91, %v91
    %v295 = vpack.c.bf16 %v92, %v92
    %v296 = vpack.c.bf16 %v93, %v93
    %v297 = vpack.c.bf16 %v94, %v94
    %v298 = vpack.c.bf16 %v95, %v95
    %v299 = vpack.c.bf16 %v96, %v96
    %v301 = vperm.slane %v289, 0
    %v431 = vunpack.c.l.b16 %v97
    %v432 = vunpack.c.l.b16 %v98
    %v433 = vunpack.c.l.b16 %v99
    %v434 = vunpack.c.l.b16 %v100
    %v435 = vunpack.c.l.b16 %v101
    %v436 = vunpack.c.l.b16 %v102
    %v437 = vunpack.c.l.b16 %v103
    %v438 = vunpack.c.l.b16 %v104
    %v439 = vunpack.c.l.b16 %v105
    %v440 = vunpack.c.l.b16 %v106
    %v441 = vunpack.c.l.b16 %v107
    %v442 = vunpack.c.l.b16 %v108
    %v443 = vunpack.c.l.b16 %v109
    %v444 = vunpack.c.l.b16 %v110
    %v445 = vunpack.c.l.b16 %v111
    %v446 = vunpack.c.l.b16 %v112
    %v447 = vunpack.c.l.b16 %v113
    %v448 = vunpack.c.l.b16 %v114
    %v449 = vunpack.c.l.b16 %v115
    %v450 = vunpack.c.l.b16 %v116
    %v451 = vunpack.c.l.b16 %v117
    %v452 = vunpack.c.l.b16 %v118
    %v453 = vunpack.c.l.b16 %v119
    %v454 = vunpack.c.l.b16 %v120
    %v455 = vunpack.c.l.b16 %v121
    %v456 = vunpack.c.l.b16 %v122
    %v457 = vunpack.c.l.b16 %v123
    %v458 = vunpack.c.l.b16 %v124
    %v459 = vunpack.c.l.b16 %v125
    %v460 = vunpack.c.l.b16 %v126
    %v461 = vunpack.c.l.b16 %v127
    %v462 = vunpack.c.l.b16 %v128
    %v463 = vunpack.c.l.b16 %v129
    %v464 = vunpack.c.l.b16 %v130
    %v465 = vunpack.c.l.b16 %v131
    %v466 = vunpack.c.l.b16 %v132
    %v467 = vunpack.c.l.b16 %v133
    %v468 = vunpack.c.l.b16 %v134
    %v469 = vunpack.c.l.b16 %v135
    %v470 = vunpack.c.l.b16 %v136
    %v471 = vunpack.c.l.b16 %v137
    %v472 = vunpack.c.l.b16 %v138
    %v473 = vunpack.c.l.b16 %v139
    %v474 = vunpack.c.l.b16 %v140
    %v475 = vunpack.c.l.b16 %v141
    %v476 = vunpack.c.l.b16 %v142
    %v477 = vunpack.c.l.b16 %v143
    %v478 = vunpack.c.l.b16 %v144
    %v479 = vunpack.c.l.b16 %v145
    %v480 = vunpack.c.l.b16 %v146
    %v481 = vunpack.c.l.b16 %v147
    %v482 = vunpack.c.l.b16 %v148
    %v483 = vunpack.c.l.b16 %v149
    %v484 = vunpack.c.l.b16 %v150
    %v485 = vunpack.c.l.b16 %v151
    %v486 = vunpack.c.l.b16 %v152
    %v487 = vunpack.c.l.b16 %v153
    %v488 = vunpack.c.l.b16 %v154
    %v489 = vunpack.c.l.b16 %v155
    %v490 = vunpack.c.l.b16 %v156
    %v491 = vunpack.c.l.b16 %v157
    %v492 = vunpack.c.l.b16 %v158
    %v493 = vunpack.c.l.b16 %v159
    %v494 = vunpack.c.l.b16 %v160
    %v495 = vunpack.c.l.b16 %v161
    %v496 = vunpack.c.l.b16 %v162
    %v497 = vunpack.c.l.b16 %v163
    %v498 = vunpack.c.l.b16 %v164
    %v499 = vunpack.c.l.b16 %v165
    %v500 = vunpack.c.l.b16 %v166
    %v501 = vunpack.c.l.b16 %v167
    %v502 = vunpack.c.l.b16 %v168
    %v503 = vunpack.c.l.b16 %v169
    %v504 = vunpack.c.l.b16 %v170
    %v505 = vunpack.c.l.b16 %v171
    %v506 = vunpack.c.l.b16 %v172
    %v507 = vunpack.c.l.b16 %v173
    %v508 = vunpack.c.l.b16 %v174
    %v509 = vunpack.c.l.b16 %v175
    %v510 = vunpack.c.l.b16 %v176
    %v511 = vunpack.c.l.b16 %v177
    %v512 = vunpack.c.l.b16 %v178
    %v513 = vunpack.c.l.b16 %v179
    %v514 = vunpack.c.l.b16 %v180
    %v515 = vunpack.c.l.b16 %v181
    %v516 = vunpack.c.l.b16 %v182
    %v517 = vunpack.c.l.b16 %v183
    %v518 = vunpack.c.l.b16 %v184
    %v519 = vunpack.c.l.b16 %v185
    %v520 = vunpack.c.l.b16 %v186
    %v521 = vunpack.c.l.b16 %v187
    %v522 = vunpack.c.l.b16 %v188
    %v523 = vunpack.c.l.b16 %v189
    %v524 = vunpack.c.l.b16 %v190
    %v525 = vunpack.c.l.b16 %v191
    %v526 = vunpack.c.l.b16 %v192
    %v527 = vunpack.c.l.b16 %v193
    %v528 = vunpack.c.l.b16 %v194
    %v529 = vunpack.c.l.b16 %v195
    %v530 = vunpack.c.l.b16 %v196
    %v531 = vunpack.c.l.b16 %v197
    %v532 = vunpack.c.l.b16 %v198
    %v533 = vunpack.c.l.b16 %v199
    %v534 = vunpack.c.l.b16 %v200
    %v535 = vunpack.c.l.b16 %v201
    %v536 = vunpack.c.l.b16 %v202
    %v537 = vunpack.c.l.b16 %v203
    %v538 = vunpack.c.l.b16 %v204
    %v539 = vunpack.c.l.b16 %v205
    %v540 = vunpack.c.l.b16 %v206
    %v541 = vunpack.c.l.b16 %v207
    %v542 = vunpack.c.l.b16 %v208
    %v543 = vunpack.c.l.b16 %v209
    %v544 = vunpack.c.l.b16 %v210
    %v545 = vunpack.c.l.b16 %v211
    %v546 = vunpack.c.l.b16 %v212
    %v547 = vunpack.c.l.b16 %v213
    %v548 = vunpack.c.l.b16 %v214
    %v549 = vunpack.c.l.b16 %v215
    %v550 = vunpack.c.l.b16 %v216
    %v551 = vunpack.c.l.b16 %v217
    %v552 = vunpack.c.l.b16 %v218
    %v553 = vunpack.c.l.b16 %v219
    %v554 = vunpack.c.l.b16 %v220
    %v555 = vunpack.c.l.b16 %v221
    %v556 = vunpack.c.l.b16 %v222
    %v557 = vunpack.c.l.b16 %v223
    %v558 = vunpack.c.l.b16 %v224
    %v559 = vpack.c.b16 %v432, %v431
    %v560 = vpack.c.b16 %v434, %v433
    %v561 = vpack.c.b16 %v436, %v435
    %v562 = vpack.c.b16 %v438, %v437
    %v563 = vpack.c.b16 %v440, %v439
    %v564 = vpack.c.b16 %v442, %v441
    %v565 = vpack.c.b16 %v444, %v443
    %v566 = vpack.c.b16 %v446, %v445
    %v567 = vpack.c.b16 %v448, %v447
    %v568 = vpack.c.b16 %v450, %v449
    %v569 = vpack.c.b16 %v452, %v451
    %v570 = vpack.c.b16 %v454, %v453
    %v571 = vpack.c.b16 %v456, %v455
    %v572 = vpack.c.b16 %v458, %v457
    %v573 = vpack.c.b16 %v460, %v459
    %v574 = vpack.c.b16 %v462, %v461
    %v575 = vpack.c.b16 %v464, %v463
    %v576 = vpack.c.b16 %v466, %v465
    %v577 = vpack.c.b16 %v468, %v467
    %v578 = vpack.c.b16 %v470, %v469
    %v579 = vpack.c.b16 %v472, %v471
    %v580 = vpack.c.b16 %v474, %v473
    %v581 = vpack.c.b16 %v476, %v475
    %v582 = vpack.c.b16 %v478, %v477
    %v583 = vpack.c.b16 %v480, %v479
    %v584 = vpack.c.b16 %v482, %v481
    %v585 = vpack.c.b16 %v484, %v483
    %v586 = vpack.c.b16 %v486, %v485
    %v587 = vpack.c.b16 %v488, %v487
    %v588 = vpack.c.b16 %v490, %v489
    %v589 = vpack.c.b16 %v492, %v491
    %v590 = vpack.c.b16 %v494, %v493
    %v591 = vpack.c.b16 %v496, %v495
    %v592 = vpack.c.b16 %v498, %v497
    %v593 = vpack.c.b16 %v500, %v499
    %v594 = vpack.c.b16 %v502, %v501
    %v595 = vpack.c.b16 %v504, %v503
    %v596 = vpack.c.b16 %v506, %v505
    %v597 = vpack.c.b16 %v508, %v507
    %v598 = vpack.c.b16 %v510, %v509
    %v599 = vpack.c.b16 %v512, %v511
    %v600 = vpack.c.b16 %v514, %v513
    %v601 = vpack.c.b16 %v516, %v515
    %v602 = vpack.c.b16 %v518, %v517
    %v603 = vpack.c.b16 %v520, %v519
    %v604 = vpack.c.b16 %v522, %v521
    %v605 = vpack.c.b16 %v524, %v523
    %v606 = vpack.c.b16 %v526, %v525
    %v607 = vpack.c.b16 %v528, %v527
    %v608 = vpack.c.b16 %v530, %v529
    %v609 = vpack.c.b16 %v532, %v531
    %v610 = vpack.c.b16 %v534, %v533
    %v611 = vpack.c.b16 %v536, %v535
    %v612 = vpack.c.b16 %v538, %v537
    %v613 = vpack.c.b16 %v540, %v539
    %v614 = vpack.c.b16 %v542, %v541
    %v615 = vpack.c.b16 %v544, %v543
    %v616 = vpack.c.b16 %v546, %v545
    %v617 = vpack.c.b16 %v548, %v547
    %v618 = vpack.c.b16 %v550, %v549
    %v619 = vpack.c.b16 %v552, %v551
    %v620 = vpack.c.b16 %v554, %v553
    %v621 = vpack.c.b16 %v556, %v555
    %v622 = vpack.c.b16 %v558, %v557
    %687 = vmatpush.bf16.msra.mxu0 %v566
    %688 = vmatpush.bf16.msra.mxu0 %v565
    %689 = vmatpush.bf16.msra.mxu0 %v564
    %690 = vmatpush.bf16.msra.mxu0 %v563
    %691 = vmatpush.bf16.msra.mxu0 %v562
    %692 = vmatpush.bf16.msra.mxu0 %v561
    %693 = vmatpush.bf16.msra.mxu0 %v560
    %694 = vmatpush.bf16.msra.mxu0 %v559
    %695 = vmatmul.bf16.gmra.mxu0 %v292
    %v696 = vpop.f32.mrf.mxu0
    %v697 = vadd.f32 %v301, %v696
    %v698 = vpop.f32.mrf.mxu0
    %699 = vdwg.mxu0
    %700 = vmatpush.bf16.msra.mxu0 %v574
    %701 = vmatpush.bf16.msra.mxu0 %v573
    %702 = vmatpush.bf16.msra.mxu0 %v572
    %703 = vmatpush.bf16.msra.mxu0 %v571
    %704 = vmatpush.bf16.msra.mxu0 %v570
    %705 = vmatpush.bf16.msra.mxu0 %v569
    %706 = vmatpush.bf16.msra.mxu0 %v568
    %707 = vmatpush.bf16.msra.mxu0 %v567
    %708 = vmatmul.bf16.gmra.mxu0 %v293
    %v709 = vpop.f32.mrf.mxu0
    %v710 = vadd.f32 %v697, %v709
    %v711 = vpop.f32.mrf.mxu0
    %712 = vdwg.mxu0
    %713 = vmatpush.bf16.msra.mxu0 %v582
    %714 = vmatpush.bf16.msra.mxu0 %v581
    %715 = vmatpush.bf16.msra.mxu0 %v580
    %716 = vmatpush.bf16.msra.mxu0 %v579
    %717 = vmatpush.bf16.msra.mxu0 %v578
    %718 = vmatpush.bf16.msra.mxu0 %v577
    %719 = vmatpush.bf16.msra.mxu0 %v576
    %720 = vmatpush.bf16.msra.mxu0 %v575
    %721 = vmatmul.bf16.gmra.mxu0 %v294
    %v722 = vpop.f32.mrf.mxu0
    %v723 = vadd.f32 %v710, %v722
    %v724 = vpop.f32.mrf.mxu0
    %725 = vdwg.mxu0
    %726 = vmatpush.bf16.msra.mxu0 %v590
    %727 = vmatpush.bf16.msra.mxu0 %v589
    %728 = vmatpush.bf16.msra.mxu0 %v588
    %729 = vmatpush.bf16.msra.mxu0 %v587
    %730 = vmatpush.bf16.msra.mxu0 %v586
    %731 = vmatpush.bf16.msra.mxu0 %v585
    %732 = vmatpush.bf16.msra.mxu0 %v584
    %733 = vmatpush.bf16.msra.mxu0 %v583
    %734 = vmatmul.bf16.gmra.mxu0 %v295
    %v735 = vpop.f32.mrf.mxu0
    %v736 = vadd.f32 %v723, %v735
    %v737 = vpop.f32.mrf.mxu0
    %738 = vdwg.mxu0
    %739 = vmatpush.bf16.msra.mxu0 %v598
    %740 = vmatpush.bf16.msra.mxu0 %v597
    %741 = vmatpush.bf16.msra.mxu0 %v596
    %742 = vmatpush.bf16.msra.mxu0 %v595
    %743 = vmatpush.bf16.msra.mxu0 %v594
    %744 = vmatpush.bf16.msra.mxu0 %v593
    %745 = vmatpush.bf16.msra.mxu0 %v592
    %746 = vmatpush.bf16.msra.mxu0 %v591
    %747 = vmatmul.bf16.gmra.mxu0 %v296
    %v748 = vpop.f32.mrf.mxu0
    %v749 = vadd.f32 %v736, %v748
    %v750 = vpop.f32.mrf.mxu0
    %751 = vdwg.mxu0
    %752 = vmatpush.bf16.msra.mxu0 %v606
    %753 = vmatpush.bf16.msra.mxu0 %v605
    %754 = vmatpush.bf16.msra.mxu0 %v604
    %755 = vmatpush.bf16.msra.mxu0 %v603
    %756 = vmatpush.bf16.msra.mxu0 %v602
    %757 = vmatpush.bf16.msra.mxu0 %v601
    %758 = vmatpush.bf16.msra.mxu0 %v600
    %759 = vmatpush.bf16.msra.mxu0 %v599
    %760 = vmatmul.bf16.gmra.mxu0 %v297
    %v761 = vpop.f32.mrf.mxu0
    %v762 = vadd.f32 %v749, %v761
    %v763 = vpop.f32.mrf.mxu0
    %764 = vdwg.mxu0
    %765 = vmatpush.bf16.msra.mxu0 %v614
    %766 = vmatpush.bf16.msra.mxu0 %v613
    %767 = vmatpush.bf16.msra.mxu0 %v612
    %768 = vmatpush.bf16.msra.mxu0 %v611
    %769 = vmatpush.bf16.msra.mxu0 %v610
    %770 = vmatpush.bf16.msra.mxu0 %v609
    %771 = vmatpush.bf16.msra.mxu0 %v608
    %772 = vmatpush.bf16.msra.mxu0 %v607
    %773 = vmatmul.bf16.gmra.mxu0 %v298
    %v774 = vpop.f32.mrf.mxu0
    %v775 = vadd.f32 %v762, %v774
    %v776 = vpop.f32.mrf.mxu0
    %777 = vdwg.mxu0
    %778 = vmatpush.bf16.msra.mxu0 %v622
    %779 = vmatpush.bf16.msra.mxu0 %v621
    %780 = vmatpush.bf16.msra.mxu0 %v620
    %781 = vmatpush.bf16.msra.mxu0 %v619
    %782 = vmatpush.bf16.msra.mxu0 %v618
    %783 = vmatpush.bf16.msra.mxu0 %v617
    %784 = vmatpush.bf16.msra.mxu0 %v616
    %785 = vmatpush.bf16.msra.mxu0 %v615
    %786 = vmatmul.bf16.gmra.mxu0 %v299
    %v787 = vpop.f32.mrf.mxu0
    %v788 = vadd.f32 %v775, %v787
    %v789 = vpop.f32.mrf.mxu0
    %790 = vdwg.mxu0
    %v791 = vpack.c.bf16 %v788, %v788
    %v792 = vunpack.c.l.bf16 %v791
    %v793 = vtanh.pop %v792
    %v794 = vpack.c.bf16 %v793, %v793
    %v796 = vperm.slane %v290, 0
    %v797 = vperm.slane %v290, 1
    %v798 = vperm.slane %v290, 2
    %v799 = vperm.slane %v290, 3
    %v800 = vperm.slane %v290, 4
    %v801 = vperm.slane %v290, 5
    %v802 = vperm.slane %v290, 6
    %v803 = vperm.slane %v290, 7
    %v876 = vunpack.c.l.b16 %v225
    %v877 = vunpack.c.h.b16 %v225
    %v878 = vunpack.c.l.b16 %v226
    %v879 = vunpack.c.h.b16 %v226
    %v880 = vunpack.c.l.b16 %v227
    %v881 = vunpack.c.h.b16 %v227
    %v882 = vunpack.c.l.b16 %v228
    %v883 = vunpack.c.h.b16 %v228
    %v884 = vunpack.c.l.b16 %v229
    %v885 = vunpack.c.h.b16 %v229
    %v886 = vunpack.c.l.b16 %v230
    %v887 = vunpack.c.h.b16 %v230
    %v888 = vunpack.c.l.b16 %v231
    %v889 = vunpack.c.h.b16 %v231
    %v890 = vunpack.c.l.b16 %v232
    %v891 = vunpack.c.h.b16 %v232
    %v892 = vunpack.c.l.b16 %v233
    %v893 = vunpack.c.h.b16 %v233
    %v894 = vunpack.c.l.b16 %v234
    %v895 = vunpack.c.h.b16 %v234
    %v896 = vunpack.c.l.b16 %v235
    %v897 = vunpack.c.h.b16 %v235
    %v898 = vunpack.c.l.b16 %v236
    %v899 = vunpack.c.h.b16 %v236
    %v900 = vunpack.c.l.b16 %v237
    %v901 = vunpack.c.h.b16 %v237
    %v902 = vunpack.c.l.b16 %v238
    %v903 = vunpack.c.h.b16 %v238
    %v904 = vunpack.c.l.b16 %v239
    %v905 = vunpack.c.h.b16 %v239
    %v906 = vunpack.c.l.b16 %v240
    %v907 = vunpack.c.h.b16 %v240
    %v908 = vunpack.c.l.b16 %v241
    %v909 = vunpack.c.h.b16 %v241
    %v910 = vunpack.c.l.b16 %v242
    %v911 = vunpack.c.h.b16 %v242
    %v912 = vunpack.c.l.b16 %v243
    %v913 = vunpack.c.h.b16 %v243
    %v914 = vunpack.c.l.b16 %v244
    %v915 = vunpack.c.h.b16 %v244
    %v916 = vunpack.c.l.b16 %v245
    %v917 = vunpack.c.h.b16 %v245
    %v918 = vunpack.c.l.b16 %v246
    %v919 = vunpack.c.h.b16 %v246
    %v920 = vunpack.c.l.b16 %v247
    %v921 = vunpack.c.h.b16 %v247
    %v922 = vunpack.c.l.b16 %v248
    %v923 = vunpack.c.h.b16 %v248
    %v924 = vunpack.c.l.b16 %v249
    %v925 = vunpack.c.h.b16 %v249
    %v926 = vunpack.c.l.b16 %v250
    %v927 = vunpack.c.h.b16 %v250
    %v928 = vunpack.c.l.b16 %v251
    %v929 = vunpack.c.h.b16 %v251
    %v930 = vunpack.c.l.b16 %v252
    %v931 = vunpack.c.h.b16 %v252
    %v932 = vunpack.c.l.b16 %v253
    %v933 = vunpack.c.h.b16 %v253
    %v934 = vunpack.c.l.b16 %v254
    %v935 = vunpack.c.h.b16 %v254
    %v936 = vunpack.c.l.b16 %v255
    %v937 = vunpack.c.h.b16 %v255
    %v938 = vunpack.c.l.b16 %v256
    %v939 = vunpack.c.h.b16 %v256
    %v940 = vunpack.c.l.b16 %v257
    %v941 = vunpack.c.h.b16 %v257
    %v942 = vunpack.c.l.b16 %v258
    %v943 = vunpack.c.h.b16 %v258
    %v944 = vunpack.c.l.b16 %v259
    %v945 = vunpack.c.h.b16 %v259
    %v946 = vunpack.c.l.b16 %v260
    %v947 = vunpack.c.h.b16 %v260
    %v948 = vunpack.c.l.b16 %v261
    %v949 = vunpack.c.h.b16 %v261
    %v950 = vunpack.c.l.b16 %v262
    %v951 = vunpack.c.h.b16 %v262
    %v952 = vunpack.c.l.b16 %v263
    %v953 = vunpack.c.h.b16 %v263
    %v954 = vunpack.c.l.b16 %v264
    %v955 = vunpack.c.h.b16 %v264
    %v956 = vunpack.c.l.b16 %v265
    %v957 = vunpack.c.h.b16 %v265
    %v958 = vunpack.c.l.b16 %v266
    %v959 = vunpack.c.h.b16 %v266
    %v960 = vunpack.c.l.b16 %v267
    %v961 = vunpack.c.h.b16 %v267
    %v962 = vunpack.c.l.b16 %v268
    %v963 = vunpack.c.h.b16 %v268
    %v964 = vunpack.c.l.b16 %v269
    %v965 = vunpack.c.h.b16 %v269
    %v966 = vunpack.c.l.b16 %v270
    %v967 = vunpack.c.h.b16 %v270
    %v968 = vunpack.c.l.b16 %v271
    %v969 = vunpack.c.h.b16 %v271
    %v970 = vunpack.c.l.b16 %v272
    %v971 = vunpack.c.h.b16 %v272
    %v972 = vunpack.c.l.b16 %v273
    %v973 = vunpack.c.h.b16 %v273
    %v974 = vunpack.c.l.b16 %v274
    %v975 = vunpack.c.h.b16 %v274
    %v976 = vunpack.c.l.b16 %v275
    %v977 = vunpack.c.h.b16 %v275
    %v978 = vunpack.c.l.b16 %v276
    %v979 = vunpack.c.h.b16 %v276
    %v980 = vunpack.c.l.b16 %v277
    %v981 = vunpack.c.h.b16 %v277
    %v982 = vunpack.c.l.b16 %v278
    %v983 = vunpack.c.h.b16 %v278
    %v984 = vunpack.c.l.b16 %v279
    %v985 = vunpack.c.h.b16 %v279
    %v986 = vunpack.c.l.b16 %v280
    %v987 = vunpack.c.h.b16 %v280
    %v988 = vunpack.c.l.b16 %v281
    %v989 = vunpack.c.h.b16 %v281
    %v990 = vunpack.c.l.b16 %v282
    %v991 = vunpack.c.h.b16 %v282
    %v992 = vunpack.c.l.b16 %v283
    %v993 = vunpack.c.h.b16 %v283
    %v994 = vunpack.c.l.b16 %v284
    %v995 = vunpack.c.h.b16 %v284
    %v996 = vunpack.c.l.b16 %v285
    %v997 = vunpack.c.h.b16 %v285
    %v998 = vunpack.c.l.b16 %v286
    %v999 = vunpack.c.h.b16 %v286
    %v1000 = vunpack.c.l.b16 %v287
    %v1001 = vunpack.c.h.b16 %v287
    %v1002 = vunpack.c.l.b16 %v288
    %v1003 = vunpack.c.h.b16 %v288
    %v1004 = vpack.c.b16 %v884, %v876
    %v1005 = vpack.c.b16 %v885, %v877
    %v1006 = vpack.c.b16 %v886, %v878
    %v1007 = vpack.c.b16 %v887, %v879
    %v1008 = vpack.c.b16 %v888, %v880
    %v1009 = vpack.c.b16 %v889, %v881
    %v1010 = vpack.c.b16 %v890, %v882
    %v1011 = vpack.c.b16 %v891, %v883
    %v1012 = vpack.c.b16 %v900, %v892
    %v1013 = vpack.c.b16 %v901, %v893
    %v1014 = vpack.c.b16 %v902, %v894
    %v1015 = vpack.c.b16 %v903, %v895
    %v1016 = vpack.c.b16 %v904, %v896
    %v1017 = vpack.c.b16 %v905, %v897
    %v1018 = vpack.c.b16 %v906, %v898
    %v1019 = vpack.c.b16 %v907, %v899
    %v1020 = vpack.c.b16 %v916, %v908
    %v1021 = vpack.c.b16 %v917, %v909
    %v1022 = vpack.c.b16 %v918, %v910
    %v1023 = vpack.c.b16 %v919, %v911
    %v1024 = vpack.c.b16 %v920, %v912
    %v1025 = vpack.c.b16 %v921, %v913
    %v1026 = vpack.c.b16 %v922, %v914
    %v1027 = vpack.c.b16 %v923, %v915
    %v1028 = vpack.c.b16 %v932, %v924
    %v1029 = vpack.c.b16 %v933, %v925
    %v1030 = vpack.c.b16 %v934, %v926
    %v1031 = vpack.c.b16 %v935, %v927
    %v1032 = vpack.c.b16 %v936, %v928
    %v1033 = vpack.c.b16 %v937, %v929
    %v1034 = vpack.c.b16 %v938, %v930
    %v1035 = vpack.c.b16 %v939, %v931
    %v1036 = vpack.c.b16 %v948, %v940
    %v1037 = vpack.c.b16 %v949, %v941
    %v1038 = vpack.c.b16 %v950, %v942
    %v1039 = vpack.c.b16 %v951, %v943
    %v1040 = vpack.c.b16 %v952, %v944
    %v1041 = vpack.c.b16 %v953, %v945
    %v1042 = vpack.c.b16 %v954, %v946
    %v1043 = vpack.c.b16 %v955, %v947
    %v1044 = vpack.c.b16 %v964, %v956
    %v1045 = vpack.c.b16 %v965, %v957
    %v1046 = vpack.c.b16 %v966, %v958
    %v1047 = vpack.c.b16 %v967, %v959
    %v1048 = vpack.c.b16 %v968, %v960
    %v1049 = vpack.c.b16 %v969, %v961
    %v1050 = vpack.c.b16 %v970, %v962
    %v1051 = vpack.c.b16 %v971, %v963
    %v1052 = vpack.c.b16 %v980, %v972
    %v1053 = vpack.c.b16 %v981, %v973
    %v1054 = vpack.c.b16 %v982, %v974
    %v1055 = vpack.c.b16 %v983, %v975
    %v1056 = vpack.c.b16 %v984, %v976
    %v1057 = vpack.c.b16 %v985, %v977
    %v1058 = vpack.c.b16 %v986, %v978
    %v1059 = vpack.c.b16 %v987, %v979
    %v1060 = vpack.c.b16 %v996, %v988
    %v1061 = vpack.c.b16 %v997, %v989
    %v1062 = vpack.c.b16 %v998, %v990
    %v1063 = vpack.c.b16 %v999, %v991
    %v1064 = vpack.c.b16 %v1000, %v992
    %v1065 = vpack.c.b16 %v1001, %v993
    %v1066 = vpack.c.b16 %v1002, %v994
    %v1067 = vpack.c.b16 %v1003, %v995
    %1132 = vmatpush.bf16.msra.mxu0 %v1060
    %1133 = vmatpush.bf16.msra.mxu0 %v1052
    %1134 = vmatpush.bf16.msra.mxu0 %v1044
    %1135 = vmatpush.bf16.msra.mxu0 %v1036
    %1136 = vmatpush.bf16.msra.mxu0 %v1028
    %1137 = vmatpush.bf16.msra.mxu0 %v1020
    %1138 = vmatpush.bf16.msra.mxu0 %v1012
    %1139 = vmatpush.bf16.msra.mxu0 %v1004
    %1140 = vmatmul.bf16.gmra.mxu0 %v794
    %v1141 = vpop.f32.mrf.mxu0
    %v1142 = vadd.f32 %v796, %v1141
    %v1143 = vpop.f32.mrf.mxu0
    %1144 = vdwg.mxu0
    %1145 = vmatpush.bf16.msra.mxu0 %v1061
    %1146 = vmatpush.bf16.msra.mxu0 %v1053
    %1147 = vmatpush.bf16.msra.mxu0 %v1045
    %1148 = vmatpush.bf16.msra.mxu0 %v1037
    %1149 = vmatpush.bf16.msra.mxu0 %v1029
    %1150 = vmatpush.bf16.msra.mxu0 %v1021
    %1151 = vmatpush.bf16.msra.mxu0 %v1013
    %1152 = vmatpush.bf16.msra.mxu0 %v1005
    %1153 = vmatmul.bf16.gmra.mxu0 %v794
    %v1154 = vpop.f32.mrf.mxu0
    %v1155 = vadd.f32 %v797, %v1154
    %v1156 = vpop.f32.mrf.mxu0
    %1157 = vdwg.mxu0
    %1158 = vmatpush.bf16.msra.mxu0 %v1062
    %1159 = vmatpush.bf16.msra.mxu0 %v1054
    %1160 = vmatpush.bf16.msra.mxu0 %v1046
    %1161 = vmatpush.bf16.msra.mxu0 %v1038
    %1162 = vmatpush.bf16.msra.mxu0 %v1030
    %1163 = vmatpush.bf16.msra.mxu0 %v1022
    %1164 = vmatpush.bf16.msra.mxu0 %v1014
    %1165 = vmatpush.bf16.msra.mxu0 %v1006
    %1166 = vmatmul.bf16.gmra.mxu0 %v794
    %v1167 = vpop.f32.mrf.mxu0
    %v1168 = vadd.f32 %v798, %v1167
    %v1169 = vpop.f32.mrf.mxu0
    %1170 = vdwg.mxu0
    %1171 = vmatpush.bf16.msra.mxu0 %v1063
    %1172 = vmatpush.bf16.msra.mxu0 %v1055
    %1173 = vmatpush.bf16.msra.mxu0 %v1047
    %1174 = vmatpush.bf16.msra.mxu0 %v1039
    %1175 = vmatpush.bf16.msra.mxu0 %v1031
    %1176 = vmatpush.bf16.msra.mxu0 %v1023
    %1177 = vmatpush.bf16.msra.mxu0 %v1015
    %1178 = vmatpush.bf16.msra.mxu0 %v1007
    %1179 = vmatmul.bf16.gmra.mxu0 %v794
    %v1180 = vpop.f32.mrf.mxu0
    %v1181 = vadd.f32 %v799, %v1180
    %v1182 = vpop.f32.mrf.mxu0
    %1183 = vdwg.mxu0
    %1184 = vmatpush.bf16.msra.mxu0 %v1064
    %1185 = vmatpush.bf16.msra.mxu0 %v1056
    %1186 = vmatpush.bf16.msra.mxu0 %v1048
    %1187 = vmatpush.bf16.msra.mxu0 %v1040
    %1188 = vmatpush.bf16.msra.mxu0 %v1032
    %1189 = vmatpush.bf16.msra.mxu0 %v1024
    %1190 = vmatpush.bf16.msra.mxu0 %v1016
    %1191 = vmatpush.bf16.msra.mxu0 %v1008
    %1192 = vmatmul.bf16.gmra.mxu0 %v794
    %v1193 = vpop.f32.mrf.mxu0
    %v1194 = vadd.f32 %v800, %v1193
    %v1195 = vpop.f32.mrf.mxu0
    %1196 = vdwg.mxu0
    %1197 = vmatpush.bf16.msra.mxu0 %v1065
    %1198 = vmatpush.bf16.msra.mxu0 %v1057
    %1199 = vmatpush.bf16.msra.mxu0 %v1049
    %1200 = vmatpush.bf16.msra.mxu0 %v1041
    %1201 = vmatpush.bf16.msra.mxu0 %v1033
    %1202 = vmatpush.bf16.msra.mxu0 %v1025
    %1203 = vmatpush.bf16.msra.mxu0 %v1017
    %1204 = vmatpush.bf16.msra.mxu0 %v1009
    %1205 = vmatmul.bf16.gmra.mxu0 %v794
    %v1206 = vpop.f32.mrf.mxu0
    %v1207 = vadd.f32 %v801, %v1206
    %v1208 = vpop.f32.mrf.mxu0
    %1209 = vdwg.mxu0
    %1210 = vmatpush.bf16.msra.mxu0 %v1066
    %1211 = vmatpush.bf16.msra.mxu0 %v1058
    %1212 = vmatpush.bf16.msra.mxu0 %v1050
    %1213 = vmatpush.bf16.msra.mxu0 %v1042
    %1214 = vmatpush.bf16.msra.mxu0 %v1034
    %1215 = vmatpush.bf16.msra.mxu0 %v1026
    %1216 = vmatpush.bf16.msra.mxu0 %v1018
    %1217 = vmatpush.bf16.msra.mxu0 %v1010
    %1218 = vmatmul.bf16.gmra.mxu0 %v794
    %v1219 = vpop.f32.mrf.mxu0
    %v1220 = vadd.f32 %v802, %v1219
    %v1221 = vpop.f32.mrf.mxu0
    %1222 = vdwg.mxu0
    %1223 = vmatpush.bf16.msra.mxu0 %v1067
    %1224 = vmatpush.bf16.msra.mxu0 %v1059
    %1225 = vmatpush.bf16.msra.mxu0 %v1051
    %1226 = vmatpush.bf16.msra.mxu0 %v1043
    %1227 = vmatpush.bf16.msra.mxu0 %v1035
    %1228 = vmatpush.bf16.msra.mxu0 %v1027
    %1229 = vmatpush.bf16.msra.mxu0 %v1019
    %1230 = vmatpush.bf16.msra.mxu0 %v1011
    %1231 = vmatmul.bf16.gmra.mxu0 %v794
    %v1232 = vpop.f32.mrf.mxu0
    %v1233 = vadd.f32 %v803, %v1232
    %v1234 = vpop.f32.mrf.mxu0
    %1235 = vdwg.mxu0
    %v1236 = vstv %s291
    %v1237 = vmul.f32 %v1236, %v1142
    %v1238 = vmul.f32 %v1236, %v1155
    %v1239 = vmul.f32 %v1236, %v1168
    %v1240 = vmul.f32 %v1236, %v1181
    %v1241 = vmul.f32 %v1236, %v1194
    %v1242 = vmul.f32 %v1236, %v1207
    %v1243 = vmul.f32 %v1236, %v1220
    %v1244 = vmul.f32 %v1236, %v1233
    %v1245 = vmul.f32 %v1237, 0.33333334
    %v1246 = vmul.f32 %v1238, 0.33333334
    %v1247 = vmul.f32 %v1239, 0.33333334
    %v1248 = vmul.f32 %v1240, 0.33333334
    %v1249 = vmul.f32 %v1241, 0.33333334
    %v1250 = vmul.f32 %v1242, 0.33333334
    %v1251 = vmul.f32 %v1243, 0.33333334
    %v1252 = vmul.f32 %v1244, 0.33333334
    %v1253 = vadd.f32 %v89, %v1245
    %v1254 = vadd.f32 %v90, %v1246
    %v1255 = vadd.f32 %v91, %v1247
    %v1256 = vadd.f32 %v92, %v1248
    %v1257 = vadd.f32 %v93, %v1249
    %v1258 = vadd.f32 %v94, %v1250
    %v1259 = vadd.f32 %v95, %v1251
    %v1260 = vadd.f32 %v96, %v1252
    %v1261 = vpack.c.bf16 %v1253, %v1253
    %v1262 = vpack.c.bf16 %v1254, %v1254
    %v1263 = vpack.c.bf16 %v1255, %v1255
    %v1264 = vpack.c.bf16 %v1256, %v1256
    %v1265 = vpack.c.bf16 %v1257, %v1257
    %v1266 = vpack.c.bf16 %v1258, %v1258
    %v1267 = vpack.c.bf16 %v1259, %v1259
    %v1268 = vpack.c.bf16 %v1260, %v1260
    %1269 = vmatpush.bf16.msra.mxu0 %v566
    %1270 = vmatpush.bf16.msra.mxu0 %v565
    %1271 = vmatpush.bf16.msra.mxu0 %v564
    %1272 = vmatpush.bf16.msra.mxu0 %v563
    %1273 = vmatpush.bf16.msra.mxu0 %v562
    %1274 = vmatpush.bf16.msra.mxu0 %v561
    %1275 = vmatpush.bf16.msra.mxu0 %v560
    %1276 = vmatpush.bf16.msra.mxu0 %v559
    %1277 = vmatmul.bf16.gmra.mxu0 %v1261
    %v1278 = vpop.f32.mrf.mxu0
    %v1279 = vadd.f32 %v301, %v1278
    %v1280 = vpop.f32.mrf.mxu0
    %1281 = vdwg.mxu0
    %1282 = vmatpush.bf16.msra.mxu0 %v574
    %1283 = vmatpush.bf16.msra.mxu0 %v573
    %1284 = vmatpush.bf16.msra.mxu0 %v572
    %1285 = vmatpush.bf16.msra.mxu0 %v571
    %1286 = vmatpush.bf16.msra.mxu0 %v570
    %1287 = vmatpush.bf16.msra.mxu0 %v569
    %1288 = vmatpush.bf16.msra.mxu0 %v568
    %1289 = vmatpush.bf16.msra.mxu0 %v567
    %1290 = vmatmul.bf16.gmra.mxu0 %v1262
    %v1291 = vpop.f32.mrf.mxu0
    %v1292 = vadd.f32 %v1279, %v1291
    %v1293 = vpop.f32.mrf.mxu0
    %1294 = vdwg.mxu0
    %1295 = vmatpush.bf16.msra.mxu0 %v582
    %1296 = vmatpush.bf16.msra.mxu0 %v581
    %1297 = vmatpush.bf16.msra.mxu0 %v580
    %1298 = vmatpush.bf16.msra.mxu0 %v579
    %1299 = vmatpush.bf16.msra.mxu0 %v578
    %1300 = vmatpush.bf16.msra.mxu0 %v577
    %1301 = vmatpush.bf16.msra.mxu0 %v576
    %1302 = vmatpush.bf16.msra.mxu0 %v575
    %1303 = vmatmul.bf16.gmra.mxu0 %v1263
    %v1304 = vpop.f32.mrf.mxu0
    %v1305 = vadd.f32 %v1292, %v1304
    %v1306 = vpop.f32.mrf.mxu0
    %1307 = vdwg.mxu0
    %1308 = vmatpush.bf16.msra.mxu0 %v590
    %1309 = vmatpush.bf16.msra.mxu0 %v589
    %1310 = vmatpush.bf16.msra.mxu0 %v588
    %1311 = vmatpush.bf16.msra.mxu0 %v587
    %1312 = vmatpush.bf16.msra.mxu0 %v586
    %1313 = vmatpush.bf16.msra.mxu0 %v585
    %1314 = vmatpush.bf16.msra.mxu0 %v584
    %1315 = vmatpush.bf16.msra.mxu0 %v583
    %1316 = vmatmul.bf16.gmra.mxu0 %v1264
    %v1317 = vpop.f32.mrf.mxu0
    %v1318 = vadd.f32 %v1305, %v1317
    %v1319 = vpop.f32.mrf.mxu0
    %1320 = vdwg.mxu0
    %1321 = vmatpush.bf16.msra.mxu0 %v598
    %1322 = vmatpush.bf16.msra.mxu0 %v597
    %1323 = vmatpush.bf16.msra.mxu0 %v596
    %1324 = vmatpush.bf16.msra.mxu0 %v595
    %1325 = vmatpush.bf16.msra.mxu0 %v594
    %1326 = vmatpush.bf16.msra.mxu0 %v593
    %1327 = vmatpush.bf16.msra.mxu0 %v592
    %1328 = vmatpush.bf16.msra.mxu0 %v591
    %1329 = vmatmul.bf16.gmra.mxu0 %v1265
    %v1330 = vpop.f32.mrf.mxu0
    %v1331 = vadd.f32 %v1318, %v1330
    %v1332 = vpop.f32.mrf.mxu0
    %1333 = vdwg.mxu0
    %1334 = vmatpush.bf16.msra.mxu0 %v606
    %1335 = vmatpush.bf16.msra.mxu0 %v605
    %1336 = vmatpush.bf16.msra.mxu0 %v604
    %1337 = vmatpush.bf16.msra.mxu0 %v603
    %1338 = vmatpush.bf16.msra.mxu0 %v602
    %1339 = vmatpush.bf16.msra.mxu0 %v601
    %1340 = vmatpush.bf16.msra.mxu0 %v600
    %1341 = vmatpush.bf16.msra.mxu0 %v599
    %1342 = vmatmul.bf16.gmra.mxu0 %v1266
    %v1343 = vpop.f32.mrf.mxu0
    %v1344 = vadd.f32 %v1331, %v1343
    %v1345 = vpop.f32.mrf.mxu0
    %1346 = vdwg.mxu0
    %1347 = vmatpush.bf16.msra.mxu0 %v614
    %1348 = vmatpush.bf16.msra.mxu0 %v613
    %1349 = vmatpush.bf16.msra.mxu0 %v612
    %1350 = vmatpush.bf16.msra.mxu0 %v611
    %1351 = vmatpush.bf16.msra.mxu0 %v610
    %1352 = vmatpush.bf16.msra.mxu0 %v609
    %1353 = vmatpush.bf16.msra.mxu0 %v608
    %1354 = vmatpush.bf16.msra.mxu0 %v607
    %1355 = vmatmul.bf16.gmra.mxu0 %v1267
    %v1356 = vpop.f32.mrf.mxu0
    %v1357 = vadd.f32 %v1344, %v1356
    %v1358 = vpop.f32.mrf.mxu0
    %1359 = vdwg.mxu0
    %1360 = vmatpush.bf16.msra.mxu0 %v622
    %1361 = vmatpush.bf16.msra.mxu0 %v621
    %1362 = vmatpush.bf16.msra.mxu0 %v620
    %1363 = vmatpush.bf16.msra.mxu0 %v619
    %1364 = vmatpush.bf16.msra.mxu0 %v618
    %1365 = vmatpush.bf16.msra.mxu0 %v617
    %1366 = vmatpush.bf16.msra.mxu0 %v616
    %1367 = vmatpush.bf16.msra.mxu0 %v615
    %1368 = vmatmul.bf16.gmra.mxu0 %v1268
    %v1369 = vpop.f32.mrf.mxu0
    %v1370 = vadd.f32 %v1357, %v1369
    %v1371 = vpop.f32.mrf.mxu0
    %1372 = vdwg.mxu0
    %v1373 = vpack.c.bf16 %v1370, %v1370
    %v1374 = vunpack.c.l.bf16 %v1373
    %v1375 = vtanh.pop %v1374
    %v1376 = vpack.c.bf16 %v1375, %v1375
    %1377 = vmatpush.bf16.msra.mxu0 %v1060
    %1378 = vmatpush.bf16.msra.mxu0 %v1052
    %1379 = vmatpush.bf16.msra.mxu0 %v1044
    %1380 = vmatpush.bf16.msra.mxu0 %v1036
    %1381 = vmatpush.bf16.msra.mxu0 %v1028
    %1382 = vmatpush.bf16.msra.mxu0 %v1020
    %1383 = vmatpush.bf16.msra.mxu0 %v1012
    %1384 = vmatpush.bf16.msra.mxu0 %v1004
    %1385 = vmatmul.bf16.gmra.mxu0 %v1376
    %v1386 = vpop.f32.mrf.mxu0
    %v1387 = vadd.f32 %v796, %v1386
    %v1388 = vpop.f32.mrf.mxu0
    %1389 = vdwg.mxu0
    %1390 = vmatpush.bf16.msra.mxu0 %v1061
    %1391 = vmatpush.bf16.msra.mxu0 %v1053
    %1392 = vmatpush.bf16.msra.mxu0 %v1045
    %1393 = vmatpush.bf16.msra.mxu0 %v1037
    %1394 = vmatpush.bf16.msra.mxu0 %v1029
    %1395 = vmatpush.bf16.msra.mxu0 %v1021
    %1396 = vmatpush.bf16.msra.mxu0 %v1013
    %1397 = vmatpush.bf16.msra.mxu0 %v1005
    %1398 = vmatmul.bf16.gmra.mxu0 %v1376
    %v1399 = vpop.f32.mrf.mxu0
    %v1400 = vadd.f32 %v797, %v1399
    %v1401 = vpop.f32.mrf.mxu0
    %1402 = vdwg.mxu0
    %1403 = vmatpush.bf16.msra.mxu0 %v1062
    %1404 = vmatpush.bf16.msra.mxu0 %v1054
    %1405 = vmatpush.bf16.msra.mxu0 %v1046
    %1406 = vmatpush.bf16.msra.mxu0 %v1038
    %1407 = vmatpush.bf16.msra.mxu0 %v1030
    %1408 = vmatpush.bf16.msra.mxu0 %v1022
    %1409 = vmatpush.bf16.msra.mxu0 %v1014
    %1410 = vmatpush.bf16.msra.mxu0 %v1006
    %1411 = vmatmul.bf16.gmra.mxu0 %v1376
    %v1412 = vpop.f32.mrf.mxu0
    %v1413 = vadd.f32 %v798, %v1412
    %v1414 = vpop.f32.mrf.mxu0
    %1415 = vdwg.mxu0
    %1416 = vmatpush.bf16.msra.mxu0 %v1063
    %1417 = vmatpush.bf16.msra.mxu0 %v1055
    %1418 = vmatpush.bf16.msra.mxu0 %v1047
    %1419 = vmatpush.bf16.msra.mxu0 %v1039
    %1420 = vmatpush.bf16.msra.mxu0 %v1031
    %1421 = vmatpush.bf16.msra.mxu0 %v1023
    %1422 = vmatpush.bf16.msra.mxu0 %v1015
    %1423 = vmatpush.bf16.msra.mxu0 %v1007
    %1424 = vmatmul.bf16.gmra.mxu0 %v1376
    %v1425 = vpop.f32.mrf.mxu0
    %v1426 = vadd.f32 %v799, %v1425
    %v1427 = vpop.f32.mrf.mxu0
    %1428 = vdwg.mxu0
    %1429 = vmatpush.bf16.msra.mxu0 %v1064
    %1430 = vmatpush.bf16.msra.mxu0 %v1056
    %1431 = vmatpush.bf16.msra.mxu0 %v1048
    %1432 = vmatpush.bf16.msra.mxu0 %v1040
    %1433 = vmatpush.bf16.msra.mxu0 %v1032
    %1434 = vmatpush.bf16.msra.mxu0 %v1024
    %1435 = vmatpush.bf16.msra.mxu0 %v1016
    %1436 = vmatpush.bf16.msra.mxu0 %v1008
    %1437 = vmatmul.bf16.gmra.mxu0 %v1376
    %v1438 = vpop.f32.mrf.mxu0
    %v1439 = vadd.f32 %v800, %v1438
    %v1440 = vpop.f32.mrf.mxu0
    %1441 = vdwg.mxu0
    %1442 = vmatpush.bf16.msra.mxu0 %v1065
    %1443 = vmatpush.bf16.msra.mxu0 %v1057
    %1444 = vmatpush.bf16.msra.mxu0 %v1049
    %1445 = vmatpush.bf16.msra.mxu0 %v1041
    %1446 = vmatpush.bf16.msra.mxu0 %v1033
    %1447 = vmatpush.bf16.msra.mxu0 %v1025
    %1448 = vmatpush.bf16.msra.mxu0 %v1017
    %1449 = vmatpush.bf16.msra.mxu0 %v1009
    %1450 = vmatmul.bf16.gmra.mxu0 %v1376
    %v1451 = vpop.f32.mrf.mxu0
    %v1452 = vadd.f32 %v801, %v1451
    %v1453 = vpop.f32.mrf.mxu0
    %1454 = vdwg.mxu0
    %1455 = vmatpush.bf16.msra.mxu0 %v1066
    %1456 = vmatpush.bf16.msra.mxu0 %v1058
    %1457 = vmatpush.bf16.msra.mxu0 %v1050
    %1458 = vmatpush.bf16.msra.mxu0 %v1042
    %1459 = vmatpush.bf16.msra.mxu0 %v1034
    %1460 = vmatpush.bf16.msra.mxu0 %v1026
    %1461 = vmatpush.bf16.msra.mxu0 %v1018
    %1462 = vmatpush.bf16.msra.mxu0 %v1010
    %1463 = vmatmul.bf16.gmra.mxu0 %v1376
    %v1464 = vpop.f32.mrf.mxu0
    %v1465 = vadd.f32 %v802, %v1464
    %v1466 = vpop.f32.mrf.mxu0
    %1467 = vdwg.mxu0
    %1468 = vmatpush.bf16.msra.mxu0 %v1067
    %1469 = vmatpush.bf16.msra.mxu0 %v1059
    %1470 = vmatpush.bf16.msra.mxu0 %v1051
    %1471 = vmatpush.bf16.msra.mxu0 %v1043
    %1472 = vmatpush.bf16.msra.mxu0 %v1035
    %1473 = vmatpush.bf16.msra.mxu0 %v1027
    %1474 = vmatpush.bf16.msra.mxu0 %v1019
    %1475 = vmatpush.bf16.msra.mxu0 %v1011
    %1476 = vmatmul.bf16.gmra.mxu0 %v1376
    %v1477 = vpop.f32.mrf.mxu0
    %v1478 = vadd.f32 %v803, %v1477
    %v1479 = vpop.f32.mrf.mxu0
    %1480 = vdwg.mxu0
    %v1481 = vmul.f32 %v1142, 0.33333334
    %v1482 = vmul.f32 %v1155, 0.33333334
    %v1483 = vmul.f32 %v1168, 0.33333334
    %v1484 = vmul.f32 %v1181, 0.33333334
    %v1485 = vmul.f32 %v1194, 0.33333334
    %v1486 = vmul.f32 %v1207, 0.33333334
    %v1487 = vmul.f32 %v1220, 0.33333334
    %v1488 = vmul.f32 %v1233, 0.33333334
    %v1489 = vsub.f32 %v1387, %v1481
    %v1490 = vsub.f32 %v1400, %v1482
    %v1491 = vsub.f32 %v1413, %v1483
    %v1492 = vsub.f32 %v1426, %v1484
    %v1493 = vsub.f32 %v1439, %v1485
    %v1494 = vsub.f32 %v1452, %v1486
    %v1495 = vsub.f32 %v1465, %v1487
    %v1496 = vsub.f32 %v1478, %v1488
    %v1497 = vmul.f32 %v1236, %v1489
    %v1498 = vmul.f32 %v1236, %v1490
    %v1499 = vmul.f32 %v1236, %v1491
    %v1500 = vmul.f32 %v1236, %v1492
    %v1501 = vmul.f32 %v1236, %v1493
    %v1502 = vmul.f32 %v1236, %v1494
    %v1503 = vmul.f32 %v1236, %v1495
    %v1504 = vmul.f32 %v1236, %v1496
    %v1505 = vadd.f32 %v89, %v1497
    %v1506 = vadd.f32 %v90, %v1498
    %v1507 = vadd.f32 %v91, %v1499
    %v1508 = vadd.f32 %v92, %v1500
    %v1509 = vadd.f32 %v93, %v1501
    %v1510 = vadd.f32 %v94, %v1502
    %v1511 = vadd.f32 %v95, %v1503
    %v1512 = vadd.f32 %v96, %v1504
    %v1513 = vpack.c.bf16 %v1505, %v1505
    %v1514 = vpack.c.bf16 %v1506, %v1506
    %v1515 = vpack.c.bf16 %v1507, %v1507
    %v1516 = vpack.c.bf16 %v1508, %v1508
    %v1517 = vpack.c.bf16 %v1509, %v1509
    %v1518 = vpack.c.bf16 %v1510, %v1510
    %v1519 = vpack.c.bf16 %v1511, %v1511
    %v1520 = vpack.c.bf16 %v1512, %v1512
    %1521 = vmatpush.bf16.msra.mxu0 %v566
    %1522 = vmatpush.bf16.msra.mxu0 %v565
    %1523 = vmatpush.bf16.msra.mxu0 %v564
    %1524 = vmatpush.bf16.msra.mxu0 %v563
    %1525 = vmatpush.bf16.msra.mxu0 %v562
    %1526 = vmatpush.bf16.msra.mxu0 %v561
    %1527 = vmatpush.bf16.msra.mxu0 %v560
    %1528 = vmatpush.bf16.msra.mxu0 %v559
    %1529 = vmatmul.bf16.gmra.mxu0 %v1513
    %v1530 = vpop.f32.mrf.mxu0
    %v1531 = vadd.f32 %v301, %v1530
    %v1532 = vpop.f32.mrf.mxu0
    %1533 = vdwg.mxu0
    %1534 = vmatpush.bf16.msra.mxu0 %v574
    %1535 = vmatpush.bf16.msra.mxu0 %v573
    %1536 = vmatpush.bf16.msra.mxu0 %v572
    %1537 = vmatpush.bf16.msra.mxu0 %v571
    %1538 = vmatpush.bf16.msra.mxu0 %v570
    %1539 = vmatpush.bf16.msra.mxu0 %v569
    %1540 = vmatpush.bf16.msra.mxu0 %v568
    %1541 = vmatpush.bf16.msra.mxu0 %v567
    %1542 = vmatmul.bf16.gmra.mxu0 %v1514
    %v1543 = vpop.f32.mrf.mxu0
    %v1544 = vadd.f32 %v1531, %v1543
    %v1545 = vpop.f32.mrf.mxu0
    %1546 = vdwg.mxu0
    %1547 = vmatpush.bf16.msra.mxu0 %v582
    %1548 = vmatpush.bf16.msra.mxu0 %v581
    %1549 = vmatpush.bf16.msra.mxu0 %v580
    %1550 = vmatpush.bf16.msra.mxu0 %v579
    %1551 = vmatpush.bf16.msra.mxu0 %v578
    %1552 = vmatpush.bf16.msra.mxu0 %v577
    %1553 = vmatpush.bf16.msra.mxu0 %v576
    %1554 = vmatpush.bf16.msra.mxu0 %v575
    %1555 = vmatmul.bf16.gmra.mxu0 %v1515
    %v1556 = vpop.f32.mrf.mxu0
    %v1557 = vadd.f32 %v1544, %v1556
    %v1558 = vpop.f32.mrf.mxu0
    %1559 = vdwg.mxu0
    %1560 = vmatpush.bf16.msra.mxu0 %v590
    %1561 = vmatpush.bf16.msra.mxu0 %v589
    %1562 = vmatpush.bf16.msra.mxu0 %v588
    %1563 = vmatpush.bf16.msra.mxu0 %v587
    %1564 = vmatpush.bf16.msra.mxu0 %v586
    %1565 = vmatpush.bf16.msra.mxu0 %v585
    %1566 = vmatpush.bf16.msra.mxu0 %v584
    %1567 = vmatpush.bf16.msra.mxu0 %v583
    %1568 = vmatmul.bf16.gmra.mxu0 %v1516
    %v1569 = vpop.f32.mrf.mxu0
    %v1570 = vadd.f32 %v1557, %v1569
    %v1571 = vpop.f32.mrf.mxu0
    %1572 = vdwg.mxu0
    %1573 = vmatpush.bf16.msra.mxu0 %v598
    %1574 = vmatpush.bf16.msra.mxu0 %v597
    %1575 = vmatpush.bf16.msra.mxu0 %v596
    %1576 = vmatpush.bf16.msra.mxu0 %v595
    %1577 = vmatpush.bf16.msra.mxu0 %v594
    %1578 = vmatpush.bf16.msra.mxu0 %v593
    %1579 = vmatpush.bf16.msra.mxu0 %v592
    %1580 = vmatpush.bf16.msra.mxu0 %v591
    %1581 = vmatmul.bf16.gmra.mxu0 %v1517
    %v1582 = vpop.f32.mrf.mxu0
    %v1583 = vadd.f32 %v1570, %v1582
    %v1584 = vpop.f32.mrf.mxu0
    %1585 = vdwg.mxu0
    %1586 = vmatpush.bf16.msra.mxu0 %v606
    %1587 = vmatpush.bf16.msra.mxu0 %v605
    %1588 = vmatpush.bf16.msra.mxu0 %v604
    %1589 = vmatpush.bf16.msra.mxu0 %v603
    %1590 = vmatpush.bf16.msra.mxu0 %v602
    %1591 = vmatpush.bf16.msra.mxu0 %v601
    %1592 = vmatpush.bf16.msra.mxu0 %v600
    %1593 = vmatpush.bf16.msra.mxu0 %v599
    %1594 = vmatmul.bf16.gmra.mxu0 %v1518
    %v1595 = vpop.f32.mrf.mxu0
    %v1596 = vadd.f32 %v1583, %v1595
    %v1597 = vpop.f32.mrf.mxu0
    %1598 = vdwg.mxu0
    %1599 = vmatpush.bf16.msra.mxu0 %v614
    %1600 = vmatpush.bf16.msra.mxu0 %v613
    %1601 = vmatpush.bf16.msra.mxu0 %v612
    %1602 = vmatpush.bf16.msra.mxu0 %v611
    %1603 = vmatpush.bf16.msra.mxu0 %v610
    %1604 = vmatpush.bf16.msra.mxu0 %v609
    %1605 = vmatpush.bf16.msra.mxu0 %v608
    %1606 = vmatpush.bf16.msra.mxu0 %v607
    %1607 = vmatmul.bf16.gmra.mxu0 %v1519
    %v1608 = vpop.f32.mrf.mxu0
    %v1609 = vadd.f32 %v1596, %v1608
    %v1610 = vpop.f32.mrf.mxu0
    %1611 = vdwg.mxu0
    %1612 = vmatpush.bf16.msra.mxu0 %v622
    %1613 = vmatpush.bf16.msra.mxu0 %v621
    %1614 = vmatpush.bf16.msra.mxu0 %v620
    %1615 = vmatpush.bf16.msra.mxu0 %v619
    %1616 = vmatpush.bf16.msra.mxu0 %v618
    %1617 = vmatpush.bf16.msra.mxu0 %v617
    %1618 = vmatpush.bf16.msra.mxu0 %v616
    %1619 = vmatpush.bf16.msra.mxu0 %v615
    %1620 = vmatmul.bf16.gmra.mxu0 %v1520
    %v1621 = vpop.f32.mrf.mxu0
    %v1622 = vadd.f32 %v1609, %v1621
    %v1623 = vpop.f32.mrf.mxu0
    %1624 = vdwg.mxu0
    %v1625 = vpack.c.bf16 %v1622, %v1622
    %v1626 = vunpack.c.l.bf16 %v1625
    %v1627 = vtanh.pop %v1626
    %v1628 = vpack.c.bf16 %v1627, %v1627
    %1629 = vmatpush.bf16.msra.mxu0 %v1060
    %1630 = vmatpush.bf16.msra.mxu0 %v1052
    %1631 = vmatpush.bf16.msra.mxu0 %v1044
    %1632 = vmatpush.bf16.msra.mxu0 %v1036
    %1633 = vmatpush.bf16.msra.mxu0 %v1028
    %1634 = vmatpush.bf16.msra.mxu0 %v1020
    %1635 = vmatpush.bf16.msra.mxu0 %v1012
    %1636 = vmatpush.bf16.msra.mxu0 %v1004
    %1637 = vmatmul.bf16.gmra.mxu0 %v1628
    %v1638 = vpop.f32.mrf.mxu0
    %v1639 = vadd.f32 %v796, %v1638
    %v1640 = vpop.f32.mrf.mxu0
    %1641 = vdwg.mxu0
    %1642 = vmatpush.bf16.msra.mxu0 %v1061
    %1643 = vmatpush.bf16.msra.mxu0 %v1053
    %1644 = vmatpush.bf16.msra.mxu0 %v1045
    %1645 = vmatpush.bf16.msra.mxu0 %v1037
    %1646 = vmatpush.bf16.msra.mxu0 %v1029
    %1647 = vmatpush.bf16.msra.mxu0 %v1021
    %1648 = vmatpush.bf16.msra.mxu0 %v1013
    %1649 = vmatpush.bf16.msra.mxu0 %v1005
    %1650 = vmatmul.bf16.gmra.mxu0 %v1628
    %v1651 = vpop.f32.mrf.mxu0
    %v1652 = vadd.f32 %v797, %v1651
    %v1653 = vpop.f32.mrf.mxu0
    %1654 = vdwg.mxu0
    %1655 = vmatpush.bf16.msra.mxu0 %v1062
    %1656 = vmatpush.bf16.msra.mxu0 %v1054
    %1657 = vmatpush.bf16.msra.mxu0 %v1046
    %1658 = vmatpush.bf16.msra.mxu0 %v1038
    %1659 = vmatpush.bf16.msra.mxu0 %v1030
    %1660 = vmatpush.bf16.msra.mxu0 %v1022
    %1661 = vmatpush.bf16.msra.mxu0 %v1014
    %1662 = vmatpush.bf16.msra.mxu0 %v1006
    %1663 = vmatmul.bf16.gmra.mxu0 %v1628
    %v1664 = vpop.f32.mrf.mxu0
    %v1665 = vadd.f32 %v798, %v1664
    %v1666 = vpop.f32.mrf.mxu0
    %1667 = vdwg.mxu0
    %1668 = vmatpush.bf16.msra.mxu0 %v1063
    %1669 = vmatpush.bf16.msra.mxu0 %v1055
    %1670 = vmatpush.bf16.msra.mxu0 %v1047
    %1671 = vmatpush.bf16.msra.mxu0 %v1039
    %1672 = vmatpush.bf16.msra.mxu0 %v1031
    %1673 = vmatpush.bf16.msra.mxu0 %v1023
    %1674 = vmatpush.bf16.msra.mxu0 %v1015
    %1675 = vmatpush.bf16.msra.mxu0 %v1007
    %1676 = vmatmul.bf16.gmra.mxu0 %v1628
    %v1677 = vpop.f32.mrf.mxu0
    %v1678 = vadd.f32 %v799, %v1677
    %v1679 = vpop.f32.mrf.mxu0
    %1680 = vdwg.mxu0
    %1681 = vmatpush.bf16.msra.mxu0 %v1064
    %1682 = vmatpush.bf16.msra.mxu0 %v1056
    %1683 = vmatpush.bf16.msra.mxu0 %v1048
    %1684 = vmatpush.bf16.msra.mxu0 %v1040
    %1685 = vmatpush.bf16.msra.mxu0 %v1032
    %1686 = vmatpush.bf16.msra.mxu0 %v1024
    %1687 = vmatpush.bf16.msra.mxu0 %v1016
    %1688 = vmatpush.bf16.msra.mxu0 %v1008
    %1689 = vmatmul.bf16.gmra.mxu0 %v1628
    %v1690 = vpop.f32.mrf.mxu0
    %v1691 = vadd.f32 %v800, %v1690
    %v1692 = vpop.f32.mrf.mxu0
    %1693 = vdwg.mxu0
    %1694 = vmatpush.bf16.msra.mxu0 %v1065
    %1695 = vmatpush.bf16.msra.mxu0 %v1057
    %1696 = vmatpush.bf16.msra.mxu0 %v1049
    %1697 = vmatpush.bf16.msra.mxu0 %v1041
    %1698 = vmatpush.bf16.msra.mxu0 %v1033
    %1699 = vmatpush.bf16.msra.mxu0 %v1025
    %1700 = vmatpush.bf16.msra.mxu0 %v1017
    %1701 = vmatpush.bf16.msra.mxu0 %v1009
    %1702 = vmatmul.bf16.gmra.mxu0 %v1628
    %v1703 = vpop.f32.mrf.mxu0
    %v1704 = vadd.f32 %v801, %v1703
    %v1705 = vpop.f32.mrf.mxu0
    %1706 = vdwg.mxu0
    %1707 = vmatpush.bf16.msra.mxu0 %v1066
    %1708 = vmatpush.bf16.msra.mxu0 %v1058
    %1709 = vmatpush.bf16.msra.mxu0 %v1050
    %1710 = vmatpush.bf16.msra.mxu0 %v1042
    %1711 = vmatpush.bf16.msra.mxu0 %v1034
    %1712 = vmatpush.bf16.msra.mxu0 %v1026
    %1713 = vmatpush.bf16.msra.mxu0 %v1018
    %1714 = vmatpush.bf16.msra.mxu0 %v1010
    %1715 = vmatmul.bf16.gmra.mxu0 %v1628
    %v1716 = vpop.f32.mrf.mxu0
    %v1717 = vadd.f32 %v802, %v1716
    %v1718 = vpop.f32.mrf.mxu0
    %1719 = vdwg.mxu0
    %1720 = vmatpush.bf16.msra.mxu0 %v1067
    %1721 = vmatpush.bf16.msra.mxu0 %v1059
    %1722 = vmatpush.bf16.msra.mxu0 %v1051
    %1723 = vmatpush.bf16.msra.mxu0 %v1043
    %1724 = vmatpush.bf16.msra.mxu0 %v1035
    %1725 = vmatpush.bf16.msra.mxu0 %v1027
    %1726 = vmatpush.bf16.msra.mxu0 %v1019
    %1727 = vmatpush.bf16.msra.mxu0 %v1011
    %1728 = vmatmul.bf16.gmra.mxu0 %v1628
    %v1729 = vpop.f32.mrf.mxu0
    %v1730 = vadd.f32 %v803, %v1729
    %v1731 = vpop.f32.mrf.mxu0
    %1732 = vdwg.mxu0
    %v1733 = vsub.f32 %v1142, %v1387
    %v1734 = vsub.f32 %v1155, %v1400
    %v1735 = vsub.f32 %v1168, %v1413
    %v1736 = vsub.f32 %v1181, %v1426
    %v1737 = vsub.f32 %v1194, %v1439
    %v1738 = vsub.f32 %v1207, %v1452
    %v1739 = vsub.f32 %v1220, %v1465
    %v1740 = vsub.f32 %v1233, %v1478
    %v1741 = vadd.f32 %v1733, %v1639
    %v1742 = vadd.f32 %v1734, %v1652
    %v1743 = vadd.f32 %v1735, %v1665
    %v1744 = vadd.f32 %v1736, %v1678
    %v1745 = vadd.f32 %v1737, %v1691
    %v1746 = vadd.f32 %v1738, %v1704
    %v1747 = vadd.f32 %v1739, %v1717
    %v1748 = vadd.f32 %v1740, %v1730
    %v1749 = vmul.f32 %v1236, %v1741
    %v1750 = vmul.f32 %v1236, %v1742
    %v1751 = vmul.f32 %v1236, %v1743
    %v1752 = vmul.f32 %v1236, %v1744
    %v1753 = vmul.f32 %v1236, %v1745
    %v1754 = vmul.f32 %v1236, %v1746
    %v1755 = vmul.f32 %v1236, %v1747
    %v1756 = vmul.f32 %v1236, %v1748
    %v1757 = vadd.f32 %v89, %v1749
    %v1758 = vadd.f32 %v90, %v1750
    %v1759 = vadd.f32 %v91, %v1751
    %v1760 = vadd.f32 %v92, %v1752
    %v1761 = vadd.f32 %v93, %v1753
    %v1762 = vadd.f32 %v94, %v1754
    %v1763 = vadd.f32 %v95, %v1755
    %v1764 = vadd.f32 %v96, %v1756
    %v1765 = vpack.c.bf16 %v1757, %v1757
    %v1766 = vpack.c.bf16 %v1758, %v1758
    %v1767 = vpack.c.bf16 %v1759, %v1759
    %v1768 = vpack.c.bf16 %v1760, %v1760
    %v1769 = vpack.c.bf16 %v1761, %v1761
    %v1770 = vpack.c.bf16 %v1762, %v1762
    %v1771 = vpack.c.bf16 %v1763, %v1763
    %v1772 = vpack.c.bf16 %v1764, %v1764
    %1773 = vmatpush.bf16.msra.mxu0 %v566
    %1774 = vmatpush.bf16.msra.mxu0 %v565
    %1775 = vmatpush.bf16.msra.mxu0 %v564
    %1776 = vmatpush.bf16.msra.mxu0 %v563
    %1777 = vmatpush.bf16.msra.mxu0 %v562
    %1778 = vmatpush.bf16.msra.mxu0 %v561
    %1779 = vmatpush.bf16.msra.mxu0 %v560
    %1780 = vmatpush.bf16.msra.mxu0 %v559
    %1781 = vmatmul.bf16.gmra.mxu0 %v1765
    %v1782 = vpop.f32.mrf.mxu0
    %v1783 = vadd.f32 %v301, %v1782
    %v1784 = vpop.f32.mrf.mxu0
    %1785 = vdwg.mxu0
    %1786 = vmatpush.bf16.msra.mxu0 %v574
    %1787 = vmatpush.bf16.msra.mxu0 %v573
    %1788 = vmatpush.bf16.msra.mxu0 %v572
    %1789 = vmatpush.bf16.msra.mxu0 %v571
    %1790 = vmatpush.bf16.msra.mxu0 %v570
    %1791 = vmatpush.bf16.msra.mxu0 %v569
    %1792 = vmatpush.bf16.msra.mxu0 %v568
    %1793 = vmatpush.bf16.msra.mxu0 %v567
    %1794 = vmatmul.bf16.gmra.mxu0 %v1766
    %v1795 = vpop.f32.mrf.mxu0
    %v1796 = vadd.f32 %v1783, %v1795
    %v1797 = vpop.f32.mrf.mxu0
    %1798 = vdwg.mxu0
    %1799 = vmatpush.bf16.msra.mxu0 %v582
    %1800 = vmatpush.bf16.msra.mxu0 %v581
    %1801 = vmatpush.bf16.msra.mxu0 %v580
    %1802 = vmatpush.bf16.msra.mxu0 %v579
    %1803 = vmatpush.bf16.msra.mxu0 %v578
    %1804 = vmatpush.bf16.msra.mxu0 %v577
    %1805 = vmatpush.bf16.msra.mxu0 %v576
    %1806 = vmatpush.bf16.msra.mxu0 %v575
    %1807 = vmatmul.bf16.gmra.mxu0 %v1767
    %v1808 = vpop.f32.mrf.mxu0
    %v1809 = vadd.f32 %v1796, %v1808
    %v1810 = vpop.f32.mrf.mxu0
    %1811 = vdwg.mxu0
    %1812 = vmatpush.bf16.msra.mxu0 %v590
    %1813 = vmatpush.bf16.msra.mxu0 %v589
    %1814 = vmatpush.bf16.msra.mxu0 %v588
    %1815 = vmatpush.bf16.msra.mxu0 %v587
    %1816 = vmatpush.bf16.msra.mxu0 %v586
    %1817 = vmatpush.bf16.msra.mxu0 %v585
    %1818 = vmatpush.bf16.msra.mxu0 %v584
    %1819 = vmatpush.bf16.msra.mxu0 %v583
    %1820 = vmatmul.bf16.gmra.mxu0 %v1768
    %v1821 = vpop.f32.mrf.mxu0
    %v1822 = vadd.f32 %v1809, %v1821
    %v1823 = vpop.f32.mrf.mxu0
    %1824 = vdwg.mxu0
    %1825 = vmatpush.bf16.msra.mxu0 %v598
    %1826 = vmatpush.bf16.msra.mxu0 %v597
    %1827 = vmatpush.bf16.msra.mxu0 %v596
    %1828 = vmatpush.bf16.msra.mxu0 %v595
    %1829 = vmatpush.bf16.msra.mxu0 %v594
    %1830 = vmatpush.bf16.msra.mxu0 %v593
    %1831 = vmatpush.bf16.msra.mxu0 %v592
    %1832 = vmatpush.bf16.msra.mxu0 %v591
    %1833 = vmatmul.bf16.gmra.mxu0 %v1769
    %v1834 = vpop.f32.mrf.mxu0
    %v1835 = vadd.f32 %v1822, %v1834
    %v1836 = vpop.f32.mrf.mxu0
    %1837 = vdwg.mxu0
    %1838 = vmatpush.bf16.msra.mxu0 %v606
    %1839 = vmatpush.bf16.msra.mxu0 %v605
    %1840 = vmatpush.bf16.msra.mxu0 %v604
    %1841 = vmatpush.bf16.msra.mxu0 %v603
    %1842 = vmatpush.bf16.msra.mxu0 %v602
    %1843 = vmatpush.bf16.msra.mxu0 %v601
    %1844 = vmatpush.bf16.msra.mxu0 %v600
    %1845 = vmatpush.bf16.msra.mxu0 %v599
    %1846 = vmatmul.bf16.gmra.mxu0 %v1770
    %v1847 = vpop.f32.mrf.mxu0
    %v1848 = vadd.f32 %v1835, %v1847
    %v1849 = vpop.f32.mrf.mxu0
    %1850 = vdwg.mxu0
    %1851 = vmatpush.bf16.msra.mxu0 %v614
    %1852 = vmatpush.bf16.msra.mxu0 %v613
    %1853 = vmatpush.bf16.msra.mxu0 %v612
    %1854 = vmatpush.bf16.msra.mxu0 %v611
    %1855 = vmatpush.bf16.msra.mxu0 %v610
    %1856 = vmatpush.bf16.msra.mxu0 %v609
    %1857 = vmatpush.bf16.msra.mxu0 %v608
    %1858 = vmatpush.bf16.msra.mxu0 %v607
    %1859 = vmatmul.bf16.gmra.mxu0 %v1771
    %v1860 = vpop.f32.mrf.mxu0
    %v1861 = vadd.f32 %v1848, %v1860
    %v1862 = vpop.f32.mrf.mxu0
    %1863 = vdwg.mxu0
    %1864 = vmatpush.bf16.msra.mxu0 %v622
    %1865 = vmatpush.bf16.msra.mxu0 %v621
    %1866 = vmatpush.bf16.msra.mxu0 %v620
    %1867 = vmatpush.bf16.msra.mxu0 %v619
    %1868 = vmatpush.bf16.msra.mxu0 %v618
    %1869 = vmatpush.bf16.msra.mxu0 %v617
    %1870 = vmatpush.bf16.msra.mxu0 %v616
    %1871 = vmatpush.bf16.msra.mxu0 %v615
    %1872 = vmatmul.bf16.gmra.mxu0 %v1772
    %v1873 = vpop.f32.mrf.mxu0
    %v1874 = vadd.f32 %v1861, %v1873
    %v1875 = vpop.f32.mrf.mxu0
    %1876 = vdwg.mxu0
    %v1877 = vpack.c.bf16 %v1874, %v1874
    %v1878 = vunpack.c.l.bf16 %v1877
    %v1879 = vtanh.pop %v1878
    %v1880 = vpack.c.bf16 %v1879, %v1879
    %1881 = vmatpush.bf16.msra.mxu0 %v1060
    %1882 = vmatpush.bf16.msra.mxu0 %v1052
    %1883 = vmatpush.bf16.msra.mxu0 %v1044
    %1884 = vmatpush.bf16.msra.mxu0 %v1036
    %1885 = vmatpush.bf16.msra.mxu0 %v1028
    %1886 = vmatpush.bf16.msra.mxu0 %v1020
    %1887 = vmatpush.bf16.msra.mxu0 %v1012
    %1888 = vmatpush.bf16.msra.mxu0 %v1004
    %1889 = vmatmul.bf16.gmra.mxu0 %v1880
    %v1890 = vpop.f32.mrf.mxu0
    %v1891 = vadd.f32 %v796, %v1890
    %v1892 = vpop.f32.mrf.mxu0
    %1893 = vdwg.mxu0
    %1894 = vmatpush.bf16.msra.mxu0 %v1061
    %1895 = vmatpush.bf16.msra.mxu0 %v1053
    %1896 = vmatpush.bf16.msra.mxu0 %v1045
    %1897 = vmatpush.bf16.msra.mxu0 %v1037
    %1898 = vmatpush.bf16.msra.mxu0 %v1029
    %1899 = vmatpush.bf16.msra.mxu0 %v1021
    %1900 = vmatpush.bf16.msra.mxu0 %v1013
    %1901 = vmatpush.bf16.msra.mxu0 %v1005
    %1902 = vmatmul.bf16.gmra.mxu0 %v1880
    %v1903 = vpop.f32.mrf.mxu0
    %v1904 = vadd.f32 %v797, %v1903
    %v1905 = vpop.f32.mrf.mxu0
    %1906 = vdwg.mxu0
    %1907 = vmatpush.bf16.msra.mxu0 %v1062
    %1908 = vmatpush.bf16.msra.mxu0 %v1054
    %1909 = vmatpush.bf16.msra.mxu0 %v1046
    %1910 = vmatpush.bf16.msra.mxu0 %v1038
    %1911 = vmatpush.bf16.msra.mxu0 %v1030
    %1912 = vmatpush.bf16.msra.mxu0 %v1022
    %1913 = vmatpush.bf16.msra.mxu0 %v1014
    %1914 = vmatpush.bf16.msra.mxu0 %v1006
    %1915 = vmatmul.bf16.gmra.mxu0 %v1880
    %v1916 = vpop.f32.mrf.mxu0
    %v1917 = vadd.f32 %v798, %v1916
    %v1918 = vpop.f32.mrf.mxu0
    %1919 = vdwg.mxu0
    %1920 = vmatpush.bf16.msra.mxu0 %v1063
    %1921 = vmatpush.bf16.msra.mxu0 %v1055
    %1922 = vmatpush.bf16.msra.mxu0 %v1047
    %1923 = vmatpush.bf16.msra.mxu0 %v1039
    %1924 = vmatpush.bf16.msra.mxu0 %v1031
    %1925 = vmatpush.bf16.msra.mxu0 %v1023
    %1926 = vmatpush.bf16.msra.mxu0 %v1015
    %1927 = vmatpush.bf16.msra.mxu0 %v1007
    %1928 = vmatmul.bf16.gmra.mxu0 %v1880
    %v1929 = vpop.f32.mrf.mxu0
    %v1930 = vadd.f32 %v799, %v1929
    %v1931 = vpop.f32.mrf.mxu0
    %1932 = vdwg.mxu0
    %1933 = vmatpush.bf16.msra.mxu0 %v1064
    %1934 = vmatpush.bf16.msra.mxu0 %v1056
    %1935 = vmatpush.bf16.msra.mxu0 %v1048
    %1936 = vmatpush.bf16.msra.mxu0 %v1040
    %1937 = vmatpush.bf16.msra.mxu0 %v1032
    %1938 = vmatpush.bf16.msra.mxu0 %v1024
    %1939 = vmatpush.bf16.msra.mxu0 %v1016
    %1940 = vmatpush.bf16.msra.mxu0 %v1008
    %1941 = vmatmul.bf16.gmra.mxu0 %v1880
    %v1942 = vpop.f32.mrf.mxu0
    %v1943 = vadd.f32 %v800, %v1942
    %v1944 = vpop.f32.mrf.mxu0
    %1945 = vdwg.mxu0
    %1946 = vmatpush.bf16.msra.mxu0 %v1065
    %1947 = vmatpush.bf16.msra.mxu0 %v1057
    %1948 = vmatpush.bf16.msra.mxu0 %v1049
    %1949 = vmatpush.bf16.msra.mxu0 %v1041
    %1950 = vmatpush.bf16.msra.mxu0 %v1033
    %1951 = vmatpush.bf16.msra.mxu0 %v1025
    %1952 = vmatpush.bf16.msra.mxu0 %v1017
    %1953 = vmatpush.bf16.msra.mxu0 %v1009
    %1954 = vmatmul.bf16.gmra.mxu0 %v1880
    %v1955 = vpop.f32.mrf.mxu0
    %v1956 = vadd.f32 %v801, %v1955
    %v1957 = vpop.f32.mrf.mxu0
    %1958 = vdwg.mxu0
    %1959 = vmatpush.bf16.msra.mxu0 %v1066
    %1960 = vmatpush.bf16.msra.mxu0 %v1058
    %1961 = vmatpush.bf16.msra.mxu0 %v1050
    %1962 = vmatpush.bf16.msra.mxu0 %v1042
    %1963 = vmatpush.bf16.msra.mxu0 %v1034
    %1964 = vmatpush.bf16.msra.mxu0 %v1026
    %1965 = vmatpush.bf16.msra.mxu0 %v1018
    %1966 = vmatpush.bf16.msra.mxu0 %v1010
    %1967 = vmatmul.bf16.gmra.mxu0 %v1880
    %v1968 = vpop.f32.mrf.mxu0
    %v1969 = vadd.f32 %v802, %v1968
    %v1970 = vpop.f32.mrf.mxu0
    %1971 = vdwg.mxu0
    %1972 = vmatpush.bf16.msra.mxu0 %v1067
    %1973 = vmatpush.bf16.msra.mxu0 %v1059
    %1974 = vmatpush.bf16.msra.mxu0 %v1051
    %1975 = vmatpush.bf16.msra.mxu0 %v1043
    %1976 = vmatpush.bf16.msra.mxu0 %v1035
    %1977 = vmatpush.bf16.msra.mxu0 %v1027
    %1978 = vmatpush.bf16.msra.mxu0 %v1019
    %1979 = vmatpush.bf16.msra.mxu0 %v1011
    %1980 = vmatmul.bf16.gmra.mxu0 %v1880
    %v1981 = vpop.f32.mrf.mxu0
    %v1982 = vadd.f32 %v803, %v1981
    %v1983 = vpop.f32.mrf.mxu0
    %1984 = vdwg.mxu0
    %v1985 = vadd.f32 %v1387, %v1639
    %v1986 = vadd.f32 %v1400, %v1652
    %v1987 = vadd.f32 %v1413, %v1665
    %v1988 = vadd.f32 %v1426, %v1678
    %v1989 = vadd.f32 %v1439, %v1691
    %v1990 = vadd.f32 %v1452, %v1704
    %v1991 = vadd.f32 %v1465, %v1717
    %v1992 = vadd.f32 %v1478, %v1730
    %v1993 = vmul.f32 %v1985, 3.0
    %v1994 = vmul.f32 %v1986, 3.0
    %v1995 = vmul.f32 %v1987, 3.0
    %v1996 = vmul.f32 %v1988, 3.0
    %v1997 = vmul.f32 %v1989, 3.0
    %v1998 = vmul.f32 %v1990, 3.0
    %v1999 = vmul.f32 %v1991, 3.0
    %v2000 = vmul.f32 %v1992, 3.0
    %v2001 = vadd.f32 %v1142, %v1993
    %v2002 = vadd.f32 %v1155, %v1994
    %v2003 = vadd.f32 %v1168, %v1995
    %v2004 = vadd.f32 %v1181, %v1996
    %v2005 = vadd.f32 %v1194, %v1997
    %v2006 = vadd.f32 %v1207, %v1998
    %v2007 = vadd.f32 %v1220, %v1999
    %v2008 = vadd.f32 %v1233, %v2000
    %v2009 = vadd.f32 %v2001, %v1891
    %v2010 = vadd.f32 %v2002, %v1904
    %v2011 = vadd.f32 %v2003, %v1917
    %v2012 = vadd.f32 %v2004, %v1930
    %v2013 = vadd.f32 %v2005, %v1943
    %v2014 = vadd.f32 %v2006, %v1956
    %v2015 = vadd.f32 %v2007, %v1969
    %v2016 = vadd.f32 %v2008, %v1982
    %s2017 = smul.f32 %s291, 0.125
    %v2018 = vstv %s2017
    %v2019 = vmul.f32 %v2009, %v2018
    %v2020 = vmul.f32 %v2010, %v2018
    %v2021 = vmul.f32 %v2011, %v2018
    %v2022 = vmul.f32 %v2012, %v2018
    %v2023 = vmul.f32 %v2013, %v2018
    %v2024 = vmul.f32 %v2014, %v2018
    %v2025 = vmul.f32 %v2015, %v2018
    %v2026 = vmul.f32 %v2016, %v2018
    %v2027 = vadd.f32 %v89, %v2019
    %v2028 = vadd.f32 %v90, %v2020
    %v2029 = vadd.f32 %v91, %v2021
    %v2030 = vadd.f32 %v92, %v2022
    %v2031 = vadd.f32 %v93, %v2023
    %v2032 = vadd.f32 %v94, %v2024
    %v2033 = vadd.f32 %v95, %v2025
    %v2034 = vadd.f32 %v96, %v2026
    %s2035 = sld [smem:[#allocation3 + $0x1]]
    %v2036 = vpack.c.bf16 %v2027, %v2027
    %v2037 = vpack.c.bf16 %v2028, %v2028
    %v2038 = vpack.c.bf16 %v2029, %v2029
    %v2039 = vpack.c.bf16 %v2030, %v2030
    %v2040 = vpack.c.bf16 %v2031, %v2031
    %v2041 = vpack.c.bf16 %v2032, %v2032
    %v2042 = vpack.c.bf16 %v2033, %v2033
    %v2043 = vpack.c.bf16 %v2034, %v2034
    %2044 = vmatpush.bf16.msra.mxu0 %v566
    %2045 = vmatpush.bf16.msra.mxu0 %v565
    %2046 = vmatpush.bf16.msra.mxu0 %v564
    %2047 = vmatpush.bf16.msra.mxu0 %v563
    %2048 = vmatpush.bf16.msra.mxu0 %v562
    %2049 = vmatpush.bf16.msra.mxu0 %v561
    %2050 = vmatpush.bf16.msra.mxu0 %v560
    %2051 = vmatpush.bf16.msra.mxu0 %v559
    %2052 = vmatmul.bf16.gmra.mxu0 %v2036
    %v2053 = vpop.f32.mrf.mxu0
    %v2054 = vadd.f32 %v301, %v2053
    %v2055 = vpop.f32.mrf.mxu0
    %2056 = vdwg.mxu0
    %2057 = vmatpush.bf16.msra.mxu0 %v574
    %2058 = vmatpush.bf16.msra.mxu0 %v573
    %2059 = vmatpush.bf16.msra.mxu0 %v572
    %2060 = vmatpush.bf16.msra.mxu0 %v571
    %2061 = vmatpush.bf16.msra.mxu0 %v570
    %2062 = vmatpush.bf16.msra.mxu0 %v569
    %2063 = vmatpush.bf16.msra.mxu0 %v568
    %2064 = vmatpush.bf16.msra.mxu0 %v567
    %2065 = vmatmul.bf16.gmra.mxu0 %v2037
    %v2066 = vpop.f32.mrf.mxu0
    %v2067 = vadd.f32 %v2054, %v2066
    %v2068 = vpop.f32.mrf.mxu0
    %2069 = vdwg.mxu0
    %2070 = vmatpush.bf16.msra.mxu0 %v582
    %2071 = vmatpush.bf16.msra.mxu0 %v581
    %2072 = vmatpush.bf16.msra.mxu0 %v580
    %2073 = vmatpush.bf16.msra.mxu0 %v579
    %2074 = vmatpush.bf16.msra.mxu0 %v578
    %2075 = vmatpush.bf16.msra.mxu0 %v577
    %2076 = vmatpush.bf16.msra.mxu0 %v576
    %2077 = vmatpush.bf16.msra.mxu0 %v575
    %2078 = vmatmul.bf16.gmra.mxu0 %v2038
    %v2079 = vpop.f32.mrf.mxu0
    %v2080 = vadd.f32 %v2067, %v2079
    %v2081 = vpop.f32.mrf.mxu0
    %2082 = vdwg.mxu0
    %2083 = vmatpush.bf16.msra.mxu0 %v590
    %2084 = vmatpush.bf16.msra.mxu0 %v589
    %2085 = vmatpush.bf16.msra.mxu0 %v588
    %2086 = vmatpush.bf16.msra.mxu0 %v587
    %2087 = vmatpush.bf16.msra.mxu0 %v586
    %2088 = vmatpush.bf16.msra.mxu0 %v585
    %2089 = vmatpush.bf16.msra.mxu0 %v584
    %2090 = vmatpush.bf16.msra.mxu0 %v583
    %2091 = vmatmul.bf16.gmra.mxu0 %v2039
    %v2092 = vpop.f32.mrf.mxu0
    %v2093 = vadd.f32 %v2080, %v2092
    %v2094 = vpop.f32.mrf.mxu0
    %2095 = vdwg.mxu0
    %2096 = vmatpush.bf16.msra.mxu0 %v598
    %2097 = vmatpush.bf16.msra.mxu0 %v597
    %2098 = vmatpush.bf16.msra.mxu0 %v596
    %2099 = vmatpush.bf16.msra.mxu0 %v595
    %2100 = vmatpush.bf16.msra.mxu0 %v594
    %2101 = vmatpush.bf16.msra.mxu0 %v593
    %2102 = vmatpush.bf16.msra.mxu0 %v592
    %2103 = vmatpush.bf16.msra.mxu0 %v591
    %2104 = vmatmul.bf16.gmra.mxu0 %v2040
    %v2105 = vpop.f32.mrf.mxu0
    %v2106 = vadd.f32 %v2093, %v2105
    %v2107 = vpop.f32.mrf.mxu0
    %2108 = vdwg.mxu0
    %2109 = vmatpush.bf16.msra.mxu0 %v606
    %2110 = vmatpush.bf16.msra.mxu0 %v605
    %2111 = vmatpush.bf16.msra.mxu0 %v604
    %2112 = vmatpush.bf16.msra.mxu0 %v603
    %2113 = vmatpush.bf16.msra.mxu0 %v602
    %2114 = vmatpush.bf16.msra.mxu0 %v601
    %2115 = vmatpush.bf16.msra.mxu0 %v600
    %2116 = vmatpush.bf16.msra.mxu0 %v599
    %2117 = vmatmul.bf16.gmra.mxu0 %v2041
    %v2118 = vpop.f32.mrf.mxu0
    %v2119 = vadd.f32 %v2106, %v2118
    %v2120 = vpop.f32.mrf.mxu0
    %2121 = vdwg.mxu0
    %2122 = vmatpush.bf16.msra.mxu0 %v614
    %2123 = vmatpush.bf16.msra.mxu0 %v613
    %2124 = vmatpush.bf16.msra.mxu0 %v612
    %2125 = vmatpush.bf16.msra.mxu0 %v611
    %2126 = vmatpush.bf16.msra.mxu0 %v610
    %2127 = vmatpush.bf16.msra.mxu0 %v609
    %2128 = vmatpush.bf16.msra.mxu0 %v608
    %2129 = vmatpush.bf16.msra.mxu0 %v607
    %2130 = vmatmul.bf16.gmra.mxu0 %v2042
    %v2131 = vpop.f32.mrf.mxu0
    %v2132 = vadd.f32 %v2119, %v2131
    %v2133 = vpop.f32.mrf.mxu0
    %2134 = vdwg.mxu0
    %2135 = vmatpush.bf16.msra.mxu0 %v622
    %2136 = vmatpush.bf16.msra.mxu0 %v621
    %2137 = vmatpush.bf16.msra.mxu0 %v620
    %2138 = vmatpush.bf16.msra.mxu0 %v619
    %2139 = vmatpush.bf16.msra.mxu0 %v618
    %2140 = vmatpush.bf16.msra.mxu0 %v617
    %2141 = vmatpush.bf16.msra.mxu0 %v616
    %2142 = vmatpush.bf16.msra.mxu0 %v615
    %2143 = vmatmul.bf16.gmra.mxu0 %v2043
    %v2144 = vpop.f32.mrf.mxu0
    %v2145 = vadd.f32 %v2132, %v2144
    %v2146 = vpop.f32.mrf.mxu0
    %2147 = vdwg.mxu0
    %v2148 = vpack.c.bf16 %v2145, %v2145
    %v2149 = vunpack.c.l.bf16 %v2148
    %v2150 = vtanh.pop %v2149
    %v2151 = vpack.c.bf16 %v2150, %v2150
    %2152 = vmatpush.bf16.msra.mxu0 %v1060
    %2153 = vmatpush.bf16.msra.mxu0 %v1052
    %2154 = vmatpush.bf16.msra.mxu0 %v1044
    %2155 = vmatpush.bf16.msra.mxu0 %v1036
    %2156 = vmatpush.bf16.msra.mxu0 %v1028
    %2157 = vmatpush.bf16.msra.mxu0 %v1020
    %2158 = vmatpush.bf16.msra.mxu0 %v1012
    %2159 = vmatpush.bf16.msra.mxu0 %v1004
    %2160 = vmatmul.bf16.gmra.mxu0 %v2151
    %v2161 = vpop.f32.mrf.mxu0
    %v2162 = vadd.f32 %v796, %v2161
    %v2163 = vpop.f32.mrf.mxu0
    %2164 = vdwg.mxu0
    %2165 = vmatpush.bf16.msra.mxu0 %v1061
    %2166 = vmatpush.bf16.msra.mxu0 %v1053
    %2167 = vmatpush.bf16.msra.mxu0 %v1045
    %2168 = vmatpush.bf16.msra.mxu0 %v1037
    %2169 = vmatpush.bf16.msra.mxu0 %v1029
    %2170 = vmatpush.bf16.msra.mxu0 %v1021
    %2171 = vmatpush.bf16.msra.mxu0 %v1013
    %2172 = vmatpush.bf16.msra.mxu0 %v1005
    %2173 = vmatmul.bf16.gmra.mxu0 %v2151
    %v2174 = vpop.f32.mrf.mxu0
    %v2175 = vadd.f32 %v797, %v2174
    %v2176 = vpop.f32.mrf.mxu0
    %2177 = vdwg.mxu0
    %2178 = vmatpush.bf16.msra.mxu0 %v1062
    %2179 = vmatpush.bf16.msra.mxu0 %v1054
    %2180 = vmatpush.bf16.msra.mxu0 %v1046
    %2181 = vmatpush.bf16.msra.mxu0 %v1038
    %2182 = vmatpush.bf16.msra.mxu0 %v1030
    %2183 = vmatpush.bf16.msra.mxu0 %v1022
    %2184 = vmatpush.bf16.msra.mxu0 %v1014
    %2185 = vmatpush.bf16.msra.mxu0 %v1006
    %2186 = vmatmul.bf16.gmra.mxu0 %v2151
    %v2187 = vpop.f32.mrf.mxu0
    %v2188 = vadd.f32 %v798, %v2187
    %v2189 = vpop.f32.mrf.mxu0
    %2190 = vdwg.mxu0
    %2191 = vmatpush.bf16.msra.mxu0 %v1063
    %2192 = vmatpush.bf16.msra.mxu0 %v1055
    %2193 = vmatpush.bf16.msra.mxu0 %v1047
    %2194 = vmatpush.bf16.msra.mxu0 %v1039
    %2195 = vmatpush.bf16.msra.mxu0 %v1031
    %2196 = vmatpush.bf16.msra.mxu0 %v1023
    %2197 = vmatpush.bf16.msra.mxu0 %v1015
    %2198 = vmatpush.bf16.msra.mxu0 %v1007
    %2199 = vmatmul.bf16.gmra.mxu0 %v2151
    %v2200 = vpop.f32.mrf.mxu0
    %v2201 = vadd.f32 %v799, %v2200
    %v2202 = vpop.f32.mrf.mxu0
    %2203 = vdwg.mxu0
    %2204 = vmatpush.bf16.msra.mxu0 %v1064
    %2205 = vmatpush.bf16.msra.mxu0 %v1056
    %2206 = vmatpush.bf16.msra.mxu0 %v1048
    %2207 = vmatpush.bf16.msra.mxu0 %v1040
    %2208 = vmatpush.bf16.msra.mxu0 %v1032
    %2209 = vmatpush.bf16.msra.mxu0 %v1024
    %2210 = vmatpush.bf16.msra.mxu0 %v1016
    %2211 = vmatpush.bf16.msra.mxu0 %v1008
    %2212 = vmatmul.bf16.gmra.mxu0 %v2151
    %v2213 = vpop.f32.mrf.mxu0
    %v2214 = vadd.f32 %v800, %v2213
    %v2215 = vpop.f32.mrf.mxu0
    %2216 = vdwg.mxu0
    %2217 = vmatpush.bf16.msra.mxu0 %v1065
    %2218 = vmatpush.bf16.msra.mxu0 %v1057
    %2219 = vmatpush.bf16.msra.mxu0 %v1049
    %2220 = vmatpush.bf16.msra.mxu0 %v1041
    %2221 = vmatpush.bf16.msra.mxu0 %v1033
    %2222 = vmatpush.bf16.msra.mxu0 %v1025
    %2223 = vmatpush.bf16.msra.mxu0 %v1017
    %2224 = vmatpush.bf16.msra.mxu0 %v1009
    %2225 = vmatmul.bf16.gmra.mxu0 %v2151
    %v2226 = vpop.f32.mrf.mxu0
    %v2227 = vadd.f32 %v801, %v2226
    %v2228 = vpop.f32.mrf.mxu0
    %2229 = vdwg.mxu0
    %2230 = vmatpush.bf16.msra.mxu0 %v1066
    %2231 = vmatpush.bf16.msra.mxu0 %v1058
    %2232 = vmatpush.bf16.msra.mxu0 %v1050
    %2233 = vmatpush.bf16.msra.mxu0 %v1042
    %2234 = vmatpush.bf16.msra.mxu0 %v1034
    %2235 = vmatpush.bf16.msra.mxu0 %v1026
    %2236 = vmatpush.bf16.msra.mxu0 %v1018
    %2237 = vmatpush.bf16.msra.mxu0 %v1010
    %2238 = vmatmul.bf16.gmra.mxu0 %v2151
    %v2239 = vpop.f32.mrf.mxu0
    %v2240 = vadd.f32 %v802, %v2239
    %v2241 = vpop.f32.mrf.mxu0
    %2242 = vdwg.mxu0
    %2243 = vmatpush.bf16.msra.mxu0 %v1067
    %2244 = vmatpush.bf16.msra.mxu0 %v1059
    %2245 = vmatpush.bf16.msra.mxu0 %v1051
    %2246 = vmatpush.bf16.msra.mxu0 %v1043
    %2247 = vmatpush.bf16.msra.mxu0 %v1035
    %2248 = vmatpush.bf16.msra.mxu0 %v1027
    %2249 = vmatpush.bf16.msra.mxu0 %v1019
    %2250 = vmatpush.bf16.msra.mxu0 %v1011
    %2251 = vmatmul.bf16.gmra.mxu0 %v2151
    %v2252 = vpop.f32.mrf.mxu0
    %v2253 = vadd.f32 %v803, %v2252
    %v2254 = vpop.f32.mrf.mxu0
    %2255 = vdwg.mxu0
    %v2256 = vstv %s2035
    %v2257 = vmul.f32 %v2256, %v2162
    %v2258 = vmul.f32 %v2256, %v2175
    %v2259 = vmul.f32 %v2256, %v2188
    %v2260 = vmul.f32 %v2256, %v2201
    %v2261 = vmul.f32 %v2256, %v2214
    %v2262 = vmul.f32 %v2256, %v2227
    %v2263 = vmul.f32 %v2256, %v2240
    %v2264 = vmul.f32 %v2256, %v2253
    %v2265 = vmul.f32 %v2257, 0.33333334
    %v2266 = vmul.f32 %v2258, 0.33333334
    %v2267 = vmul.f32 %v2259, 0.33333334
    %v2268 = vmul.f32 %v2260, 0.33333334
    %v2269 = vmul.f32 %v2261, 0.33333334
    %v2270 = vmul.f32 %v2262, 0.33333334
    %v2271 = vmul.f32 %v2263, 0.33333334
    %v2272 = vmul.f32 %v2264, 0.33333334
    %v2273 = vadd.f32 %v2027, %v2265
    %v2274 = vadd.f32 %v2028, %v2266
    %v2275 = vadd.f32 %v2029, %v2267
    %v2276 = vadd.f32 %v2030, %v2268
    %v2277 = vadd.f32 %v2031, %v2269
    %v2278 = vadd.f32 %v2032, %v2270
    %v2279 = vadd.f32 %v2033, %v2271
    %v2280 = vadd.f32 %v2034, %v2272
    %v2281 = vpack.c.bf16 %v2273, %v2273
    %v2282 = vpack.c.bf16 %v2274, %v2274
    %v2283 = vpack.c.bf16 %v2275, %v2275
    %v2284 = vpack.c.bf16 %v2276, %v2276
    %v2285 = vpack.c.bf16 %v2277, %v2277
    %v2286 = vpack.c.bf16 %v2278, %v2278
    %v2287 = vpack.c.bf16 %v2279, %v2279
    %v2288 = vpack.c.bf16 %v2280, %v2280
    %2289 = vmatpush.bf16.msra.mxu0 %v566
    %2290 = vmatpush.bf16.msra.mxu0 %v565
    %2291 = vmatpush.bf16.msra.mxu0 %v564
    %2292 = vmatpush.bf16.msra.mxu0 %v563
    %2293 = vmatpush.bf16.msra.mxu0 %v562
    %2294 = vmatpush.bf16.msra.mxu0 %v561
    %2295 = vmatpush.bf16.msra.mxu0 %v560
    %2296 = vmatpush.bf16.msra.mxu0 %v559
    %2297 = vmatmul.bf16.gmra.mxu0 %v2281
    %v2298 = vpop.f32.mrf.mxu0
    %v2299 = vadd.f32 %v301, %v2298
    %v2300 = vpop.f32.mrf.mxu0
    %2301 = vdwg.mxu0
    %2302 = vmatpush.bf16.msra.mxu0 %v574
    %2303 = vmatpush.bf16.msra.mxu0 %v573
    %2304 = vmatpush.bf16.msra.mxu0 %v572
    %2305 = vmatpush.bf16.msra.mxu0 %v571
    %2306 = vmatpush.bf16.msra.mxu0 %v570
    %2307 = vmatpush.bf16.msra.mxu0 %v569
    %2308 = vmatpush.bf16.msra.mxu0 %v568
    %2309 = vmatpush.bf16.msra.mxu0 %v567
    %2310 = vmatmul.bf16.gmra.mxu0 %v2282
    %v2311 = vpop.f32.mrf.mxu0
    %v2312 = vadd.f32 %v2299, %v2311
    %v2313 = vpop.f32.mrf.mxu0
    %2314 = vdwg.mxu0
    %2315 = vmatpush.bf16.msra.mxu0 %v582
    %2316 = vmatpush.bf16.msra.mxu0 %v581
    %2317 = vmatpush.bf16.msra.mxu0 %v580
    %2318 = vmatpush.bf16.msra.mxu0 %v579
    %2319 = vmatpush.bf16.msra.mxu0 %v578
    %2320 = vmatpush.bf16.msra.mxu0 %v577
    %2321 = vmatpush.bf16.msra.mxu0 %v576
    %2322 = vmatpush.bf16.msra.mxu0 %v575
    %2323 = vmatmul.bf16.gmra.mxu0 %v2283
    %v2324 = vpop.f32.mrf.mxu0
    %v2325 = vadd.f32 %v2312, %v2324
    %v2326 = vpop.f32.mrf.mxu0
    %2327 = vdwg.mxu0
    %2328 = vmatpush.bf16.msra.mxu0 %v590
    %2329 = vmatpush.bf16.msra.mxu0 %v589
    %2330 = vmatpush.bf16.msra.mxu0 %v588
    %2331 = vmatpush.bf16.msra.mxu0 %v587
    %2332 = vmatpush.bf16.msra.mxu0 %v586
    %2333 = vmatpush.bf16.msra.mxu0 %v585
    %2334 = vmatpush.bf16.msra.mxu0 %v584
    %2335 = vmatpush.bf16.msra.mxu0 %v583
    %2336 = vmatmul.bf16.gmra.mxu0 %v2284
    %v2337 = vpop.f32.mrf.mxu0
    %v2338 = vadd.f32 %v2325, %v2337
    %v2339 = vpop.f32.mrf.mxu0
    %2340 = vdwg.mxu0
    %2341 = vmatpush.bf16.msra.mxu0 %v598
    %2342 = vmatpush.bf16.msra.mxu0 %v597
    %2343 = vmatpush.bf16.msra.mxu0 %v596
    %2344 = vmatpush.bf16.msra.mxu0 %v595
    %2345 = vmatpush.bf16.msra.mxu0 %v594
    %2346 = vmatpush.bf16.msra.mxu0 %v593
    %2347 = vmatpush.bf16.msra.mxu0 %v592
    %2348 = vmatpush.bf16.msra.mxu0 %v591
    %2349 = vmatmul.bf16.gmra.mxu0 %v2285
    %v2350 = vpop.f32.mrf.mxu0
    %v2351 = vadd.f32 %v2338, %v2350
    %v2352 = vpop.f32.mrf.mxu0
    %2353 = vdwg.mxu0
    %2354 = vmatpush.bf16.msra.mxu0 %v606
    %2355 = vmatpush.bf16.msra.mxu0 %v605
    %2356 = vmatpush.bf16.msra.mxu0 %v604
    %2357 = vmatpush.bf16.msra.mxu0 %v603
    %2358 = vmatpush.bf16.msra.mxu0 %v602
    %2359 = vmatpush.bf16.msra.mxu0 %v601
    %2360 = vmatpush.bf16.msra.mxu0 %v600
    %2361 = vmatpush.bf16.msra.mxu0 %v599
    %2362 = vmatmul.bf16.gmra.mxu0 %v2286
    %v2363 = vpop.f32.mrf.mxu0
    %v2364 = vadd.f32 %v2351, %v2363
    %v2365 = vpop.f32.mrf.mxu0
    %2366 = vdwg.mxu0
    %2367 = vmatpush.bf16.msra.mxu0 %v614
    %2368 = vmatpush.bf16.msra.mxu0 %v613
    %2369 = vmatpush.bf16.msra.mxu0 %v612
    %2370 = vmatpush.bf16.msra.mxu0 %v611
    %2371 = vmatpush.bf16.msra.mxu0 %v610
    %2372 = vmatpush.bf16.msra.mxu0 %v609
    %2373 = vmatpush.bf16.msra.mxu0 %v608
    %2374 = vmatpush.bf16.msra.mxu0 %v607
    %2375 = vmatmul.bf16.gmra.mxu0 %v2287
    %v2376 = vpop.f32.mrf.mxu0
    %v2377 = vadd.f32 %v2364, %v2376
    %v2378 = vpop.f32.mrf.mxu0
    %2379 = vdwg.mxu0
    %2380 = vmatpush.bf16.msra.mxu0 %v622
    %2381 = vmatpush.bf16.msra.mxu0 %v621
    %2382 = vmatpush.bf16.msra.mxu0 %v620
    %2383 = vmatpush.bf16.msra.mxu0 %v619
    %2384 = vmatpush.bf16.msra.mxu0 %v618
    %2385 = vmatpush.bf16.msra.mxu0 %v617
    %2386 = vmatpush.bf16.msra.mxu0 %v616
    %2387 = vmatpush.bf16.msra.mxu0 %v615
    %2388 = vmatmul.bf16.gmra.mxu0 %v2288
    %v2389 = vpop.f32.mrf.mxu0
    %v2390 = vadd.f32 %v2377, %v2389
    %v2391 = vpop.f32.mrf.mxu0
    %2392 = vdwg.mxu0
    %v2393 = vpack.c.bf16 %v2390, %v2390
    %v2394 = vunpack.c.l.bf16 %v2393
    %v2395 = vtanh.pop %v2394
    %v2396 = vpack.c.bf16 %v2395, %v2395
    %2397 = vmatpush.bf16.msra.mxu0 %v1060
    %2398 = vmatpush.bf16.msra.mxu0 %v1052
    %2399 = vmatpush.bf16.msra.mxu0 %v1044
    %2400 = vmatpush.bf16.msra.mxu0 %v1036
    %2401 = vmatpush.bf16.msra.mxu0 %v1028
    %2402 = vmatpush.bf16.msra.mxu0 %v1020
    %2403 = vmatpush.bf16.msra.mxu0 %v1012
    %2404 = vmatpush.bf16.msra.mxu0 %v1004
    %2405 = vmatmul.bf16.gmra.mxu0 %v2396
    %v2406 = vpop.f32.mrf.mxu0
    %v2407 = vadd.f32 %v796, %v2406
    %v2408 = vpop.f32.mrf.mxu0
    %2409 = vdwg.mxu0
    %2410 = vmatpush.bf16.msra.mxu0 %v1061
    %2411 = vmatpush.bf16.msra.mxu0 %v1053
    %2412 = vmatpush.bf16.msra.mxu0 %v1045
    %2413 = vmatpush.bf16.msra.mxu0 %v1037
    %2414 = vmatpush.bf16.msra.mxu0 %v1029
    %2415 = vmatpush.bf16.msra.mxu0 %v1021
    %2416 = vmatpush.bf16.msra.mxu0 %v1013
    %2417 = vmatpush.bf16.msra.mxu0 %v1005
    %2418 = vmatmul.bf16.gmra.mxu0 %v2396
    %v2419 = vpop.f32.mrf.mxu0
    %v2420 = vadd.f32 %v797, %v2419
    %v2421 = vpop.f32.mrf.mxu0
    %2422 = vdwg.mxu0
    %2423 = vmatpush.bf16.msra.mxu0 %v1062
    %2424 = vmatpush.bf16.msra.mxu0 %v1054
    %2425 = vmatpush.bf16.msra.mxu0 %v1046
    %2426 = vmatpush.bf16.msra.mxu0 %v1038
    %2427 = vmatpush.bf16.msra.mxu0 %v1030
    %2428 = vmatpush.bf16.msra.mxu0 %v1022
    %2429 = vmatpush.bf16.msra.mxu0 %v1014
    %2430 = vmatpush.bf16.msra.mxu0 %v1006
    %2431 = vmatmul.bf16.gmra.mxu0 %v2396
    %v2432 = vpop.f32.mrf.mxu0
    %v2433 = vadd.f32 %v798, %v2432
    %v2434 = vpop.f32.mrf.mxu0
    %2435 = vdwg.mxu0
    %2436 = vmatpush.bf16.msra.mxu0 %v1063
    %2437 = vmatpush.bf16.msra.mxu0 %v1055
    %2438 = vmatpush.bf16.msra.mxu0 %v1047
    %2439 = vmatpush.bf16.msra.mxu0 %v1039
    %2440 = vmatpush.bf16.msra.mxu0 %v1031
    %2441 = vmatpush.bf16.msra.mxu0 %v1023
    %2442 = vmatpush.bf16.msra.mxu0 %v1015
    %2443 = vmatpush.bf16.msra.mxu0 %v1007
    %2444 = vmatmul.bf16.gmra.mxu0 %v2396
    %v2445 = vpop.f32.mrf.mxu0
    %v2446 = vadd.f32 %v799, %v2445
    %v2447 = vpop.f32.mrf.mxu0
    %2448 = vdwg.mxu0
    %2449 = vmatpush.bf16.msra.mxu0 %v1064
    %2450 = vmatpush.bf16.msra.mxu0 %v1056
    %2451 = vmatpush.bf16.msra.mxu0 %v1048
    %2452 = vmatpush.bf16.msra.mxu0 %v1040
    %2453 = vmatpush.bf16.msra.mxu0 %v1032
    %2454 = vmatpush.bf16.msra.mxu0 %v1024
    %2455 = vmatpush.bf16.msra.mxu0 %v1016
    %2456 = vmatpush.bf16.msra.mxu0 %v1008
    %2457 = vmatmul.bf16.gmra.mxu0 %v2396
    %v2458 = vpop.f32.mrf.mxu0
    %v2459 = vadd.f32 %v800, %v2458
    %v2460 = vpop.f32.mrf.mxu0
    %2461 = vdwg.mxu0
    %2462 = vmatpush.bf16.msra.mxu0 %v1065
    %2463 = vmatpush.bf16.msra.mxu0 %v1057
    %2464 = vmatpush.bf16.msra.mxu0 %v1049
    %2465 = vmatpush.bf16.msra.mxu0 %v1041
    %2466 = vmatpush.bf16.msra.mxu0 %v1033
    %2467 = vmatpush.bf16.msra.mxu0 %v1025
    %2468 = vmatpush.bf16.msra.mxu0 %v1017
    %2469 = vmatpush.bf16.msra.mxu0 %v1009
    %2470 = vmatmul.bf16.gmra.mxu0 %v2396
    %v2471 = vpop.f32.mrf.mxu0
    %v2472 = vadd.f32 %v801, %v2471
    %v2473 = vpop.f32.mrf.mxu0
    %2474 = vdwg.mxu0
    %2475 = vmatpush.bf16.msra.mxu0 %v1066
    %2476 = vmatpush.bf16.msra.mxu0 %v1058
    %2477 = vmatpush.bf16.msra.mxu0 %v1050
    %2478 = vmatpush.bf16.msra.mxu0 %v1042
    %2479 = vmatpush.bf16.msra.mxu0 %v1034
    %2480 = vmatpush.bf16.msra.mxu0 %v1026
    %2481 = vmatpush.bf16.msra.mxu0 %v1018
    %2482 = vmatpush.bf16.msra.mxu0 %v1010
    %2483 = vmatmul.bf16.gmra.mxu0 %v2396
    %v2484 = vpop.f32.mrf.mxu0
    %v2485 = vadd.f32 %v802, %v2484
    %v2486 = vpop.f32.mrf.mxu0
    %2487 = vdwg.mxu0
    %2488 = vmatpush.bf16.msra.mxu0 %v1067
    %2489 = vmatpush.bf16.msra.mxu0 %v1059
    %2490 = vmatpush.bf16.msra.mxu0 %v1051
    %2491 = vmatpush.bf16.msra.mxu0 %v1043
    %2492 = vmatpush.bf16.msra.mxu0 %v1035
    %2493 = vmatpush.bf16.msra.mxu0 %v1027
    %2494 = vmatpush.bf16.msra.mxu0 %v1019
    %2495 = vmatpush.bf16.msra.mxu0 %v1011
    %2496 = vmatmul.bf16.gmra.mxu0 %v2396
    %v2497 = vpop.f32.mrf.mxu0
    %v2498 = vadd.f32 %v803, %v2497
    %v2499 = vpop.f32.mrf.mxu0
    %2500 = vdwg.mxu0
    %v2501 = vmul.f32 %v2162, 0.33333334
    %v2502 = vmul.f32 %v2175, 0.33333334
    %v2503 = vmul.f32 %v2188, 0.33333334
    %v2504 = vmul.f32 %v2201, 0.33333334
    %v2505 = vmul.f32 %v2214, 0.33333334
    %v2506 = vmul.f32 %v2227, 0.33333334
    %v2507 = vmul.f32 %v2240, 0.33333334
    %v2508 = vmul.f32 %v2253, 0.33333334
    %v2509 = vsub.f32 %v2407, %v2501
    %v2510 = vsub.f32 %v2420, %v2502
    %v2511 = vsub.f32 %v2433, %v2503
    %v2512 = vsub.f32 %v2446, %v2504
    %v2513 = vsub.f32 %v2459, %v2505
    %v2514 = vsub.f32 %v2472, %v2506
    %v2515 = vsub.f32 %v2485, %v2507
    %v2516 = vsub.f32 %v2498, %v2508
    %v2517 = vmul.f32 %v2256, %v2509
    %v2518 = vmul.f32 %v2256, %v2510
    %v2519 = vmul.f32 %v2256, %v2511
    %v2520 = vmul.f32 %v2256, %v2512
    %v2521 = vmul.f32 %v2256, %v2513
    %v2522 = vmul.f32 %v2256, %v2514
    %v2523 = vmul.f32 %v2256, %v2515
    %v2524 = vmul.f32 %v2256, %v2516
    %v2525 = vadd.f32 %v2027, %v2517
    %v2526 = vadd.f32 %v2028, %v2518
    %v2527 = vadd.f32 %v2029, %v2519
    %v2528 = vadd.f32 %v2030, %v2520
    %v2529 = vadd.f32 %v2031, %v2521
    %v2530 = vadd.f32 %v2032, %v2522
    %v2531 = vadd.f32 %v2033, %v2523
    %v2532 = vadd.f32 %v2034, %v2524
    %v2533 = vpack.c.bf16 %v2525, %v2525
    %v2534 = vpack.c.bf16 %v2526, %v2526
    %v2535 = vpack.c.bf16 %v2527, %v2527
    %v2536 = vpack.c.bf16 %v2528, %v2528
    %v2537 = vpack.c.bf16 %v2529, %v2529
    %v2538 = vpack.c.bf16 %v2530, %v2530
    %v2539 = vpack.c.bf16 %v2531, %v2531
    %v2540 = vpack.c.bf16 %v2532, %v2532
    %2541 = vmatpush.bf16.msra.mxu0 %v566
    %2542 = vmatpush.bf16.msra.mxu0 %v565
    %2543 = vmatpush.bf16.msra.mxu0 %v564
    %2544 = vmatpush.bf16.msra.mxu0 %v563
    %2545 = vmatpush.bf16.msra.mxu0 %v562
    %2546 = vmatpush.bf16.msra.mxu0 %v561
    %2547 = vmatpush.bf16.msra.mxu0 %v560
    %2548 = vmatpush.bf16.msra.mxu0 %v559
    %2549 = vmatmul.bf16.gmra.mxu0 %v2533
    %v2550 = vpop.f32.mrf.mxu0
    %v2551 = vadd.f32 %v301, %v2550
    %v2552 = vpop.f32.mrf.mxu0
    %2553 = vdwg.mxu0
    %2554 = vmatpush.bf16.msra.mxu0 %v574
    %2555 = vmatpush.bf16.msra.mxu0 %v573
    %2556 = vmatpush.bf16.msra.mxu0 %v572
    %2557 = vmatpush.bf16.msra.mxu0 %v571
    %2558 = vmatpush.bf16.msra.mxu0 %v570
    %2559 = vmatpush.bf16.msra.mxu0 %v569
    %2560 = vmatpush.bf16.msra.mxu0 %v568
    %2561 = vmatpush.bf16.msra.mxu0 %v567
    %2562 = vmatmul.bf16.gmra.mxu0 %v2534
    %v2563 = vpop.f32.mrf.mxu0
    %v2564 = vadd.f32 %v2551, %v2563
    %v2565 = vpop.f32.mrf.mxu0
    %2566 = vdwg.mxu0
    %2567 = vmatpush.bf16.msra.mxu0 %v582
    %2568 = vmatpush.bf16.msra.mxu0 %v581
    %2569 = vmatpush.bf16.msra.mxu0 %v580
    %2570 = vmatpush.bf16.msra.mxu0 %v579
    %2571 = vmatpush.bf16.msra.mxu0 %v578
    %2572 = vmatpush.bf16.msra.mxu0 %v577
    %2573 = vmatpush.bf16.msra.mxu0 %v576
    %2574 = vmatpush.bf16.msra.mxu0 %v575
    %2575 = vmatmul.bf16.gmra.mxu0 %v2535
    %v2576 = vpop.f32.mrf.mxu0
    %v2577 = vadd.f32 %v2564, %v2576
    %v2578 = vpop.f32.mrf.mxu0
    %2579 = vdwg.mxu0
    %2580 = vmatpush.bf16.msra.mxu0 %v590
    %2581 = vmatpush.bf16.msra.mxu0 %v589
    %2582 = vmatpush.bf16.msra.mxu0 %v588
    %2583 = vmatpush.bf16.msra.mxu0 %v587
    %2584 = vmatpush.bf16.msra.mxu0 %v586
    %2585 = vmatpush.bf16.msra.mxu0 %v585
    %2586 = vmatpush.bf16.msra.mxu0 %v584
    %2587 = vmatpush.bf16.msra.mxu0 %v583
    %2588 = vmatmul.bf16.gmra.mxu0 %v2536
    %v2589 = vpop.f32.mrf.mxu0
    %v2590 = vadd.f32 %v2577, %v2589
    %v2591 = vpop.f32.mrf.mxu0
    %2592 = vdwg.mxu0
    %2593 = vmatpush.bf16.msra.mxu0 %v598
    %2594 = vmatpush.bf16.msra.mxu0 %v597
    %2595 = vmatpush.bf16.msra.mxu0 %v596
    %2596 = vmatpush.bf16.msra.mxu0 %v595
    %2597 = vmatpush.bf16.msra.mxu0 %v594
    %2598 = vmatpush.bf16.msra.mxu0 %v593
    %2599 = vmatpush.bf16.msra.mxu0 %v592
    %2600 = vmatpush.bf16.msra.mxu0 %v591
    %2601 = vmatmul.bf16.gmra.mxu0 %v2537
    %v2602 = vpop.f32.mrf.mxu0
    %v2603 = vadd.f32 %v2590, %v2602
    %v2604 = vpop.f32.mrf.mxu0
    %2605 = vdwg.mxu0
    %2606 = vmatpush.bf16.msra.mxu0 %v606
    %2607 = vmatpush.bf16.msra.mxu0 %v605
    %2608 = vmatpush.bf16.msra.mxu0 %v604
    %2609 = vmatpush.bf16.msra.mxu0 %v603
    %2610 = vmatpush.bf16.msra.mxu0 %v602
    %2611 = vmatpush.bf16.msra.mxu0 %v601
    %2612 = vmatpush.bf16.msra.mxu0 %v600
    %2613 = vmatpush.bf16.msra.mxu0 %v599
    %2614 = vmatmul.bf16.gmra.mxu0 %v2538
    %v2615 = vpop.f32.mrf.mxu0
    %v2616 = vadd.f32 %v2603, %v2615
    %v2617 = vpop.f32.mrf.mxu0
    %2618 = vdwg.mxu0
    %2619 = vmatpush.bf16.msra.mxu0 %v614
    %2620 = vmatpush.bf16.msra.mxu0 %v613
    %2621 = vmatpush.bf16.msra.mxu0 %v612
    %2622 = vmatpush.bf16.msra.mxu0 %v611
    %2623 = vmatpush.bf16.msra.mxu0 %v610
    %2624 = vmatpush.bf16.msra.mxu0 %v609
    %2625 = vmatpush.bf16.msra.mxu0 %v608
    %2626 = vmatpush.bf16.msra.mxu0 %v607
    %2627 = vmatmul.bf16.gmra.mxu0 %v2539
    %v2628 = vpop.f32.mrf.mxu0
    %v2629 = vadd.f32 %v2616, %v2628
    %v2630 = vpop.f32.mrf.mxu0
    %2631 = vdwg.mxu0
    %2632 = vmatpush.bf16.msra.mxu0 %v622
    %2633 = vmatpush.bf16.msra.mxu0 %v621
    %2634 = vmatpush.bf16.msra.mxu0 %v620
    %2635 = vmatpush.bf16.msra.mxu0 %v619
    %2636 = vmatpush.bf16.msra.mxu0 %v618
    %2637 = vmatpush.bf16.msra.mxu0 %v617
    %2638 = vmatpush.bf16.msra.mxu0 %v616
    %2639 = vmatpush.bf16.msra.mxu0 %v615
    %2640 = vmatmul.bf16.gmra.mxu0 %v2540
    %v2641 = vpop.f32.mrf.mxu0
    %v2642 = vadd.f32 %v2629, %v2641
    %v2643 = vpop.f32.mrf.mxu0
    %2644 = vdwg.mxu0
    %v2645 = vpack.c.bf16 %v2642, %v2642
    %v2646 = vunpack.c.l.bf16 %v2645
    %v2647 = vtanh.pop %v2646
    %v2648 = vpack.c.bf16 %v2647, %v2647
    %2649 = vmatpush.bf16.msra.mxu0 %v1060
    %2650 = vmatpush.bf16.msra.mxu0 %v1052
    %2651 = vmatpush.bf16.msra.mxu0 %v1044
    %2652 = vmatpush.bf16.msra.mxu0 %v1036
    %2653 = vmatpush.bf16.msra.mxu0 %v1028
    %2654 = vmatpush.bf16.msra.mxu0 %v1020
    %2655 = vmatpush.bf16.msra.mxu0 %v1012
    %2656 = vmatpush.bf16.msra.mxu0 %v1004
    %2657 = vmatmul.bf16.gmra.mxu0 %v2648
    %v2658 = vpop.f32.mrf.mxu0
    %v2659 = vadd.f32 %v796, %v2658
    %v2660 = vpop.f32.mrf.mxu0
    %2661 = vdwg.mxu0
    %2662 = vmatpush.bf16.msra.mxu0 %v1061
    %2663 = vmatpush.bf16.msra.mxu0 %v1053
    %2664 = vmatpush.bf16.msra.mxu0 %v1045
    %2665 = vmatpush.bf16.msra.mxu0 %v1037
    %2666 = vmatpush.bf16.msra.mxu0 %v1029
    %2667 = vmatpush.bf16.msra.mxu0 %v1021
    %2668 = vmatpush.bf16.msra.mxu0 %v1013
    %2669 = vmatpush.bf16.msra.mxu0 %v1005
    %2670 = vmatmul.bf16.gmra.mxu0 %v2648
    %v2671 = vpop.f32.mrf.mxu0
    %v2672 = vadd.f32 %v797, %v2671
    %v2673 = vpop.f32.mrf.mxu0
    %2674 = vdwg.mxu0
    %2675 = vmatpush.bf16.msra.mxu0 %v1062
    %2676 = vmatpush.bf16.msra.mxu0 %v1054
    %2677 = vmatpush.bf16.msra.mxu0 %v1046
    %2678 = vmatpush.bf16.msra.mxu0 %v1038
    %2679 = vmatpush.bf16.msra.mxu0 %v1030
    %2680 = vmatpush.bf16.msra.mxu0 %v1022
    %2681 = vmatpush.bf16.msra.mxu0 %v1014
    %2682 = vmatpush.bf16.msra.mxu0 %v1006
    %2683 = vmatmul.bf16.gmra.mxu0 %v2648
    %v2684 = vpop.f32.mrf.mxu0
    %v2685 = vadd.f32 %v798, %v2684
    %v2686 = vpop.f32.mrf.mxu0
    %2687 = vdwg.mxu0
    %2688 = vmatpush.bf16.msra.mxu0 %v1063
    %2689 = vmatpush.bf16.msra.mxu0 %v1055
    %2690 = vmatpush.bf16.msra.mxu0 %v1047
    %2691 = vmatpush.bf16.msra.mxu0 %v1039
    %2692 = vmatpush.bf16.msra.mxu0 %v1031
    %2693 = vmatpush.bf16.msra.mxu0 %v1023
    %2694 = vmatpush.bf16.msra.mxu0 %v1015
    %2695 = vmatpush.bf16.msra.mxu0 %v1007
    %2696 = vmatmul.bf16.gmra.mxu0 %v2648
    %v2697 = vpop.f32.mrf.mxu0
    %v2698 = vadd.f32 %v799, %v2697
    %v2699 = vpop.f32.mrf.mxu0
    %2700 = vdwg.mxu0
    %2701 = vmatpush.bf16.msra.mxu0 %v1064
    %2702 = vmatpush.bf16.msra.mxu0 %v1056
    %2703 = vmatpush.bf16.msra.mxu0 %v1048
    %2704 = vmatpush.bf16.msra.mxu0 %v1040
    %2705 = vmatpush.bf16.msra.mxu0 %v1032
    %2706 = vmatpush.bf16.msra.mxu0 %v1024
    %2707 = vmatpush.bf16.msra.mxu0 %v1016
    %2708 = vmatpush.bf16.msra.mxu0 %v1008
    %2709 = vmatmul.bf16.gmra.mxu0 %v2648
    %v2710 = vpop.f32.mrf.mxu0
    %v2711 = vadd.f32 %v800, %v2710
    %v2712 = vpop.f32.mrf.mxu0
    %2713 = vdwg.mxu0
    %2714 = vmatpush.bf16.msra.mxu0 %v1065
    %2715 = vmatpush.bf16.msra.mxu0 %v1057
    %2716 = vmatpush.bf16.msra.mxu0 %v1049
    %2717 = vmatpush.bf16.msra.mxu0 %v1041
    %2718 = vmatpush.bf16.msra.mxu0 %v1033
    %2719 = vmatpush.bf16.msra.mxu0 %v1025
    %2720 = vmatpush.bf16.msra.mxu0 %v1017
    %2721 = vmatpush.bf16.msra.mxu0 %v1009
    %2722 = vmatmul.bf16.gmra.mxu0 %v2648
    %v2723 = vpop.f32.mrf.mxu0
    %v2724 = vadd.f32 %v801, %v2723
    %v2725 = vpop.f32.mrf.mxu0
    %2726 = vdwg.mxu0
    %2727 = vmatpush.bf16.msra.mxu0 %v1066
    %2728 = vmatpush.bf16.msra.mxu0 %v1058
    %2729 = vmatpush.bf16.msra.mxu0 %v1050
    %2730 = vmatpush.bf16.msra.mxu0 %v1042
    %2731 = vmatpush.bf16.msra.mxu0 %v1034
    %2732 = vmatpush.bf16.msra.mxu0 %v1026
    %2733 = vmatpush.bf16.msra.mxu0 %v1018
    %2734 = vmatpush.bf16.msra.mxu0 %v1010
    %2735 = vmatmul.bf16.gmra.mxu0 %v2648
    %v2736 = vpop.f32.mrf.mxu0
    %v2737 = vadd.f32 %v802, %v2736
    %v2738 = vpop.f32.mrf.mxu0
    %2739 = vdwg.mxu0
    %2740 = vmatpush.bf16.msra.mxu0 %v1067
    %2741 = vmatpush.bf16.msra.mxu0 %v1059
    %2742 = vmatpush.bf16.msra.mxu0 %v1051
    %2743 = vmatpush.bf16.msra.mxu0 %v1043
    %2744 = vmatpush.bf16.msra.mxu0 %v1035
    %2745 = vmatpush.bf16.msra.mxu0 %v1027
    %2746 = vmatpush.bf16.msra.mxu0 %v1019
    %2747 = vmatpush.bf16.msra.mxu0 %v1011
    %2748 = vmatmul.bf16.gmra.mxu0 %v2648
    %v2749 = vpop.f32.mrf.mxu0
    %v2750 = vadd.f32 %v803, %v2749
    %v2751 = vpop.f32.mrf.mxu0
    %2752 = vdwg.mxu0
    %v2753 = vsub.f32 %v2162, %v2407
    %v2754 = vsub.f32 %v2175, %v2420
    %v2755 = vsub.f32 %v2188, %v2433
    %v2756 = vsub.f32 %v2201, %v2446
    %v2757 = vsub.f32 %v2214, %v2459
    %v2758 = vsub.f32 %v2227, %v2472
    %v2759 = vsub.f32 %v2240, %v2485
    %v2760 = vsub.f32 %v2253, %v2498
    %v2761 = vadd.f32 %v2753, %v2659
    %v2762 = vadd.f32 %v2754, %v2672
    %v2763 = vadd.f32 %v2755, %v2685
    %v2764 = vadd.f32 %v2756, %v2698
    %v2765 = vadd.f32 %v2757, %v2711
    %v2766 = vadd.f32 %v2758, %v2724
    %v2767 = vadd.f32 %v2759, %v2737
    %v2768 = vadd.f32 %v2760, %v2750
    %v2769 = vmul.f32 %v2256, %v2761
    %v2770 = vmul.f32 %v2256, %v2762
    %v2771 = vmul.f32 %v2256, %v2763
    %v2772 = vmul.f32 %v2256, %v2764
    %v2773 = vmul.f32 %v2256, %v2765
    %v2774 = vmul.f32 %v2256, %v2766
    %v2775 = vmul.f32 %v2256, %v2767
    %v2776 = vmul.f32 %v2256, %v2768
    %v2777 = vadd.f32 %v2027, %v2769
    %v2778 = vadd.f32 %v2028, %v2770
    %v2779 = vadd.f32 %v2029, %v2771
    %v2780 = vadd.f32 %v2030, %v2772
    %v2781 = vadd.f32 %v2031, %v2773
    %v2782 = vadd.f32 %v2032, %v2774
    %v2783 = vadd.f32 %v2033, %v2775
    %v2784 = vadd.f32 %v2034, %v2776
    %v2785 = vpack.c.bf16 %v2777, %v2777
    %v2786 = vpack.c.bf16 %v2778, %v2778
    %v2787 = vpack.c.bf16 %v2779, %v2779
    %v2788 = vpack.c.bf16 %v2780, %v2780
    %v2789 = vpack.c.bf16 %v2781, %v2781
    %v2790 = vpack.c.bf16 %v2782, %v2782
    %v2791 = vpack.c.bf16 %v2783, %v2783
    %v2792 = vpack.c.bf16 %v2784, %v2784
    %2793 = vmatpush.bf16.msra.mxu0 %v566
    %2794 = vmatpush.bf16.msra.mxu0 %v565
    %2795 = vmatpush.bf16.msra.mxu0 %v564
    %2796 = vmatpush.bf16.msra.mxu0 %v563
    %2797 = vmatpush.bf16.msra.mxu0 %v562
    %2798 = vmatpush.bf16.msra.mxu0 %v561
    %2799 = vmatpush.bf16.msra.mxu0 %v560
    %2800 = vmatpush.bf16.msra.mxu0 %v559
    %2801 = vmatmul.bf16.gmra.mxu0 %v2785
    %v2802 = vpop.f32.mrf.mxu0
    %v2803 = vadd.f32 %v301, %v2802
    %v2804 = vpop.f32.mrf.mxu0
    %2805 = vdwg.mxu0
    %2806 = vmatpush.bf16.msra.mxu0 %v574
    %2807 = vmatpush.bf16.msra.mxu0 %v573
    %2808 = vmatpush.bf16.msra.mxu0 %v572
    %2809 = vmatpush.bf16.msra.mxu0 %v571
    %2810 = vmatpush.bf16.msra.mxu0 %v570
    %2811 = vmatpush.bf16.msra.mxu0 %v569
    %2812 = vmatpush.bf16.msra.mxu0 %v568
    %2813 = vmatpush.bf16.msra.mxu0 %v567
    %2814 = vmatmul.bf16.gmra.mxu0 %v2786
    %v2815 = vpop.f32.mrf.mxu0
    %v2816 = vadd.f32 %v2803, %v2815
    %v2817 = vpop.f32.mrf.mxu0
    %2818 = vdwg.mxu0
    %2819 = vmatpush.bf16.msra.mxu0 %v582
    %2820 = vmatpush.bf16.msra.mxu0 %v581
    %2821 = vmatpush.bf16.msra.mxu0 %v580
    %2822 = vmatpush.bf16.msra.mxu0 %v579
    %2823 = vmatpush.bf16.msra.mxu0 %v578
    %2824 = vmatpush.bf16.msra.mxu0 %v577
    %2825 = vmatpush.bf16.msra.mxu0 %v576
    %2826 = vmatpush.bf16.msra.mxu0 %v575
    %2827 = vmatmul.bf16.gmra.mxu0 %v2787
    %v2828 = vpop.f32.mrf.mxu0
    %v2829 = vadd.f32 %v2816, %v2828
    %v2830 = vpop.f32.mrf.mxu0
    %2831 = vdwg.mxu0
    %2832 = vmatpush.bf16.msra.mxu0 %v590
    %2833 = vmatpush.bf16.msra.mxu0 %v589
    %2834 = vmatpush.bf16.msra.mxu0 %v588
    %2835 = vmatpush.bf16.msra.mxu0 %v587
    %2836 = vmatpush.bf16.msra.mxu0 %v586
    %2837 = vmatpush.bf16.msra.mxu0 %v585
    %2838 = vmatpush.bf16.msra.mxu0 %v584
    %2839 = vmatpush.bf16.msra.mxu0 %v583
    %2840 = vmatmul.bf16.gmra.mxu0 %v2788
    %v2841 = vpop.f32.mrf.mxu0
    %v2842 = vadd.f32 %v2829, %v2841
    %v2843 = vpop.f32.mrf.mxu0
    %2844 = vdwg.mxu0
    %2845 = vmatpush.bf16.msra.mxu0 %v598
    %2846 = vmatpush.bf16.msra.mxu0 %v597
    %2847 = vmatpush.bf16.msra.mxu0 %v596
    %2848 = vmatpush.bf16.msra.mxu0 %v595
    %2849 = vmatpush.bf16.msra.mxu0 %v594
    %2850 = vmatpush.bf16.msra.mxu0 %v593
    %2851 = vmatpush.bf16.msra.mxu0 %v592
    %2852 = vmatpush.bf16.msra.mxu0 %v591
    %2853 = vmatmul.bf16.gmra.mxu0 %v2789
    %v2854 = vpop.f32.mrf.mxu0
    %v2855 = vadd.f32 %v2842, %v2854
    %v2856 = vpop.f32.mrf.mxu0
    %2857 = vdwg.mxu0
    %2858 = vmatpush.bf16.msra.mxu0 %v606
    %2859 = vmatpush.bf16.msra.mxu0 %v605
    %2860 = vmatpush.bf16.msra.mxu0 %v604
    %2861 = vmatpush.bf16.msra.mxu0 %v603
    %2862 = vmatpush.bf16.msra.mxu0 %v602
    %2863 = vmatpush.bf16.msra.mxu0 %v601
    %2864 = vmatpush.bf16.msra.mxu0 %v600
    %2865 = vmatpush.bf16.msra.mxu0 %v599
    %2866 = vmatmul.bf16.gmra.mxu0 %v2790
    %v2867 = vpop.f32.mrf.mxu0
    %v2868 = vadd.f32 %v2855, %v2867
    %v2869 = vpop.f32.mrf.mxu0
    %2870 = vdwg.mxu0
    %2871 = vmatpush.bf16.msra.mxu0 %v614
    %2872 = vmatpush.bf16.msra.mxu0 %v613
    %2873 = vmatpush.bf16.msra.mxu0 %v612
    %2874 = vmatpush.bf16.msra.mxu0 %v611
    %2875 = vmatpush.bf16.msra.mxu0 %v610
    %2876 = vmatpush.bf16.msra.mxu0 %v609
    %2877 = vmatpush.bf16.msra.mxu0 %v608
    %2878 = vmatpush.bf16.msra.mxu0 %v607
    %2879 = vmatmul.bf16.gmra.mxu0 %v2791
    %v2880 = vpop.f32.mrf.mxu0
    %v2881 = vadd.f32 %v2868, %v2880
    %v2882 = vpop.f32.mrf.mxu0
    %2883 = vdwg.mxu0
    %2884 = vmatpush.bf16.msra.mxu0 %v622
    %2885 = vmatpush.bf16.msra.mxu0 %v621
    %2886 = vmatpush.bf16.msra.mxu0 %v620
    %2887 = vmatpush.bf16.msra.mxu0 %v619
    %2888 = vmatpush.bf16.msra.mxu0 %v618
    %2889 = vmatpush.bf16.msra.mxu0 %v617
    %2890 = vmatpush.bf16.msra.mxu0 %v616
    %2891 = vmatpush.bf16.msra.mxu0 %v615
    %2892 = vmatmul.bf16.gmra.mxu0 %v2792
    %v2893 = vpop.f32.mrf.mxu0
    %v2894 = vadd.f32 %v2881, %v2893
    %v2895 = vpop.f32.mrf.mxu0
    %2896 = vdwg.mxu0
    %v2897 = vpack.c.bf16 %v2894, %v2894
    %v2898 = vunpack.c.l.bf16 %v2897
    %v2899 = vtanh.pop %v2898
    %v2900 = vpack.c.bf16 %v2899, %v2899
    %2901 = vmatpush.bf16.msra.mxu0 %v1060
    %2902 = vmatpush.bf16.msra.mxu0 %v1052
    %2903 = vmatpush.bf16.msra.mxu0 %v1044
    %2904 = vmatpush.bf16.msra.mxu0 %v1036
    %2905 = vmatpush.bf16.msra.mxu0 %v1028
    %2906 = vmatpush.bf16.msra.mxu0 %v1020
    %2907 = vmatpush.bf16.msra.mxu0 %v1012
    %2908 = vmatpush.bf16.msra.mxu0 %v1004
    %2909 = vmatmul.bf16.gmra.mxu0 %v2900
    %v2910 = vpop.f32.mrf.mxu0
    %v2911 = vadd.f32 %v796, %v2910
    %v2912 = vpop.f32.mrf.mxu0
    %2913 = vdwg.mxu0
    %2914 = vmatpush.bf16.msra.mxu0 %v1061
    %2915 = vmatpush.bf16.msra.mxu0 %v1053
    %2916 = vmatpush.bf16.msra.mxu0 %v1045
    %2917 = vmatpush.bf16.msra.mxu0 %v1037
    %2918 = vmatpush.bf16.msra.mxu0 %v1029
    %2919 = vmatpush.bf16.msra.mxu0 %v1021
    %2920 = vmatpush.bf16.msra.mxu0 %v1013
    %2921 = vmatpush.bf16.msra.mxu0 %v1005
    %2922 = vmatmul.bf16.gmra.mxu0 %v2900
    %v2923 = vpop.f32.mrf.mxu0
    %v2924 = vadd.f32 %v797, %v2923
    %v2925 = vpop.f32.mrf.mxu0
    %2926 = vdwg.mxu0
    %2927 = vmatpush.bf16.msra.mxu0 %v1062
    %2928 = vmatpush.bf16.msra.mxu0 %v1054
    %2929 = vmatpush.bf16.msra.mxu0 %v1046
    %2930 = vmatpush.bf16.msra.mxu0 %v1038
    %2931 = vmatpush.bf16.msra.mxu0 %v1030
    %2932 = vmatpush.bf16.msra.mxu0 %v1022
    %2933 = vmatpush.bf16.msra.mxu0 %v1014
    %2934 = vmatpush.bf16.msra.mxu0 %v1006
    %2935 = vmatmul.bf16.gmra.mxu0 %v2900
    %v2936 = vpop.f32.mrf.mxu0
    %v2937 = vadd.f32 %v798, %v2936
    %v2938 = vpop.f32.mrf.mxu0
    %2939 = vdwg.mxu0
    %2940 = vmatpush.bf16.msra.mxu0 %v1063
    %2941 = vmatpush.bf16.msra.mxu0 %v1055
    %2942 = vmatpush.bf16.msra.mxu0 %v1047
    %2943 = vmatpush.bf16.msra.mxu0 %v1039
    %2944 = vmatpush.bf16.msra.mxu0 %v1031
    %2945 = vmatpush.bf16.msra.mxu0 %v1023
    %2946 = vmatpush.bf16.msra.mxu0 %v1015
    %2947 = vmatpush.bf16.msra.mxu0 %v1007
    %2948 = vmatmul.bf16.gmra.mxu0 %v2900
    %v2949 = vpop.f32.mrf.mxu0
    %v2950 = vadd.f32 %v799, %v2949
    %v2951 = vpop.f32.mrf.mxu0
    %2952 = vdwg.mxu0
    %2953 = vmatpush.bf16.msra.mxu0 %v1064
    %2954 = vmatpush.bf16.msra.mxu0 %v1056
    %2955 = vmatpush.bf16.msra.mxu0 %v1048
    %2956 = vmatpush.bf16.msra.mxu0 %v1040
    %2957 = vmatpush.bf16.msra.mxu0 %v1032
    %2958 = vmatpush.bf16.msra.mxu0 %v1024
    %2959 = vmatpush.bf16.msra.mxu0 %v1016
    %2960 = vmatpush.bf16.msra.mxu0 %v1008
    %2961 = vmatmul.bf16.gmra.mxu0 %v2900
    %v2962 = vpop.f32.mrf.mxu0
    %v2963 = vadd.f32 %v800, %v2962
    %v2964 = vpop.f32.mrf.mxu0
    %2965 = vdwg.mxu0
    %2966 = vmatpush.bf16.msra.mxu0 %v1065
    %2967 = vmatpush.bf16.msra.mxu0 %v1057
    %2968 = vmatpush.bf16.msra.mxu0 %v1049
    %2969 = vmatpush.bf16.msra.mxu0 %v1041
    %2970 = vmatpush.bf16.msra.mxu0 %v1033
    %2971 = vmatpush.bf16.msra.mxu0 %v1025
    %2972 = vmatpush.bf16.msra.mxu0 %v1017
    %2973 = vmatpush.bf16.msra.mxu0 %v1009
    %2974 = vmatmul.bf16.gmra.mxu0 %v2900
    %v2975 = vpop.f32.mrf.mxu0
    %v2976 = vadd.f32 %v801, %v2975
    %v2977 = vpop.f32.mrf.mxu0
    %2978 = vdwg.mxu0
    %2979 = vmatpush.bf16.msra.mxu0 %v1066
    %2980 = vmatpush.bf16.msra.mxu0 %v1058
    %2981 = vmatpush.bf16.msra.mxu0 %v1050
    %2982 = vmatpush.bf16.msra.mxu0 %v1042
    %2983 = vmatpush.bf16.msra.mxu0 %v1034
    %2984 = vmatpush.bf16.msra.mxu0 %v1026
    %2985 = vmatpush.bf16.msra.mxu0 %v1018
    %2986 = vmatpush.bf16.msra.mxu0 %v1010
    %2987 = vmatmul.bf16.gmra.mxu0 %v2900
    %v2988 = vpop.f32.mrf.mxu0
    %v2989 = vadd.f32 %v802, %v2988
    %v2990 = vpop.f32.mrf.mxu0
    %2991 = vdwg.mxu0
    %2992 = vmatpush.bf16.msra.mxu0 %v1067
    %2993 = vmatpush.bf16.msra.mxu0 %v1059
    %2994 = vmatpush.bf16.msra.mxu0 %v1051
    %2995 = vmatpush.bf16.msra.mxu0 %v1043
    %2996 = vmatpush.bf16.msra.mxu0 %v1035
    %2997 = vmatpush.bf16.msra.mxu0 %v1027
    %2998 = vmatpush.bf16.msra.mxu0 %v1019
    %2999 = vmatpush.bf16.msra.mxu0 %v1011
    %3000 = vmatmul.bf16.gmra.mxu0 %v2900
    %v3001 = vpop.f32.mrf.mxu0
    %v3002 = vadd.f32 %v803, %v3001
    %v3003 = vpop.f32.mrf.mxu0
    %3004 = vdwg.mxu0
    %v3005 = vadd.f32 %v2407, %v2659
    %v3006 = vadd.f32 %v2420, %v2672
    %v3007 = vadd.f32 %v2433, %v2685
    %v3008 = vadd.f32 %v2446, %v2698
    %v3009 = vadd.f32 %v2459, %v2711
    %v3010 = vadd.f32 %v2472, %v2724
    %v3011 = vadd.f32 %v2485, %v2737
    %v3012 = vadd.f32 %v2498, %v2750
    %v3013 = vmul.f32 %v3005, 3.0
    %v3014 = vmul.f32 %v3006, 3.0
    %v3015 = vmul.f32 %v3007, 3.0
    %v3016 = vmul.f32 %v3008, 3.0
    %v3017 = vmul.f32 %v3009, 3.0
    %v3018 = vmul.f32 %v3010, 3.0
    %v3019 = vmul.f32 %v3011, 3.0
    %v3020 = vmul.f32 %v3012, 3.0
    %v3021 = vadd.f32 %v2162, %v3013
    %v3022 = vadd.f32 %v2175, %v3014
    %v3023 = vadd.f32 %v2188, %v3015
    %v3024 = vadd.f32 %v2201, %v3016
    %v3025 = vadd.f32 %v2214, %v3017
    %v3026 = vadd.f32 %v2227, %v3018
    %v3027 = vadd.f32 %v2240, %v3019
    %v3028 = vadd.f32 %v2253, %v3020
    %v3029 = vadd.f32 %v3021, %v2911
    %v3030 = vadd.f32 %v3022, %v2924
    %v3031 = vadd.f32 %v3023, %v2937
    %v3032 = vadd.f32 %v3024, %v2950
    %v3033 = vadd.f32 %v3025, %v2963
    %v3034 = vadd.f32 %v3026, %v2976
    %v3035 = vadd.f32 %v3027, %v2989
    %v3036 = vadd.f32 %v3028, %v3002
    %s3037 = smul.f32 %s2035, 0.125
    %v3038 = vstv %s3037
    %v3039 = vmul.f32 %v3029, %v3038
    %v3040 = vmul.f32 %v3030, %v3038
    %v3041 = vmul.f32 %v3031, %v3038
    %v3042 = vmul.f32 %v3032, %v3038
    %v3043 = vmul.f32 %v3033, %v3038
    %v3044 = vmul.f32 %v3034, %v3038
    %v3045 = vmul.f32 %v3035, %v3038
    %v3046 = vmul.f32 %v3036, %v3038
    %v3047 = vadd.f32 %v2027, %v3039
    %v3048 = vadd.f32 %v2028, %v3040
    %v3049 = vadd.f32 %v2029, %v3041
    %v3050 = vadd.f32 %v2030, %v3042
    %v3051 = vadd.f32 %v2031, %v3043
    %v3052 = vadd.f32 %v2032, %v3044
    %v3053 = vadd.f32 %v2033, %v3045
    %v3054 = vadd.f32 %v2034, %v3046
    %s3055 = sld [smem:[#allocation3 + $0x2]]
    %v3056 = vpack.c.bf16 %v3047, %v3047
    %v3057 = vpack.c.bf16 %v3048, %v3048
    %v3058 = vpack.c.bf16 %v3049, %v3049
    %v3059 = vpack.c.bf16 %v3050, %v3050
    %v3060 = vpack.c.bf16 %v3051, %v3051
    %v3061 = vpack.c.bf16 %v3052, %v3052
    %v3062 = vpack.c.bf16 %v3053, %v3053
    %v3063 = vpack.c.bf16 %v3054, %v3054
    %3064 = vmatpush.bf16.msra.mxu0 %v566
    %3065 = vmatpush.bf16.msra.mxu0 %v565
    %3066 = vmatpush.bf16.msra.mxu0 %v564
    %3067 = vmatpush.bf16.msra.mxu0 %v563
    %3068 = vmatpush.bf16.msra.mxu0 %v562
    %3069 = vmatpush.bf16.msra.mxu0 %v561
    %3070 = vmatpush.bf16.msra.mxu0 %v560
    %3071 = vmatpush.bf16.msra.mxu0 %v559
    %3072 = vmatmul.bf16.gmra.mxu0 %v3056
    %v3073 = vpop.f32.mrf.mxu0
    %v3074 = vadd.f32 %v301, %v3073
    %v3075 = vpop.f32.mrf.mxu0
    %3076 = vdwg.mxu0
    %3077 = vmatpush.bf16.msra.mxu0 %v574
    %3078 = vmatpush.bf16.msra.mxu0 %v573
    %3079 = vmatpush.bf16.msra.mxu0 %v572
    %3080 = vmatpush.bf16.msra.mxu0 %v571
    %3081 = vmatpush.bf16.msra.mxu0 %v570
    %3082 = vmatpush.bf16.msra.mxu0 %v569
    %3083 = vmatpush.bf16.msra.mxu0 %v568
    %3084 = vmatpush.bf16.msra.mxu0 %v567
    %3085 = vmatmul.bf16.gmra.mxu0 %v3057
    %v3086 = vpop.f32.mrf.mxu0
    %v3087 = vadd.f32 %v3074, %v3086
    %v3088 = vpop.f32.mrf.mxu0
    %3089 = vdwg.mxu0
    %3090 = vmatpush.bf16.msra.mxu0 %v582
    %3091 = vmatpush.bf16.msra.mxu0 %v581
    %3092 = vmatpush.bf16.msra.mxu0 %v580
    %3093 = vmatpush.bf16.msra.mxu0 %v579
    %3094 = vmatpush.bf16.msra.mxu0 %v578
    %3095 = vmatpush.bf16.msra.mxu0 %v577
    %3096 = vmatpush.bf16.msra.mxu0 %v576
    %3097 = vmatpush.bf16.msra.mxu0 %v575
    %3098 = vmatmul.bf16.gmra.mxu0 %v3058
    %v3099 = vpop.f32.mrf.mxu0
    %v3100 = vadd.f32 %v3087, %v3099
    %v3101 = vpop.f32.mrf.mxu0
    %3102 = vdwg.mxu0
    %3103 = vmatpush.bf16.msra.mxu0 %v590
    %3104 = vmatpush.bf16.msra.mxu0 %v589
    %3105 = vmatpush.bf16.msra.mxu0 %v588
    %3106 = vmatpush.bf16.msra.mxu0 %v587
    %3107 = vmatpush.bf16.msra.mxu0 %v586
    %3108 = vmatpush.bf16.msra.mxu0 %v585
    %3109 = vmatpush.bf16.msra.mxu0 %v584
    %3110 = vmatpush.bf16.msra.mxu0 %v583
    %3111 = vmatmul.bf16.gmra.mxu0 %v3059
    %v3112 = vpop.f32.mrf.mxu0
    %v3113 = vadd.f32 %v3100, %v3112
    %v3114 = vpop.f32.mrf.mxu0
    %3115 = vdwg.mxu0
    %3116 = vmatpush.bf16.msra.mxu0 %v598
    %3117 = vmatpush.bf16.msra.mxu0 %v597
    %3118 = vmatpush.bf16.msra.mxu0 %v596
    %3119 = vmatpush.bf16.msra.mxu0 %v595
    %3120 = vmatpush.bf16.msra.mxu0 %v594
    %3121 = vmatpush.bf16.msra.mxu0 %v593
    %3122 = vmatpush.bf16.msra.mxu0 %v592
    %3123 = vmatpush.bf16.msra.mxu0 %v591
    %3124 = vmatmul.bf16.gmra.mxu0 %v3060
    %v3125 = vpop.f32.mrf.mxu0
    %v3126 = vadd.f32 %v3113, %v3125
    %v3127 = vpop.f32.mrf.mxu0
    %3128 = vdwg.mxu0
    %3129 = vmatpush.bf16.msra.mxu0 %v606
    %3130 = vmatpush.bf16.msra.mxu0 %v605
    %3131 = vmatpush.bf16.msra.mxu0 %v604
    %3132 = vmatpush.bf16.msra.mxu0 %v603
    %3133 = vmatpush.bf16.msra.mxu0 %v602
    %3134 = vmatpush.bf16.msra.mxu0 %v601
    %3135 = vmatpush.bf16.msra.mxu0 %v600
    %3136 = vmatpush.bf16.msra.mxu0 %v599
    %3137 = vmatmul.bf16.gmra.mxu0 %v3061
    %v3138 = vpop.f32.mrf.mxu0
    %v3139 = vadd.f32 %v3126, %v3138
    %v3140 = vpop.f32.mrf.mxu0
    %3141 = vdwg.mxu0
    %3142 = vmatpush.bf16.msra.mxu0 %v614
    %3143 = vmatpush.bf16.msra.mxu0 %v613
    %3144 = vmatpush.bf16.msra.mxu0 %v612
    %3145 = vmatpush.bf16.msra.mxu0 %v611
    %3146 = vmatpush.bf16.msra.mxu0 %v610
    %3147 = vmatpush.bf16.msra.mxu0 %v609
    %3148 = vmatpush.bf16.msra.mxu0 %v608
    %3149 = vmatpush.bf16.msra.mxu0 %v607
    %3150 = vmatmul.bf16.gmra.mxu0 %v3062
    %v3151 = vpop.f32.mrf.mxu0
    %v3152 = vadd.f32 %v3139, %v3151
    %v3153 = vpop.f32.mrf.mxu0
    %3154 = vdwg.mxu0
    %3155 = vmatpush.bf16.msra.mxu0 %v622
    %3156 = vmatpush.bf16.msra.mxu0 %v621
    %3157 = vmatpush.bf16.msra.mxu0 %v620
    %3158 = vmatpush.bf16.msra.mxu0 %v619
    %3159 = vmatpush.bf16.msra.mxu0 %v618
    %3160 = vmatpush.bf16.msra.mxu0 %v617
    %3161 = vmatpush.bf16.msra.mxu0 %v616
    %3162 = vmatpush.bf16.msra.mxu0 %v615
    %3163 = vmatmul.bf16.gmra.mxu0 %v3063
    %v3164 = vpop.f32.mrf.mxu0
    %v3165 = vadd.f32 %v3152, %v3164
    %v3166 = vpop.f32.mrf.mxu0
    %3167 = vdwg.mxu0
    %v3168 = vpack.c.bf16 %v3165, %v3165
    %v3169 = vunpack.c.l.bf16 %v3168
    %v3170 = vtanh.pop %v3169
    %v3171 = vpack.c.bf16 %v3170, %v3170
    %3172 = vmatpush.bf16.msra.mxu0 %v1060
    %3173 = vmatpush.bf16.msra.mxu0 %v1052
    %3174 = vmatpush.bf16.msra.mxu0 %v1044
    %3175 = vmatpush.bf16.msra.mxu0 %v1036
    %3176 = vmatpush.bf16.msra.mxu0 %v1028
    %3177 = vmatpush.bf16.msra.mxu0 %v1020
    %3178 = vmatpush.bf16.msra.mxu0 %v1012
    %3179 = vmatpush.bf16.msra.mxu0 %v1004
    %3180 = vmatmul.bf16.gmra.mxu0 %v3171
    %v3181 = vpop.f32.mrf.mxu0
    %v3182 = vadd.f32 %v796, %v3181
    %v3183 = vpop.f32.mrf.mxu0
    %3184 = vdwg.mxu0
    %3185 = vmatpush.bf16.msra.mxu0 %v1061
    %3186 = vmatpush.bf16.msra.mxu0 %v1053
    %3187 = vmatpush.bf16.msra.mxu0 %v1045
    %3188 = vmatpush.bf16.msra.mxu0 %v1037
    %3189 = vmatpush.bf16.msra.mxu0 %v1029
    %3190 = vmatpush.bf16.msra.mxu0 %v1021
    %3191 = vmatpush.bf16.msra.mxu0 %v1013
    %3192 = vmatpush.bf16.msra.mxu0 %v1005
    %3193 = vmatmul.bf16.gmra.mxu0 %v3171
    %v3194 = vpop.f32.mrf.mxu0
    %v3195 = vadd.f32 %v797, %v3194
    %v3196 = vpop.f32.mrf.mxu0
    %3197 = vdwg.mxu0
    %3198 = vmatpush.bf16.msra.mxu0 %v1062
    %3199 = vmatpush.bf16.msra.mxu0 %v1054
    %3200 = vmatpush.bf16.msra.mxu0 %v1046
    %3201 = vmatpush.bf16.msra.mxu0 %v1038
    %3202 = vmatpush.bf16.msra.mxu0 %v1030
    %3203 = vmatpush.bf16.msra.mxu0 %v1022
    %3204 = vmatpush.bf16.msra.mxu0 %v1014
    %3205 = vmatpush.bf16.msra.mxu0 %v1006
    %3206 = vmatmul.bf16.gmra.mxu0 %v3171
    %v3207 = vpop.f32.mrf.mxu0
    %v3208 = vadd.f32 %v798, %v3207
    %v3209 = vpop.f32.mrf.mxu0
    %3210 = vdwg.mxu0
    %3211 = vmatpush.bf16.msra.mxu0 %v1063
    %3212 = vmatpush.bf16.msra.mxu0 %v1055
    %3213 = vmatpush.bf16.msra.mxu0 %v1047
    %3214 = vmatpush.bf16.msra.mxu0 %v1039
    %3215 = vmatpush.bf16.msra.mxu0 %v1031
    %3216 = vmatpush.bf16.msra.mxu0 %v1023
    %3217 = vmatpush.bf16.msra.mxu0 %v1015
    %3218 = vmatpush.bf16.msra.mxu0 %v1007
    %3219 = vmatmul.bf16.gmra.mxu0 %v3171
    %v3220 = vpop.f32.mrf.mxu0
    %v3221 = vadd.f32 %v799, %v3220
    %v3222 = vpop.f32.mrf.mxu0
    %3223 = vdwg.mxu0
    %3224 = vmatpush.bf16.msra.mxu0 %v1064
    %3225 = vmatpush.bf16.msra.mxu0 %v1056
    %3226 = vmatpush.bf16.msra.mxu0 %v1048
    %3227 = vmatpush.bf16.msra.mxu0 %v1040
    %3228 = vmatpush.bf16.msra.mxu0 %v1032
    %3229 = vmatpush.bf16.msra.mxu0 %v1024
    %3230 = vmatpush.bf16.msra.mxu0 %v1016
    %3231 = vmatpush.bf16.msra.mxu0 %v1008
    %3232 = vmatmul.bf16.gmra.mxu0 %v3171
    %v3233 = vpop.f32.mrf.mxu0
    %v3234 = vadd.f32 %v800, %v3233
    %v3235 = vpop.f32.mrf.mxu0
    %3236 = vdwg.mxu0
    %3237 = vmatpush.bf16.msra.mxu0 %v1065
    %3238 = vmatpush.bf16.msra.mxu0 %v1057
    %3239 = vmatpush.bf16.msra.mxu0 %v1049
    %3240 = vmatpush.bf16.msra.mxu0 %v1041
    %3241 = vmatpush.bf16.msra.mxu0 %v1033
    %3242 = vmatpush.bf16.msra.mxu0 %v1025
    %3243 = vmatpush.bf16.msra.mxu0 %v1017
    %3244 = vmatpush.bf16.msra.mxu0 %v1009
    %3245 = vmatmul.bf16.gmra.mxu0 %v3171
    %v3246 = vpop.f32.mrf.mxu0
    %v3247 = vadd.f32 %v801, %v3246
    %v3248 = vpop.f32.mrf.mxu0
    %3249 = vdwg.mxu0
    %3250 = vmatpush.bf16.msra.mxu0 %v1066
    %3251 = vmatpush.bf16.msra.mxu0 %v1058
    %3252 = vmatpush.bf16.msra.mxu0 %v1050
    %3253 = vmatpush.bf16.msra.mxu0 %v1042
    %3254 = vmatpush.bf16.msra.mxu0 %v1034
    %3255 = vmatpush.bf16.msra.mxu0 %v1026
    %3256 = vmatpush.bf16.msra.mxu0 %v1018
    %3257 = vmatpush.bf16.msra.mxu0 %v1010
    %3258 = vmatmul.bf16.gmra.mxu0 %v3171
    %v3259 = vpop.f32.mrf.mxu0
    %v3260 = vadd.f32 %v802, %v3259
    %v3261 = vpop.f32.mrf.mxu0
    %3262 = vdwg.mxu0
    %3263 = vmatpush.bf16.msra.mxu0 %v1067
    %3264 = vmatpush.bf16.msra.mxu0 %v1059
    %3265 = vmatpush.bf16.msra.mxu0 %v1051
    %3266 = vmatpush.bf16.msra.mxu0 %v1043
    %3267 = vmatpush.bf16.msra.mxu0 %v1035
    %3268 = vmatpush.bf16.msra.mxu0 %v1027
    %3269 = vmatpush.bf16.msra.mxu0 %v1019
    %3270 = vmatpush.bf16.msra.mxu0 %v1011
    %3271 = vmatmul.bf16.gmra.mxu0 %v3171
    %v3272 = vpop.f32.mrf.mxu0
    %v3273 = vadd.f32 %v803, %v3272
    %v3274 = vpop.f32.mrf.mxu0
    %3275 = vdwg.mxu0
    %v3276 = vstv %s3055
    %v3277 = vmul.f32 %v3276, %v3182
    %v3278 = vmul.f32 %v3276, %v3195
    %v3279 = vmul.f32 %v3276, %v3208
    %v3280 = vmul.f32 %v3276, %v3221
    %v3281 = vmul.f32 %v3276, %v3234
    %v3282 = vmul.f32 %v3276, %v3247
    %v3283 = vmul.f32 %v3276, %v3260
    %v3284 = vmul.f32 %v3276, %v3273
    %v3285 = vmul.f32 %v3277, 0.33333334
    %v3286 = vmul.f32 %v3278, 0.33333334
    %v3287 = vmul.f32 %v3279, 0.33333334
    %v3288 = vmul.f32 %v3280, 0.33333334
    %v3289 = vmul.f32 %v3281, 0.33333334
    %v3290 = vmul.f32 %v3282, 0.33333334
    %v3291 = vmul.f32 %v3283, 0.33333334
    %v3292 = vmul.f32 %v3284, 0.33333334
    %v3293 = vadd.f32 %v3047, %v3285
    %v3294 = vadd.f32 %v3048, %v3286
    %v3295 = vadd.f32 %v3049, %v3287
    %v3296 = vadd.f32 %v3050, %v3288
    %v3297 = vadd.f32 %v3051, %v3289
    %v3298 = vadd.f32 %v3052, %v3290
    %v3299 = vadd.f32 %v3053, %v3291
    %v3300 = vadd.f32 %v3054, %v3292
    %v3301 = vpack.c.bf16 %v3293, %v3293
    %v3302 = vpack.c.bf16 %v3294, %v3294
    %v3303 = vpack.c.bf16 %v3295, %v3295
    %v3304 = vpack.c.bf16 %v3296, %v3296
    %v3305 = vpack.c.bf16 %v3297, %v3297
    %v3306 = vpack.c.bf16 %v3298, %v3298
    %v3307 = vpack.c.bf16 %v3299, %v3299
    %v3308 = vpack.c.bf16 %v3300, %v3300
    %3309 = vmatpush.bf16.msra.mxu0 %v566
    %3310 = vmatpush.bf16.msra.mxu0 %v565
    %3311 = vmatpush.bf16.msra.mxu0 %v564
    %3312 = vmatpush.bf16.msra.mxu0 %v563
    %3313 = vmatpush.bf16.msra.mxu0 %v562
    %3314 = vmatpush.bf16.msra.mxu0 %v561
    %3315 = vmatpush.bf16.msra.mxu0 %v560
    %3316 = vmatpush.bf16.msra.mxu0 %v559
    %3317 = vmatmul.bf16.gmra.mxu0 %v3301
    %v3318 = vpop.f32.mrf.mxu0
    %v3319 = vadd.f32 %v301, %v3318
    %v3320 = vpop.f32.mrf.mxu0
    %3321 = vdwg.mxu0
    %3322 = vmatpush.bf16.msra.mxu0 %v574
    %3323 = vmatpush.bf16.msra.mxu0 %v573
    %3324 = vmatpush.bf16.msra.mxu0 %v572
    %3325 = vmatpush.bf16.msra.mxu0 %v571
    %3326 = vmatpush.bf16.msra.mxu0 %v570
    %3327 = vmatpush.bf16.msra.mxu0 %v569
    %3328 = vmatpush.bf16.msra.mxu0 %v568
    %3329 = vmatpush.bf16.msra.mxu0 %v567
    %3330 = vmatmul.bf16.gmra.mxu0 %v3302
    %v3331 = vpop.f32.mrf.mxu0
    %v3332 = vadd.f32 %v3319, %v3331
    %v3333 = vpop.f32.mrf.mxu0
    %3334 = vdwg.mxu0
    %3335 = vmatpush.bf16.msra.mxu0 %v582
    %3336 = vmatpush.bf16.msra.mxu0 %v581
    %3337 = vmatpush.bf16.msra.mxu0 %v580
    %3338 = vmatpush.bf16.msra.mxu0 %v579
    %3339 = vmatpush.bf16.msra.mxu0 %v578
    %3340 = vmatpush.bf16.msra.mxu0 %v577
    %3341 = vmatpush.bf16.msra.mxu0 %v576
    %3342 = vmatpush.bf16.msra.mxu0 %v575
    %3343 = vmatmul.bf16.gmra.mxu0 %v3303
    %v3344 = vpop.f32.mrf.mxu0
    %v3345 = vadd.f32 %v3332, %v3344
    %v3346 = vpop.f32.mrf.mxu0
    %3347 = vdwg.mxu0
    %3348 = vmatpush.bf16.msra.mxu0 %v590
    %3349 = vmatpush.bf16.msra.mxu0 %v589
    %3350 = vmatpush.bf16.msra.mxu0 %v588
    %3351 = vmatpush.bf16.msra.mxu0 %v587
    %3352 = vmatpush.bf16.msra.mxu0 %v586
    %3353 = vmatpush.bf16.msra.mxu0 %v585
    %3354 = vmatpush.bf16.msra.mxu0 %v584
    %3355 = vmatpush.bf16.msra.mxu0 %v583
    %3356 = vmatmul.bf16.gmra.mxu0 %v3304
    %v3357 = vpop.f32.mrf.mxu0
    %v3358 = vadd.f32 %v3345, %v3357
    %v3359 = vpop.f32.mrf.mxu0
    %3360 = vdwg.mxu0
    %3361 = vmatpush.bf16.msra.mxu0 %v598
    %3362 = vmatpush.bf16.msra.mxu0 %v597
    %3363 = vmatpush.bf16.msra.mxu0 %v596
    %3364 = vmatpush.bf16.msra.mxu0 %v595
    %3365 = vmatpush.bf16.msra.mxu0 %v594
    %3366 = vmatpush.bf16.msra.mxu0 %v593
    %3367 = vmatpush.bf16.msra.mxu0 %v592
    %3368 = vmatpush.bf16.msra.mxu0 %v591
    %3369 = vmatmul.bf16.gmra.mxu0 %v3305
    %v3370 = vpop.f32.mrf.mxu0
    %v3371 = vadd.f32 %v3358, %v3370
    %v3372 = vpop.f32.mrf.mxu0
    %3373 = vdwg.mxu0
    %3374 = vmatpush.bf16.msra.mxu0 %v606
    %3375 = vmatpush.bf16.msra.mxu0 %v605
    %3376 = vmatpush.bf16.msra.mxu0 %v604
    %3377 = vmatpush.bf16.msra.mxu0 %v603
    %3378 = vmatpush.bf16.msra.mxu0 %v602
    %3379 = vmatpush.bf16.msra.mxu0 %v601
    %3380 = vmatpush.bf16.msra.mxu0 %v600
    %3381 = vmatpush.bf16.msra.mxu0 %v599
    %3382 = vmatmul.bf16.gmra.mxu0 %v3306
    %v3383 = vpop.f32.mrf.mxu0
    %v3384 = vadd.f32 %v3371, %v3383
    %v3385 = vpop.f32.mrf.mxu0
    %3386 = vdwg.mxu0
    %3387 = vmatpush.bf16.msra.mxu0 %v614
    %3388 = vmatpush.bf16.msra.mxu0 %v613
    %3389 = vmatpush.bf16.msra.mxu0 %v612
    %3390 = vmatpush.bf16.msra.mxu0 %v611
    %3391 = vmatpush.bf16.msra.mxu0 %v610
    %3392 = vmatpush.bf16.msra.mxu0 %v609
    %3393 = vmatpush.bf16.msra.mxu0 %v608
    %3394 = vmatpush.bf16.msra.mxu0 %v607
    %3395 = vmatmul.bf16.gmra.mxu0 %v3307
    %v3396 = vpop.f32.mrf.mxu0
    %v3397 = vadd.f32 %v3384, %v3396
    %v3398 = vpop.f32.mrf.mxu0
    %3399 = vdwg.mxu0
    %3400 = vmatpush.bf16.msra.mxu0 %v622
    %3401 = vmatpush.bf16.msra.mxu0 %v621
    %3402 = vmatpush.bf16.msra.mxu0 %v620
    %3403 = vmatpush.bf16.msra.mxu0 %v619
    %3404 = vmatpush.bf16.msra.mxu0 %v618
    %3405 = vmatpush.bf16.msra.mxu0 %v617
    %3406 = vmatpush.bf16.msra.mxu0 %v616
    %3407 = vmatpush.bf16.msra.mxu0 %v615
    %3408 = vmatmul.bf16.gmra.mxu0 %v3308
    %v3409 = vpop.f32.mrf.mxu0
    %v3410 = vadd.f32 %v3397, %v3409
    %v3411 = vpop.f32.mrf.mxu0
    %3412 = vdwg.mxu0
    %v3413 = vpack.c.bf16 %v3410, %v3410
    %v3414 = vunpack.c.l.bf16 %v3413
    %v3415 = vtanh.pop %v3414
    %v3416 = vpack.c.bf16 %v3415, %v3415
    %3417 = vmatpush.bf16.msra.mxu0 %v1060
    %3418 = vmatpush.bf16.msra.mxu0 %v1052
    %3419 = vmatpush.bf16.msra.mxu0 %v1044
    %3420 = vmatpush.bf16.msra.mxu0 %v1036
    %3421 = vmatpush.bf16.msra.mxu0 %v1028
    %3422 = vmatpush.bf16.msra.mxu0 %v1020
    %3423 = vmatpush.bf16.msra.mxu0 %v1012
    %3424 = vmatpush.bf16.msra.mxu0 %v1004
    %3425 = vmatmul.bf16.gmra.mxu0 %v3416
    %v3426 = vpop.f32.mrf.mxu0
    %v3427 = vadd.f32 %v796, %v3426
    %v3428 = vpop.f32.mrf.mxu0
    %3429 = vdwg.mxu0
    %3430 = vmatpush.bf16.msra.mxu0 %v1061
    %3431 = vmatpush.bf16.msra.mxu0 %v1053
    %3432 = vmatpush.bf16.msra.mxu0 %v1045
    %3433 = vmatpush.bf16.msra.mxu0 %v1037
    %3434 = vmatpush.bf16.msra.mxu0 %v1029
    %3435 = vmatpush.bf16.msra.mxu0 %v1021
    %3436 = vmatpush.bf16.msra.mxu0 %v1013
    %3437 = vmatpush.bf16.msra.mxu0 %v1005
    %3438 = vmatmul.bf16.gmra.mxu0 %v3416
    %v3439 = vpop.f32.mrf.mxu0
    %v3440 = vadd.f32 %v797, %v3439
    %v3441 = vpop.f32.mrf.mxu0
    %3442 = vdwg.mxu0
    %3443 = vmatpush.bf16.msra.mxu0 %v1062
    %3444 = vmatpush.bf16.msra.mxu0 %v1054
    %3445 = vmatpush.bf16.msra.mxu0 %v1046
    %3446 = vmatpush.bf16.msra.mxu0 %v1038
    %3447 = vmatpush.bf16.msra.mxu0 %v1030
    %3448 = vmatpush.bf16.msra.mxu0 %v1022
    %3449 = vmatpush.bf16.msra.mxu0 %v1014
    %3450 = vmatpush.bf16.msra.mxu0 %v1006
    %3451 = vmatmul.bf16.gmra.mxu0 %v3416
    %v3452 = vpop.f32.mrf.mxu0
    %v3453 = vadd.f32 %v798, %v3452
    %v3454 = vpop.f32.mrf.mxu0
    %3455 = vdwg.mxu0
    %3456 = vmatpush.bf16.msra.mxu0 %v1063
    %3457 = vmatpush.bf16.msra.mxu0 %v1055
    %3458 = vmatpush.bf16.msra.mxu0 %v1047
    %3459 = vmatpush.bf16.msra.mxu0 %v1039
    %3460 = vmatpush.bf16.msra.mxu0 %v1031
    %3461 = vmatpush.bf16.msra.mxu0 %v1023
    %3462 = vmatpush.bf16.msra.mxu0 %v1015
    %3463 = vmatpush.bf16.msra.mxu0 %v1007
    %3464 = vmatmul.bf16.gmra.mxu0 %v3416
    %v3465 = vpop.f32.mrf.mxu0
    %v3466 = vadd.f32 %v799, %v3465
    %v3467 = vpop.f32.mrf.mxu0
    %3468 = vdwg.mxu0
    %3469 = vmatpush.bf16.msra.mxu0 %v1064
    %3470 = vmatpush.bf16.msra.mxu0 %v1056
    %3471 = vmatpush.bf16.msra.mxu0 %v1048
    %3472 = vmatpush.bf16.msra.mxu0 %v1040
    %3473 = vmatpush.bf16.msra.mxu0 %v1032
    %3474 = vmatpush.bf16.msra.mxu0 %v1024
    %3475 = vmatpush.bf16.msra.mxu0 %v1016
    %3476 = vmatpush.bf16.msra.mxu0 %v1008
    %3477 = vmatmul.bf16.gmra.mxu0 %v3416
    %v3478 = vpop.f32.mrf.mxu0
    %v3479 = vadd.f32 %v800, %v3478
    %v3480 = vpop.f32.mrf.mxu0
    %3481 = vdwg.mxu0
    %3482 = vmatpush.bf16.msra.mxu0 %v1065
    %3483 = vmatpush.bf16.msra.mxu0 %v1057
    %3484 = vmatpush.bf16.msra.mxu0 %v1049
    %3485 = vmatpush.bf16.msra.mxu0 %v1041
    %3486 = vmatpush.bf16.msra.mxu0 %v1033
    %3487 = vmatpush.bf16.msra.mxu0 %v1025
    %3488 = vmatpush.bf16.msra.mxu0 %v1017
    %3489 = vmatpush.bf16.msra.mxu0 %v1009
    %3490 = vmatmul.bf16.gmra.mxu0 %v3416
    %v3491 = vpop.f32.mrf.mxu0
    %v3492 = vadd.f32 %v801, %v3491
    %v3493 = vpop.f32.mrf.mxu0
    %3494 = vdwg.mxu0
    %3495 = vmatpush.bf16.msra.mxu0 %v1066
    %3496 = vmatpush.bf16.msra.mxu0 %v1058
    %3497 = vmatpush.bf16.msra.mxu0 %v1050
    %3498 = vmatpush.bf16.msra.mxu0 %v1042
    %3499 = vmatpush.bf16.msra.mxu0 %v1034
    %3500 = vmatpush.bf16.msra.mxu0 %v1026
    %3501 = vmatpush.bf16.msra.mxu0 %v1018
    %3502 = vmatpush.bf16.msra.mxu0 %v1010
    %3503 = vmatmul.bf16.gmra.mxu0 %v3416
    %v3504 = vpop.f32.mrf.mxu0
    %v3505 = vadd.f32 %v802, %v3504
    %v3506 = vpop.f32.mrf.mxu0
    %3507 = vdwg.mxu0
    %3508 = vmatpush.bf16.msra.mxu0 %v1067
    %3509 = vmatpush.bf16.msra.mxu0 %v1059
    %3510 = vmatpush.bf16.msra.mxu0 %v1051
    %3511 = vmatpush.bf16.msra.mxu0 %v1043
    %3512 = vmatpush.bf16.msra.mxu0 %v1035
    %3513 = vmatpush.bf16.msra.mxu0 %v1027
    %3514 = vmatpush.bf16.msra.mxu0 %v1019
    %3515 = vmatpush.bf16.msra.mxu0 %v1011
    %3516 = vmatmul.bf16.gmra.mxu0 %v3416
    %v3517 = vpop.f32.mrf.mxu0
    %v3518 = vadd.f32 %v803, %v3517
    %v3519 = vpop.f32.mrf.mxu0
    %3520 = vdwg.mxu0
    %v3521 = vmul.f32 %v3182, 0.33333334
    %v3522 = vmul.f32 %v3195, 0.33333334
    %v3523 = vmul.f32 %v3208, 0.33333334
    %v3524 = vmul.f32 %v3221, 0.33333334
    %v3525 = vmul.f32 %v3234, 0.33333334
    %v3526 = vmul.f32 %v3247, 0.33333334
    %v3527 = vmul.f32 %v3260, 0.33333334
    %v3528 = vmul.f32 %v3273, 0.33333334
    %v3529 = vsub.f32 %v3427, %v3521
    %v3530 = vsub.f32 %v3440, %v3522
    %v3531 = vsub.f32 %v3453, %v3523
    %v3532 = vsub.f32 %v3466, %v3524
    %v3533 = vsub.f32 %v3479, %v3525
    %v3534 = vsub.f32 %v3492, %v3526
    %v3535 = vsub.f32 %v3505, %v3527
    %v3536 = vsub.f32 %v3518, %v3528
    %v3537 = vmul.f32 %v3276, %v3529
    %v3538 = vmul.f32 %v3276, %v3530
    %v3539 = vmul.f32 %v3276, %v3531
    %v3540 = vmul.f32 %v3276, %v3532
    %v3541 = vmul.f32 %v3276, %v3533
    %v3542 = vmul.f32 %v3276, %v3534
    %v3543 = vmul.f32 %v3276, %v3535
    %v3544 = vmul.f32 %v3276, %v3536
    %v3545 = vadd.f32 %v3047, %v3537
    %v3546 = vadd.f32 %v3048, %v3538
    %v3547 = vadd.f32 %v3049, %v3539
    %v3548 = vadd.f32 %v3050, %v3540
    %v3549 = vadd.f32 %v3051, %v3541
    %v3550 = vadd.f32 %v3052, %v3542
    %v3551 = vadd.f32 %v3053, %v3543
    %v3552 = vadd.f32 %v3054, %v3544
    %v3553 = vpack.c.bf16 %v3545, %v3545
    %v3554 = vpack.c.bf16 %v3546, %v3546
    %v3555 = vpack.c.bf16 %v3547, %v3547
    %v3556 = vpack.c.bf16 %v3548, %v3548
    %v3557 = vpack.c.bf16 %v3549, %v3549
    %v3558 = vpack.c.bf16 %v3550, %v3550
    %v3559 = vpack.c.bf16 %v3551, %v3551
    %v3560 = vpack.c.bf16 %v3552, %v3552
    %3561 = vmatpush.bf16.msra.mxu0 %v566
    %3562 = vmatpush.bf16.msra.mxu0 %v565
    %3563 = vmatpush.bf16.msra.mxu0 %v564
    %3564 = vmatpush.bf16.msra.mxu0 %v563
    %3565 = vmatpush.bf16.msra.mxu0 %v562
    %3566 = vmatpush.bf16.msra.mxu0 %v561
    %3567 = vmatpush.bf16.msra.mxu0 %v560
    %3568 = vmatpush.bf16.msra.mxu0 %v559
    %3569 = vmatmul.bf16.gmra.mxu0 %v3553
    %v3570 = vpop.f32.mrf.mxu0
    %v3571 = vadd.f32 %v301, %v3570
    %v3572 = vpop.f32.mrf.mxu0
    %3573 = vdwg.mxu0
    %3574 = vmatpush.bf16.msra.mxu0 %v574
    %3575 = vmatpush.bf16.msra.mxu0 %v573
    %3576 = vmatpush.bf16.msra.mxu0 %v572
    %3577 = vmatpush.bf16.msra.mxu0 %v571
    %3578 = vmatpush.bf16.msra.mxu0 %v570
    %3579 = vmatpush.bf16.msra.mxu0 %v569
    %3580 = vmatpush.bf16.msra.mxu0 %v568
    %3581 = vmatpush.bf16.msra.mxu0 %v567
    %3582 = vmatmul.bf16.gmra.mxu0 %v3554
    %v3583 = vpop.f32.mrf.mxu0
    %v3584 = vadd.f32 %v3571, %v3583
    %v3585 = vpop.f32.mrf.mxu0
    %3586 = vdwg.mxu0
    %3587 = vmatpush.bf16.msra.mxu0 %v582
    %3588 = vmatpush.bf16.msra.mxu0 %v581
    %3589 = vmatpush.bf16.msra.mxu0 %v580
    %3590 = vmatpush.bf16.msra.mxu0 %v579
    %3591 = vmatpush.bf16.msra.mxu0 %v578
    %3592 = vmatpush.bf16.msra.mxu0 %v577
    %3593 = vmatpush.bf16.msra.mxu0 %v576
    %3594 = vmatpush.bf16.msra.mxu0 %v575
    %3595 = vmatmul.bf16.gmra.mxu0 %v3555
    %v3596 = vpop.f32.mrf.mxu0
    %v3597 = vadd.f32 %v3584, %v3596
    %v3598 = vpop.f32.mrf.mxu0
    %3599 = vdwg.mxu0
    %3600 = vmatpush.bf16.msra.mxu0 %v590
    %3601 = vmatpush.bf16.msra.mxu0 %v589
    %3602 = vmatpush.bf16.msra.mxu0 %v588
    %3603 = vmatpush.bf16.msra.mxu0 %v587
    %3604 = vmatpush.bf16.msra.mxu0 %v586
    %3605 = vmatpush.bf16.msra.mxu0 %v585
    %3606 = vmatpush.bf16.msra.mxu0 %v584
    %3607 = vmatpush.bf16.msra.mxu0 %v583
    %3608 = vmatmul.bf16.gmra.mxu0 %v3556
    %v3609 = vpop.f32.mrf.mxu0
    %v3610 = vadd.f32 %v3597, %v3609
    %v3611 = vpop.f32.mrf.mxu0
    %3612 = vdwg.mxu0
    %3613 = vmatpush.bf16.msra.mxu0 %v598
    %3614 = vmatpush.bf16.msra.mxu0 %v597
    %3615 = vmatpush.bf16.msra.mxu0 %v596
    %3616 = vmatpush.bf16.msra.mxu0 %v595
    %3617 = vmatpush.bf16.msra.mxu0 %v594
    %3618 = vmatpush.bf16.msra.mxu0 %v593
    %3619 = vmatpush.bf16.msra.mxu0 %v592
    %3620 = vmatpush.bf16.msra.mxu0 %v591
    %3621 = vmatmul.bf16.gmra.mxu0 %v3557
    %v3622 = vpop.f32.mrf.mxu0
    %v3623 = vadd.f32 %v3610, %v3622
    %v3624 = vpop.f32.mrf.mxu0
    %3625 = vdwg.mxu0
    %3626 = vmatpush.bf16.msra.mxu0 %v606
    %3627 = vmatpush.bf16.msra.mxu0 %v605
    %3628 = vmatpush.bf16.msra.mxu0 %v604
    %3629 = vmatpush.bf16.msra.mxu0 %v603
    %3630 = vmatpush.bf16.msra.mxu0 %v602
    %3631 = vmatpush.bf16.msra.mxu0 %v601
    %3632 = vmatpush.bf16.msra.mxu0 %v600
    %3633 = vmatpush.bf16.msra.mxu0 %v599
    %3634 = vmatmul.bf16.gmra.mxu0 %v3558
    %v3635 = vpop.f32.mrf.mxu0
    %v3636 = vadd.f32 %v3623, %v3635
    %v3637 = vpop.f32.mrf.mxu0
    %3638 = vdwg.mxu0
    %3639 = vmatpush.bf16.msra.mxu0 %v614
    %3640 = vmatpush.bf16.msra.mxu0 %v613
    %3641 = vmatpush.bf16.msra.mxu0 %v612
    %3642 = vmatpush.bf16.msra.mxu0 %v611
    %3643 = vmatpush.bf16.msra.mxu0 %v610
    %3644 = vmatpush.bf16.msra.mxu0 %v609
    %3645 = vmatpush.bf16.msra.mxu0 %v608
    %3646 = vmatpush.bf16.msra.mxu0 %v607
    %3647 = vmatmul.bf16.gmra.mxu0 %v3559
    %v3648 = vpop.f32.mrf.mxu0
    %v3649 = vadd.f32 %v3636, %v3648
    %v3650 = vpop.f32.mrf.mxu0
    %3651 = vdwg.mxu0
    %3652 = vmatpush.bf16.msra.mxu0 %v622
    %3653 = vmatpush.bf16.msra.mxu0 %v621
    %3654 = vmatpush.bf16.msra.mxu0 %v620
    %3655 = vmatpush.bf16.msra.mxu0 %v619
    %3656 = vmatpush.bf16.msra.mxu0 %v618
    %3657 = vmatpush.bf16.msra.mxu0 %v617
    %3658 = vmatpush.bf16.msra.mxu0 %v616
    %3659 = vmatpush.bf16.msra.mxu0 %v615
    %3660 = vmatmul.bf16.gmra.mxu0 %v3560
    %v3661 = vpop.f32.mrf.mxu0
    %v3662 = vadd.f32 %v3649, %v3661
    %v3663 = vpop.f32.mrf.mxu0
    %3664 = vdwg.mxu0
    %v3665 = vpack.c.bf16 %v3662, %v3662
    %v3666 = vunpack.c.l.bf16 %v3665
    %v3667 = vtanh.pop %v3666
    %v3668 = vpack.c.bf16 %v3667, %v3667
    %3669 = vmatpush.bf16.msra.mxu0 %v1060
    %3670 = vmatpush.bf16.msra.mxu0 %v1052
    %3671 = vmatpush.bf16.msra.mxu0 %v1044
    %3672 = vmatpush.bf16.msra.mxu0 %v1036
    %3673 = vmatpush.bf16.msra.mxu0 %v1028
    %3674 = vmatpush.bf16.msra.mxu0 %v1020
    %3675 = vmatpush.bf16.msra.mxu0 %v1012
    %3676 = vmatpush.bf16.msra.mxu0 %v1004
    %3677 = vmatmul.bf16.gmra.mxu0 %v3668
    %v3678 = vpop.f32.mrf.mxu0
    %v3679 = vadd.f32 %v796, %v3678
    %v3680 = vpop.f32.mrf.mxu0
    %3681 = vdwg.mxu0
    %3682 = vmatpush.bf16.msra.mxu0 %v1061
    %3683 = vmatpush.bf16.msra.mxu0 %v1053
    %3684 = vmatpush.bf16.msra.mxu0 %v1045
    %3685 = vmatpush.bf16.msra.mxu0 %v1037
    %3686 = vmatpush.bf16.msra.mxu0 %v1029
    %3687 = vmatpush.bf16.msra.mxu0 %v1021
    %3688 = vmatpush.bf16.msra.mxu0 %v1013
    %3689 = vmatpush.bf16.msra.mxu0 %v1005
    %3690 = vmatmul.bf16.gmra.mxu0 %v3668
    %v3691 = vpop.f32.mrf.mxu0
    %v3692 = vadd.f32 %v797, %v3691
    %v3693 = vpop.f32.mrf.mxu0
    %3694 = vdwg.mxu0
    %3695 = vmatpush.bf16.msra.mxu0 %v1062
    %3696 = vmatpush.bf16.msra.mxu0 %v1054
    %3697 = vmatpush.bf16.msra.mxu0 %v1046
    %3698 = vmatpush.bf16.msra.mxu0 %v1038
    %3699 = vmatpush.bf16.msra.mxu0 %v1030
    %3700 = vmatpush.bf16.msra.mxu0 %v1022
    %3701 = vmatpush.bf16.msra.mxu0 %v1014
    %3702 = vmatpush.bf16.msra.mxu0 %v1006
    %3703 = vmatmul.bf16.gmra.mxu0 %v3668
    %v3704 = vpop.f32.mrf.mxu0
    %v3705 = vadd.f32 %v798, %v3704
    %v3706 = vpop.f32.mrf.mxu0
    %3707 = vdwg.mxu0
    %3708 = vmatpush.bf16.msra.mxu0 %v1063
    %3709 = vmatpush.bf16.msra.mxu0 %v1055
    %3710 = vmatpush.bf16.msra.mxu0 %v1047
    %3711 = vmatpush.bf16.msra.mxu0 %v1039
    %3712 = vmatpush.bf16.msra.mxu0 %v1031
    %3713 = vmatpush.bf16.msra.mxu0 %v1023
    %3714 = vmatpush.bf16.msra.mxu0 %v1015
    %3715 = vmatpush.bf16.msra.mxu0 %v1007
    %3716 = vmatmul.bf16.gmra.mxu0 %v3668
    %v3717 = vpop.f32.mrf.mxu0
    %v3718 = vadd.f32 %v799, %v3717
    %v3719 = vpop.f32.mrf.mxu0
    %3720 = vdwg.mxu0
    %3721 = vmatpush.bf16.msra.mxu0 %v1064
    %3722 = vmatpush.bf16.msra.mxu0 %v1056
    %3723 = vmatpush.bf16.msra.mxu0 %v1048
    %3724 = vmatpush.bf16.msra.mxu0 %v1040
    %3725 = vmatpush.bf16.msra.mxu0 %v1032
    %3726 = vmatpush.bf16.msra.mxu0 %v1024
    %3727 = vmatpush.bf16.msra.mxu0 %v1016
    %3728 = vmatpush.bf16.msra.mxu0 %v1008
    %3729 = vmatmul.bf16.gmra.mxu0 %v3668
    %v3730 = vpop.f32.mrf.mxu0
    %v3731 = vadd.f32 %v800, %v3730
    %v3732 = vpop.f32.mrf.mxu0
    %3733 = vdwg.mxu0
    %3734 = vmatpush.bf16.msra.mxu0 %v1065
    %3735 = vmatpush.bf16.msra.mxu0 %v1057
    %3736 = vmatpush.bf16.msra.mxu0 %v1049
    %3737 = vmatpush.bf16.msra.mxu0 %v1041
    %3738 = vmatpush.bf16.msra.mxu0 %v1033
    %3739 = vmatpush.bf16.msra.mxu0 %v1025
    %3740 = vmatpush.bf16.msra.mxu0 %v1017
    %3741 = vmatpush.bf16.msra.mxu0 %v1009
    %3742 = vmatmul.bf16.gmra.mxu0 %v3668
    %v3743 = vpop.f32.mrf.mxu0
    %v3744 = vadd.f32 %v801, %v3743
    %v3745 = vpop.f32.mrf.mxu0
    %3746 = vdwg.mxu0
    %3747 = vmatpush.bf16.msra.mxu0 %v1066
    %3748 = vmatpush.bf16.msra.mxu0 %v1058
    %3749 = vmatpush.bf16.msra.mxu0 %v1050
    %3750 = vmatpush.bf16.msra.mxu0 %v1042
    %3751 = vmatpush.bf16.msra.mxu0 %v1034
    %3752 = vmatpush.bf16.msra.mxu0 %v1026
    %3753 = vmatpush.bf16.msra.mxu0 %v1018
    %3754 = vmatpush.bf16.msra.mxu0 %v1010
    %3755 = vmatmul.bf16.gmra.mxu0 %v3668
    %v3756 = vpop.f32.mrf.mxu0
    %v3757 = vadd.f32 %v802, %v3756
    %v3758 = vpop.f32.mrf.mxu0
    %3759 = vdwg.mxu0
    %3760 = vmatpush.bf16.msra.mxu0 %v1067
    %3761 = vmatpush.bf16.msra.mxu0 %v1059
    %3762 = vmatpush.bf16.msra.mxu0 %v1051
    %3763 = vmatpush.bf16.msra.mxu0 %v1043
    %3764 = vmatpush.bf16.msra.mxu0 %v1035
    %3765 = vmatpush.bf16.msra.mxu0 %v1027
    %3766 = vmatpush.bf16.msra.mxu0 %v1019
    %3767 = vmatpush.bf16.msra.mxu0 %v1011
    %3768 = vmatmul.bf16.gmra.mxu0 %v3668
    %v3769 = vpop.f32.mrf.mxu0
    %v3770 = vadd.f32 %v803, %v3769
    %v3771 = vpop.f32.mrf.mxu0
    %3772 = vdwg.mxu0
    %v3773 = vsub.f32 %v3182, %v3427
    %v3774 = vsub.f32 %v3195, %v3440
    %v3775 = vsub.f32 %v3208, %v3453
    %v3776 = vsub.f32 %v3221, %v3466
    %v3777 = vsub.f32 %v3234, %v3479
    %v3778 = vsub.f32 %v3247, %v3492
    %v3779 = vsub.f32 %v3260, %v3505
    %v3780 = vsub.f32 %v3273, %v3518
    %v3781 = vadd.f32 %v3773, %v3679
    %v3782 = vadd.f32 %v3774, %v3692
    %v3783 = vadd.f32 %v3775, %v3705
    %v3784 = vadd.f32 %v3776, %v3718
    %v3785 = vadd.f32 %v3777, %v3731
    %v3786 = vadd.f32 %v3778, %v3744
    %v3787 = vadd.f32 %v3779, %v3757
    %v3788 = vadd.f32 %v3780, %v3770
    %v3789 = vmul.f32 %v3276, %v3781
    %v3790 = vmul.f32 %v3276, %v3782
    %v3791 = vmul.f32 %v3276, %v3783
    %v3792 = vmul.f32 %v3276, %v3784
    %v3793 = vmul.f32 %v3276, %v3785
    %v3794 = vmul.f32 %v3276, %v3786
    %v3795 = vmul.f32 %v3276, %v3787
    %v3796 = vmul.f32 %v3276, %v3788
    %v3797 = vadd.f32 %v3047, %v3789
    %v3798 = vadd.f32 %v3048, %v3790
    %v3799 = vadd.f32 %v3049, %v3791
    %v3800 = vadd.f32 %v3050, %v3792
    %v3801 = vadd.f32 %v3051, %v3793
    %v3802 = vadd.f32 %v3052, %v3794
    %v3803 = vadd.f32 %v3053, %v3795
    %v3804 = vadd.f32 %v3054, %v3796
    %v3805 = vpack.c.bf16 %v3797, %v3797
    %v3806 = vpack.c.bf16 %v3798, %v3798
    %v3807 = vpack.c.bf16 %v3799, %v3799
    %v3808 = vpack.c.bf16 %v3800, %v3800
    %v3809 = vpack.c.bf16 %v3801, %v3801
    %v3810 = vpack.c.bf16 %v3802, %v3802
    %v3811 = vpack.c.bf16 %v3803, %v3803
    %v3812 = vpack.c.bf16 %v3804, %v3804
    %3813 = vmatpush.bf16.msra.mxu0 %v566
    %3814 = vmatpush.bf16.msra.mxu0 %v565
    %3815 = vmatpush.bf16.msra.mxu0 %v564
    %3816 = vmatpush.bf16.msra.mxu0 %v563
    %3817 = vmatpush.bf16.msra.mxu0 %v562
    %3818 = vmatpush.bf16.msra.mxu0 %v561
    %3819 = vmatpush.bf16.msra.mxu0 %v560
    %3820 = vmatpush.bf16.msra.mxu0 %v559
    %3821 = vmatmul.bf16.gmra.mxu0 %v3805
    %v3822 = vpop.f32.mrf.mxu0
    %v3823 = vadd.f32 %v301, %v3822
    %v3824 = vpop.f32.mrf.mxu0
    %3825 = vdwg.mxu0
    %3826 = vmatpush.bf16.msra.mxu0 %v574
    %3827 = vmatpush.bf16.msra.mxu0 %v573
    %3828 = vmatpush.bf16.msra.mxu0 %v572
    %3829 = vmatpush.bf16.msra.mxu0 %v571
    %3830 = vmatpush.bf16.msra.mxu0 %v570
    %3831 = vmatpush.bf16.msra.mxu0 %v569
    %3832 = vmatpush.bf16.msra.mxu0 %v568
    %3833 = vmatpush.bf16.msra.mxu0 %v567
    %3834 = vmatmul.bf16.gmra.mxu0 %v3806
    %v3835 = vpop.f32.mrf.mxu0
    %v3836 = vadd.f32 %v3823, %v3835
    %v3837 = vpop.f32.mrf.mxu0
    %3838 = vdwg.mxu0
    %3839 = vmatpush.bf16.msra.mxu0 %v582
    %3840 = vmatpush.bf16.msra.mxu0 %v581
    %3841 = vmatpush.bf16.msra.mxu0 %v580
    %3842 = vmatpush.bf16.msra.mxu0 %v579
    %3843 = vmatpush.bf16.msra.mxu0 %v578
    %3844 = vmatpush.bf16.msra.mxu0 %v577
    %3845 = vmatpush.bf16.msra.mxu0 %v576
    %3846 = vmatpush.bf16.msra.mxu0 %v575
    %3847 = vmatmul.bf16.gmra.mxu0 %v3807
    %v3848 = vpop.f32.mrf.mxu0
    %v3849 = vadd.f32 %v3836, %v3848
    %v3850 = vpop.f32.mrf.mxu0
    %3851 = vdwg.mxu0
    %3852 = vmatpush.bf16.msra.mxu0 %v590
    %3853 = vmatpush.bf16.msra.mxu0 %v589
    %3854 = vmatpush.bf16.msra.mxu0 %v588
    %3855 = vmatpush.bf16.msra.mxu0 %v587
    %3856 = vmatpush.bf16.msra.mxu0 %v586
    %3857 = vmatpush.bf16.msra.mxu0 %v585
    %3858 = vmatpush.bf16.msra.mxu0 %v584
    %3859 = vmatpush.bf16.msra.mxu0 %v583
    %3860 = vmatmul.bf16.gmra.mxu0 %v3808
    %v3861 = vpop.f32.mrf.mxu0
    %v3862 = vadd.f32 %v3849, %v3861
    %v3863 = vpop.f32.mrf.mxu0
    %3864 = vdwg.mxu0
    %3865 = vmatpush.bf16.msra.mxu0 %v598
    %3866 = vmatpush.bf16.msra.mxu0 %v597
    %3867 = vmatpush.bf16.msra.mxu0 %v596
    %3868 = vmatpush.bf16.msra.mxu0 %v595
    %3869 = vmatpush.bf16.msra.mxu0 %v594
    %3870 = vmatpush.bf16.msra.mxu0 %v593
    %3871 = vmatpush.bf16.msra.mxu0 %v592
    %3872 = vmatpush.bf16.msra.mxu0 %v591
    %3873 = vmatmul.bf16.gmra.mxu0 %v3809
    %v3874 = vpop.f32.mrf.mxu0
    %v3875 = vadd.f32 %v3862, %v3874
    %v3876 = vpop.f32.mrf.mxu0
    %3877 = vdwg.mxu0
    %3878 = vmatpush.bf16.msra.mxu0 %v606
    %3879 = vmatpush.bf16.msra.mxu0 %v605
    %3880 = vmatpush.bf16.msra.mxu0 %v604
    %3881 = vmatpush.bf16.msra.mxu0 %v603
    %3882 = vmatpush.bf16.msra.mxu0 %v602
    %3883 = vmatpush.bf16.msra.mxu0 %v601
    %3884 = vmatpush.bf16.msra.mxu0 %v600
    %3885 = vmatpush.bf16.msra.mxu0 %v599
    %3886 = vmatmul.bf16.gmra.mxu0 %v3810
    %v3887 = vpop.f32.mrf.mxu0
    %v3888 = vadd.f32 %v3875, %v3887
    %v3889 = vpop.f32.mrf.mxu0
    %3890 = vdwg.mxu0
    %3891 = vmatpush.bf16.msra.mxu0 %v614
    %3892 = vmatpush.bf16.msra.mxu0 %v613
    %3893 = vmatpush.bf16.msra.mxu0 %v612
    %3894 = vmatpush.bf16.msra.mxu0 %v611
    %3895 = vmatpush.bf16.msra.mxu0 %v610
    %3896 = vmatpush.bf16.msra.mxu0 %v609
    %3897 = vmatpush.bf16.msra.mxu0 %v608
    %3898 = vmatpush.bf16.msra.mxu0 %v607
    %3899 = vmatmul.bf16.gmra.mxu0 %v3811
    %v3900 = vpop.f32.mrf.mxu0
    %v3901 = vadd.f32 %v3888, %v3900
    %v3902 = vpop.f32.mrf.mxu0
    %3903 = vdwg.mxu0
    %3904 = vmatpush.bf16.msra.mxu0 %v622
    %3905 = vmatpush.bf16.msra.mxu0 %v621
    %3906 = vmatpush.bf16.msra.mxu0 %v620
    %3907 = vmatpush.bf16.msra.mxu0 %v619
    %3908 = vmatpush.bf16.msra.mxu0 %v618
    %3909 = vmatpush.bf16.msra.mxu0 %v617
    %3910 = vmatpush.bf16.msra.mxu0 %v616
    %3911 = vmatpush.bf16.msra.mxu0 %v615
    %3912 = vmatmul.bf16.gmra.mxu0 %v3812
    %v3913 = vpop.f32.mrf.mxu0
    %v3914 = vadd.f32 %v3901, %v3913
    %v3915 = vpop.f32.mrf.mxu0
    %3916 = vdwg.mxu0
    %v3917 = vpack.c.bf16 %v3914, %v3914
    %v3918 = vunpack.c.l.bf16 %v3917
    %v3919 = vtanh.pop %v3918
    %v3920 = vpack.c.bf16 %v3919, %v3919
    %3921 = vmatpush.bf16.msra.mxu0 %v1060
    %3922 = vmatpush.bf16.msra.mxu0 %v1052
    %3923 = vmatpush.bf16.msra.mxu0 %v1044
    %3924 = vmatpush.bf16.msra.mxu0 %v1036
    %3925 = vmatpush.bf16.msra.mxu0 %v1028
    %3926 = vmatpush.bf16.msra.mxu0 %v1020
    %3927 = vmatpush.bf16.msra.mxu0 %v1012
    %3928 = vmatpush.bf16.msra.mxu0 %v1004
    %3929 = vmatmul.bf16.gmra.mxu0 %v3920
    %v3930 = vpop.f32.mrf.mxu0
    %v3931 = vadd.f32 %v796, %v3930
    %v3932 = vpop.f32.mrf.mxu0
    %3933 = vdwg.mxu0
    %3934 = vmatpush.bf16.msra.mxu0 %v1061
    %3935 = vmatpush.bf16.msra.mxu0 %v1053
    %3936 = vmatpush.bf16.msra.mxu0 %v1045
    %3937 = vmatpush.bf16.msra.mxu0 %v1037
    %3938 = vmatpush.bf16.msra.mxu0 %v1029
    %3939 = vmatpush.bf16.msra.mxu0 %v1021
    %3940 = vmatpush.bf16.msra.mxu0 %v1013
    %3941 = vmatpush.bf16.msra.mxu0 %v1005
    %3942 = vmatmul.bf16.gmra.mxu0 %v3920
    %v3943 = vpop.f32.mrf.mxu0
    %v3944 = vadd.f32 %v797, %v3943
    %v3945 = vpop.f32.mrf.mxu0
    %3946 = vdwg.mxu0
    %3947 = vmatpush.bf16.msra.mxu0 %v1062
    %3948 = vmatpush.bf16.msra.mxu0 %v1054
    %3949 = vmatpush.bf16.msra.mxu0 %v1046
    %3950 = vmatpush.bf16.msra.mxu0 %v1038
    %3951 = vmatpush.bf16.msra.mxu0 %v1030
    %3952 = vmatpush.bf16.msra.mxu0 %v1022
    %3953 = vmatpush.bf16.msra.mxu0 %v1014
    %3954 = vmatpush.bf16.msra.mxu0 %v1006
    %3955 = vmatmul.bf16.gmra.mxu0 %v3920
    %v3956 = vpop.f32.mrf.mxu0
    %v3957 = vadd.f32 %v798, %v3956
    %v3958 = vpop.f32.mrf.mxu0
    %3959 = vdwg.mxu0
    %3960 = vmatpush.bf16.msra.mxu0 %v1063
    %3961 = vmatpush.bf16.msra.mxu0 %v1055
    %3962 = vmatpush.bf16.msra.mxu0 %v1047
    %3963 = vmatpush.bf16.msra.mxu0 %v1039
    %3964 = vmatpush.bf16.msra.mxu0 %v1031
    %3965 = vmatpush.bf16.msra.mxu0 %v1023
    %3966 = vmatpush.bf16.msra.mxu0 %v1015
    %3967 = vmatpush.bf16.msra.mxu0 %v1007
    %3968 = vmatmul.bf16.gmra.mxu0 %v3920
    %v3969 = vpop.f32.mrf.mxu0
    %v3970 = vadd.f32 %v799, %v3969
    %v3971 = vpop.f32.mrf.mxu0
    %3972 = vdwg.mxu0
    %3973 = vmatpush.bf16.msra.mxu0 %v1064
    %3974 = vmatpush.bf16.msra.mxu0 %v1056
    %3975 = vmatpush.bf16.msra.mxu0 %v1048
    %3976 = vmatpush.bf16.msra.mxu0 %v1040
    %3977 = vmatpush.bf16.msra.mxu0 %v1032
    %3978 = vmatpush.bf16.msra.mxu0 %v1024
    %3979 = vmatpush.bf16.msra.mxu0 %v1016
    %3980 = vmatpush.bf16.msra.mxu0 %v1008
    %3981 = vmatmul.bf16.gmra.mxu0 %v3920
    %v3982 = vpop.f32.mrf.mxu0
    %v3983 = vadd.f32 %v800, %v3982
    %v3984 = vpop.f32.mrf.mxu0
    %3985 = vdwg.mxu0
    %3986 = vmatpush.bf16.msra.mxu0 %v1065
    %3987 = vmatpush.bf16.msra.mxu0 %v1057
    %3988 = vmatpush.bf16.msra.mxu0 %v1049
    %3989 = vmatpush.bf16.msra.mxu0 %v1041
    %3990 = vmatpush.bf16.msra.mxu0 %v1033
    %3991 = vmatpush.bf16.msra.mxu0 %v1025
    %3992 = vmatpush.bf16.msra.mxu0 %v1017
    %3993 = vmatpush.bf16.msra.mxu0 %v1009
    %3994 = vmatmul.bf16.gmra.mxu0 %v3920
    %v3995 = vpop.f32.mrf.mxu0
    %v3996 = vadd.f32 %v801, %v3995
    %v3997 = vpop.f32.mrf.mxu0
    %3998 = vdwg.mxu0
    %3999 = vmatpush.bf16.msra.mxu0 %v1066
    %4000 = vmatpush.bf16.msra.mxu0 %v1058
    %4001 = vmatpush.bf16.msra.mxu0 %v1050
    %4002 = vmatpush.bf16.msra.mxu0 %v1042
    %4003 = vmatpush.bf16.msra.mxu0 %v1034
    %4004 = vmatpush.bf16.msra.mxu0 %v1026
    %4005 = vmatpush.bf16.msra.mxu0 %v1018
    %4006 = vmatpush.bf16.msra.mxu0 %v1010
    %4007 = vmatmul.bf16.gmra.mxu0 %v3920
    %v4008 = vpop.f32.mrf.mxu0
    %v4009 = vadd.f32 %v802, %v4008
    %v4010 = vpop.f32.mrf.mxu0
    %4011 = vdwg.mxu0
    %4012 = vmatpush.bf16.msra.mxu0 %v1067
    %4013 = vmatpush.bf16.msra.mxu0 %v1059
    %4014 = vmatpush.bf16.msra.mxu0 %v1051
    %4015 = vmatpush.bf16.msra.mxu0 %v1043
    %4016 = vmatpush.bf16.msra.mxu0 %v1035
    %4017 = vmatpush.bf16.msra.mxu0 %v1027
    %4018 = vmatpush.bf16.msra.mxu0 %v1019
    %4019 = vmatpush.bf16.msra.mxu0 %v1011
    %4020 = vmatmul.bf16.gmra.mxu0 %v3920
    %v4021 = vpop.f32.mrf.mxu0
    %v4022 = vadd.f32 %v803, %v4021
    %v4023 = vpop.f32.mrf.mxu0
    %4024 = vdwg.mxu0
    %v4025 = vadd.f32 %v3427, %v3679
    %v4026 = vadd.f32 %v3440, %v3692
    %v4027 = vadd.f32 %v3453, %v3705
    %v4028 = vadd.f32 %v3466, %v3718
    %v4029 = vadd.f32 %v3479, %v3731
    %v4030 = vadd.f32 %v3492, %v3744
    %v4031 = vadd.f32 %v3505, %v3757
    %v4032 = vadd.f32 %v3518, %v3770
    %v4033 = vmul.f32 %v4025, 3.0
    %v4034 = vmul.f32 %v4026, 3.0
    %v4035 = vmul.f32 %v4027, 3.0
    %v4036 = vmul.f32 %v4028, 3.0
    %v4037 = vmul.f32 %v4029, 3.0
    %v4038 = vmul.f32 %v4030, 3.0
    %v4039 = vmul.f32 %v4031, 3.0
    %v4040 = vmul.f32 %v4032, 3.0
    %v4041 = vadd.f32 %v3182, %v4033
    %v4042 = vadd.f32 %v3195, %v4034
    %v4043 = vadd.f32 %v3208, %v4035
    %v4044 = vadd.f32 %v3221, %v4036
    %v4045 = vadd.f32 %v3234, %v4037
    %v4046 = vadd.f32 %v3247, %v4038
    %v4047 = vadd.f32 %v3260, %v4039
    %v4048 = vadd.f32 %v3273, %v4040
    %v4049 = vadd.f32 %v4041, %v3931
    %v4050 = vadd.f32 %v4042, %v3944
    %v4051 = vadd.f32 %v4043, %v3957
    %v4052 = vadd.f32 %v4044, %v3970
    %v4053 = vadd.f32 %v4045, %v3983
    %v4054 = vadd.f32 %v4046, %v3996
    %v4055 = vadd.f32 %v4047, %v4009
    %v4056 = vadd.f32 %v4048, %v4022
    %s4057 = smul.f32 %s3055, 0.125
    %v4058 = vstv %s4057
    %v4059 = vmul.f32 %v4049, %v4058
    %v4060 = vmul.f32 %v4050, %v4058
    %v4061 = vmul.f32 %v4051, %v4058
    %v4062 = vmul.f32 %v4052, %v4058
    %v4063 = vmul.f32 %v4053, %v4058
    %v4064 = vmul.f32 %v4054, %v4058
    %v4065 = vmul.f32 %v4055, %v4058
    %v4066 = vmul.f32 %v4056, %v4058
    %v4067 = vadd.f32 %v3047, %v4059
    %v4068 = vadd.f32 %v3048, %v4060
    %v4069 = vadd.f32 %v3049, %v4061
    %v4070 = vadd.f32 %v3050, %v4062
    %v4071 = vadd.f32 %v3051, %v4063
    %v4072 = vadd.f32 %v3052, %v4064
    %v4073 = vadd.f32 %v3053, %v4065
    %v4074 = vadd.f32 %v3054, %v4066
    %s4075 = sld [smem:[#allocation3 + $0x3]]
    %v4076 = vpack.c.bf16 %v4067, %v4067
    %v4077 = vpack.c.bf16 %v4068, %v4068
    %v4078 = vpack.c.bf16 %v4069, %v4069
    %v4079 = vpack.c.bf16 %v4070, %v4070
    %v4080 = vpack.c.bf16 %v4071, %v4071
    %v4081 = vpack.c.bf16 %v4072, %v4072
    %v4082 = vpack.c.bf16 %v4073, %v4073
    %v4083 = vpack.c.bf16 %v4074, %v4074
    %4084 = vmatpush.bf16.msra.mxu0 %v566
    %4085 = vmatpush.bf16.msra.mxu0 %v565
    %4086 = vmatpush.bf16.msra.mxu0 %v564
    %4087 = vmatpush.bf16.msra.mxu0 %v563
    %4088 = vmatpush.bf16.msra.mxu0 %v562
    %4089 = vmatpush.bf16.msra.mxu0 %v561
    %4090 = vmatpush.bf16.msra.mxu0 %v560
    %4091 = vmatpush.bf16.msra.mxu0 %v559
    %4092 = vmatmul.bf16.gmra.mxu0 %v4076
    %v4093 = vpop.f32.mrf.mxu0
    %v4094 = vadd.f32 %v301, %v4093
    %v4095 = vpop.f32.mrf.mxu0
    %4096 = vdwg.mxu0
    %4097 = vmatpush.bf16.msra.mxu0 %v574
    %4098 = vmatpush.bf16.msra.mxu0 %v573
    %4099 = vmatpush.bf16.msra.mxu0 %v572
    %4100 = vmatpush.bf16.msra.mxu0 %v571
    %4101 = vmatpush.bf16.msra.mxu0 %v570
    %4102 = vmatpush.bf16.msra.mxu0 %v569
    %4103 = vmatpush.bf16.msra.mxu0 %v568
    %4104 = vmatpush.bf16.msra.mxu0 %v567
    %4105 = vmatmul.bf16.gmra.mxu0 %v4077
    %v4106 = vpop.f32.mrf.mxu0
    %v4107 = vadd.f32 %v4094, %v4106
    %v4108 = vpop.f32.mrf.mxu0
    %4109 = vdwg.mxu0
    %4110 = vmatpush.bf16.msra.mxu0 %v582
    %4111 = vmatpush.bf16.msra.mxu0 %v581
    %4112 = vmatpush.bf16.msra.mxu0 %v580
    %4113 = vmatpush.bf16.msra.mxu0 %v579
    %4114 = vmatpush.bf16.msra.mxu0 %v578
    %4115 = vmatpush.bf16.msra.mxu0 %v577
    %4116 = vmatpush.bf16.msra.mxu0 %v576
    %4117 = vmatpush.bf16.msra.mxu0 %v575
    %4118 = vmatmul.bf16.gmra.mxu0 %v4078
    %v4119 = vpop.f32.mrf.mxu0
    %v4120 = vadd.f32 %v4107, %v4119
    %v4121 = vpop.f32.mrf.mxu0
    %4122 = vdwg.mxu0
    %4123 = vmatpush.bf16.msra.mxu0 %v590
    %4124 = vmatpush.bf16.msra.mxu0 %v589
    %4125 = vmatpush.bf16.msra.mxu0 %v588
    %4126 = vmatpush.bf16.msra.mxu0 %v587
    %4127 = vmatpush.bf16.msra.mxu0 %v586
    %4128 = vmatpush.bf16.msra.mxu0 %v585
    %4129 = vmatpush.bf16.msra.mxu0 %v584
    %4130 = vmatpush.bf16.msra.mxu0 %v583
    %4131 = vmatmul.bf16.gmra.mxu0 %v4079
    %v4132 = vpop.f32.mrf.mxu0
    %v4133 = vadd.f32 %v4120, %v4132
    %v4134 = vpop.f32.mrf.mxu0
    %4135 = vdwg.mxu0
    %4136 = vmatpush.bf16.msra.mxu0 %v598
    %4137 = vmatpush.bf16.msra.mxu0 %v597
    %4138 = vmatpush.bf16.msra.mxu0 %v596
    %4139 = vmatpush.bf16.msra.mxu0 %v595
    %4140 = vmatpush.bf16.msra.mxu0 %v594
    %4141 = vmatpush.bf16.msra.mxu0 %v593
    %4142 = vmatpush.bf16.msra.mxu0 %v592
    %4143 = vmatpush.bf16.msra.mxu0 %v591
    %4144 = vmatmul.bf16.gmra.mxu0 %v4080
    %v4145 = vpop.f32.mrf.mxu0
    %v4146 = vadd.f32 %v4133, %v4145
    %v4147 = vpop.f32.mrf.mxu0
    %4148 = vdwg.mxu0
    %4149 = vmatpush.bf16.msra.mxu0 %v606
    %4150 = vmatpush.bf16.msra.mxu0 %v605
    %4151 = vmatpush.bf16.msra.mxu0 %v604
    %4152 = vmatpush.bf16.msra.mxu0 %v603
    %4153 = vmatpush.bf16.msra.mxu0 %v602
    %4154 = vmatpush.bf16.msra.mxu0 %v601
    %4155 = vmatpush.bf16.msra.mxu0 %v600
    %4156 = vmatpush.bf16.msra.mxu0 %v599
    %4157 = vmatmul.bf16.gmra.mxu0 %v4081
    %v4158 = vpop.f32.mrf.mxu0
    %v4159 = vadd.f32 %v4146, %v4158
    %v4160 = vpop.f32.mrf.mxu0
    %4161 = vdwg.mxu0
    %4162 = vmatpush.bf16.msra.mxu0 %v614
    %4163 = vmatpush.bf16.msra.mxu0 %v613
    %4164 = vmatpush.bf16.msra.mxu0 %v612
    %4165 = vmatpush.bf16.msra.mxu0 %v611
    %4166 = vmatpush.bf16.msra.mxu0 %v610
    %4167 = vmatpush.bf16.msra.mxu0 %v609
    %4168 = vmatpush.bf16.msra.mxu0 %v608
    %4169 = vmatpush.bf16.msra.mxu0 %v607
    %4170 = vmatmul.bf16.gmra.mxu0 %v4082
    %v4171 = vpop.f32.mrf.mxu0
    %v4172 = vadd.f32 %v4159, %v4171
    %v4173 = vpop.f32.mrf.mxu0
    %4174 = vdwg.mxu0
    %4175 = vmatpush.bf16.msra.mxu0 %v622
    %4176 = vmatpush.bf16.msra.mxu0 %v621
    %4177 = vmatpush.bf16.msra.mxu0 %v620
    %4178 = vmatpush.bf16.msra.mxu0 %v619
    %4179 = vmatpush.bf16.msra.mxu0 %v618
    %4180 = vmatpush.bf16.msra.mxu0 %v617
    %4181 = vmatpush.bf16.msra.mxu0 %v616
    %4182 = vmatpush.bf16.msra.mxu0 %v615
    %4183 = vmatmul.bf16.gmra.mxu0 %v4083
    %v4184 = vpop.f32.mrf.mxu0
    %v4185 = vadd.f32 %v4172, %v4184
    %v4186 = vpop.f32.mrf.mxu0
    %4187 = vdwg.mxu0
    %v4188 = vpack.c.bf16 %v4185, %v4185
    %v4189 = vunpack.c.l.bf16 %v4188
    %v4190 = vtanh.pop %v4189
    %v4191 = vpack.c.bf16 %v4190, %v4190
    %4192 = vmatpush.bf16.msra.mxu0 %v1060
    %4193 = vmatpush.bf16.msra.mxu0 %v1052
    %4194 = vmatpush.bf16.msra.mxu0 %v1044
    %4195 = vmatpush.bf16.msra.mxu0 %v1036
    %4196 = vmatpush.bf16.msra.mxu0 %v1028
    %4197 = vmatpush.bf16.msra.mxu0 %v1020
    %4198 = vmatpush.bf16.msra.mxu0 %v1012
    %4199 = vmatpush.bf16.msra.mxu0 %v1004
    %4200 = vmatmul.bf16.gmra.mxu0 %v4191
    %v4201 = vpop.f32.mrf.mxu0
    %v4202 = vadd.f32 %v796, %v4201
    %v4203 = vpop.f32.mrf.mxu0
    %4204 = vdwg.mxu0
    %4205 = vmatpush.bf16.msra.mxu0 %v1061
    %4206 = vmatpush.bf16.msra.mxu0 %v1053
    %4207 = vmatpush.bf16.msra.mxu0 %v1045
    %4208 = vmatpush.bf16.msra.mxu0 %v1037
    %4209 = vmatpush.bf16.msra.mxu0 %v1029
    %4210 = vmatpush.bf16.msra.mxu0 %v1021
    %4211 = vmatpush.bf16.msra.mxu0 %v1013
    %4212 = vmatpush.bf16.msra.mxu0 %v1005
    %4213 = vmatmul.bf16.gmra.mxu0 %v4191
    %v4214 = vpop.f32.mrf.mxu0
    %v4215 = vadd.f32 %v797, %v4214
    %v4216 = vpop.f32.mrf.mxu0
    %4217 = vdwg.mxu0
    %4218 = vmatpush.bf16.msra.mxu0 %v1062
    %4219 = vmatpush.bf16.msra.mxu0 %v1054
    %4220 = vmatpush.bf16.msra.mxu0 %v1046
    %4221 = vmatpush.bf16.msra.mxu0 %v1038
    %4222 = vmatpush.bf16.msra.mxu0 %v1030
    %4223 = vmatpush.bf16.msra.mxu0 %v1022
    %4224 = vmatpush.bf16.msra.mxu0 %v1014
    %4225 = vmatpush.bf16.msra.mxu0 %v1006
    %4226 = vmatmul.bf16.gmra.mxu0 %v4191
    %v4227 = vpop.f32.mrf.mxu0
    %v4228 = vadd.f32 %v798, %v4227
    %v4229 = vpop.f32.mrf.mxu0
    %4230 = vdwg.mxu0
    %4231 = vmatpush.bf16.msra.mxu0 %v1063
    %4232 = vmatpush.bf16.msra.mxu0 %v1055
    %4233 = vmatpush.bf16.msra.mxu0 %v1047
    %4234 = vmatpush.bf16.msra.mxu0 %v1039
    %4235 = vmatpush.bf16.msra.mxu0 %v1031
    %4236 = vmatpush.bf16.msra.mxu0 %v1023
    %4237 = vmatpush.bf16.msra.mxu0 %v1015
    %4238 = vmatpush.bf16.msra.mxu0 %v1007
    %4239 = vmatmul.bf16.gmra.mxu0 %v4191
    %v4240 = vpop.f32.mrf.mxu0
    %v4241 = vadd.f32 %v799, %v4240
    %v4242 = vpop.f32.mrf.mxu0
    %4243 = vdwg.mxu0
    %4244 = vmatpush.bf16.msra.mxu0 %v1064
    %4245 = vmatpush.bf16.msra.mxu0 %v1056
    %4246 = vmatpush.bf16.msra.mxu0 %v1048
    %4247 = vmatpush.bf16.msra.mxu0 %v1040
    %4248 = vmatpush.bf16.msra.mxu0 %v1032
    %4249 = vmatpush.bf16.msra.mxu0 %v1024
    %4250 = vmatpush.bf16.msra.mxu0 %v1016
    %4251 = vmatpush.bf16.msra.mxu0 %v1008
    %4252 = vmatmul.bf16.gmra.mxu0 %v4191
    %v4253 = vpop.f32.mrf.mxu0
    %v4254 = vadd.f32 %v800, %v4253
    %v4255 = vpop.f32.mrf.mxu0
    %4256 = vdwg.mxu0
    %4257 = vmatpush.bf16.msra.mxu0 %v1065
    %4258 = vmatpush.bf16.msra.mxu0 %v1057
    %4259 = vmatpush.bf16.msra.mxu0 %v1049
    %4260 = vmatpush.bf16.msra.mxu0 %v1041
    %4261 = vmatpush.bf16.msra.mxu0 %v1033
    %4262 = vmatpush.bf16.msra.mxu0 %v1025
    %4263 = vmatpush.bf16.msra.mxu0 %v1017
    %4264 = vmatpush.bf16.msra.mxu0 %v1009
    %4265 = vmatmul.bf16.gmra.mxu0 %v4191
    %v4266 = vpop.f32.mrf.mxu0
    %v4267 = vadd.f32 %v801, %v4266
    %v4268 = vpop.f32.mrf.mxu0
    %4269 = vdwg.mxu0
    %4270 = vmatpush.bf16.msra.mxu0 %v1066
    %4271 = vmatpush.bf16.msra.mxu0 %v1058
    %4272 = vmatpush.bf16.msra.mxu0 %v1050
    %4273 = vmatpush.bf16.msra.mxu0 %v1042
    %4274 = vmatpush.bf16.msra.mxu0 %v1034
    %4275 = vmatpush.bf16.msra.mxu0 %v1026
    %4276 = vmatpush.bf16.msra.mxu0 %v1018
    %4277 = vmatpush.bf16.msra.mxu0 %v1010
    %4278 = vmatmul.bf16.gmra.mxu0 %v4191
    %v4279 = vpop.f32.mrf.mxu0
    %v4280 = vadd.f32 %v802, %v4279
    %v4281 = vpop.f32.mrf.mxu0
    %4282 = vdwg.mxu0
    %4283 = vmatpush.bf16.msra.mxu0 %v1067
    %4284 = vmatpush.bf16.msra.mxu0 %v1059
    %4285 = vmatpush.bf16.msra.mxu0 %v1051
    %4286 = vmatpush.bf16.msra.mxu0 %v1043
    %4287 = vmatpush.bf16.msra.mxu0 %v1035
    %4288 = vmatpush.bf16.msra.mxu0 %v1027
    %4289 = vmatpush.bf16.msra.mxu0 %v1019
    %4290 = vmatpush.bf16.msra.mxu0 %v1011
    %4291 = vmatmul.bf16.gmra.mxu0 %v4191
    %v4292 = vpop.f32.mrf.mxu0
    %v4293 = vadd.f32 %v803, %v4292
    %v4294 = vpop.f32.mrf.mxu0
    %4295 = vdwg.mxu0
    %v4296 = vstv %s4075
    %v4297 = vmul.f32 %v4296, %v4202
    %v4298 = vmul.f32 %v4296, %v4215
    %v4299 = vmul.f32 %v4296, %v4228
    %v4300 = vmul.f32 %v4296, %v4241
    %v4301 = vmul.f32 %v4296, %v4254
    %v4302 = vmul.f32 %v4296, %v4267
    %v4303 = vmul.f32 %v4296, %v4280
    %v4304 = vmul.f32 %v4296, %v4293
    %v4305 = vmul.f32 %v4297, 0.33333334
    %v4306 = vmul.f32 %v4298, 0.33333334
    %v4307 = vmul.f32 %v4299, 0.33333334
    %v4308 = vmul.f32 %v4300, 0.33333334
    %v4309 = vmul.f32 %v4301, 0.33333334
    %v4310 = vmul.f32 %v4302, 0.33333334
    %v4311 = vmul.f32 %v4303, 0.33333334
    %v4312 = vmul.f32 %v4304, 0.33333334
    %v4313 = vadd.f32 %v4067, %v4305
    %v4314 = vadd.f32 %v4068, %v4306
    %v4315 = vadd.f32 %v4069, %v4307
    %v4316 = vadd.f32 %v4070, %v4308
    %v4317 = vadd.f32 %v4071, %v4309
    %v4318 = vadd.f32 %v4072, %v4310
    %v4319 = vadd.f32 %v4073, %v4311
    %v4320 = vadd.f32 %v4074, %v4312
    %v4321 = vpack.c.bf16 %v4313, %v4313
    %v4322 = vpack.c.bf16 %v4314, %v4314
    %v4323 = vpack.c.bf16 %v4315, %v4315
    %v4324 = vpack.c.bf16 %v4316, %v4316
    %v4325 = vpack.c.bf16 %v4317, %v4317
    %v4326 = vpack.c.bf16 %v4318, %v4318
    %v4327 = vpack.c.bf16 %v4319, %v4319
    %v4328 = vpack.c.bf16 %v4320, %v4320
    %4329 = vmatpush.bf16.msra.mxu0 %v566
    %4330 = vmatpush.bf16.msra.mxu0 %v565
    %4331 = vmatpush.bf16.msra.mxu0 %v564
    %4332 = vmatpush.bf16.msra.mxu0 %v563
    %4333 = vmatpush.bf16.msra.mxu0 %v562
    %4334 = vmatpush.bf16.msra.mxu0 %v561
    %4335 = vmatpush.bf16.msra.mxu0 %v560
    %4336 = vmatpush.bf16.msra.mxu0 %v559
    %4337 = vmatmul.bf16.gmra.mxu0 %v4321
    %v4338 = vpop.f32.mrf.mxu0
    %v4339 = vadd.f32 %v301, %v4338
    %v4340 = vpop.f32.mrf.mxu0
    %4341 = vdwg.mxu0
    %4342 = vmatpush.bf16.msra.mxu0 %v574
    %4343 = vmatpush.bf16.msra.mxu0 %v573
    %4344 = vmatpush.bf16.msra.mxu0 %v572
    %4345 = vmatpush.bf16.msra.mxu0 %v571
    %4346 = vmatpush.bf16.msra.mxu0 %v570
    %4347 = vmatpush.bf16.msra.mxu0 %v569
    %4348 = vmatpush.bf16.msra.mxu0 %v568
    %4349 = vmatpush.bf16.msra.mxu0 %v567
    %4350 = vmatmul.bf16.gmra.mxu0 %v4322
    %v4351 = vpop.f32.mrf.mxu0
    %v4352 = vadd.f32 %v4339, %v4351
    %v4353 = vpop.f32.mrf.mxu0
    %4354 = vdwg.mxu0
    %4355 = vmatpush.bf16.msra.mxu0 %v582
    %4356 = vmatpush.bf16.msra.mxu0 %v581
    %4357 = vmatpush.bf16.msra.mxu0 %v580
    %4358 = vmatpush.bf16.msra.mxu0 %v579
    %4359 = vmatpush.bf16.msra.mxu0 %v578
    %4360 = vmatpush.bf16.msra.mxu0 %v577
    %4361 = vmatpush.bf16.msra.mxu0 %v576
    %4362 = vmatpush.bf16.msra.mxu0 %v575
    %4363 = vmatmul.bf16.gmra.mxu0 %v4323
    %v4364 = vpop.f32.mrf.mxu0
    %v4365 = vadd.f32 %v4352, %v4364
    %v4366 = vpop.f32.mrf.mxu0
    %4367 = vdwg.mxu0
    %4368 = vmatpush.bf16.msra.mxu0 %v590
    %4369 = vmatpush.bf16.msra.mxu0 %v589
    %4370 = vmatpush.bf16.msra.mxu0 %v588
    %4371 = vmatpush.bf16.msra.mxu0 %v587
    %4372 = vmatpush.bf16.msra.mxu0 %v586
    %4373 = vmatpush.bf16.msra.mxu0 %v585
    %4374 = vmatpush.bf16.msra.mxu0 %v584
    %4375 = vmatpush.bf16.msra.mxu0 %v583
    %4376 = vmatmul.bf16.gmra.mxu0 %v4324
    %v4377 = vpop.f32.mrf.mxu0
    %v4378 = vadd.f32 %v4365, %v4377
    %v4379 = vpop.f32.mrf.mxu0
    %4380 = vdwg.mxu0
    %4381 = vmatpush.bf16.msra.mxu0 %v598
    %4382 = vmatpush.bf16.msra.mxu0 %v597
    %4383 = vmatpush.bf16.msra.mxu0 %v596
    %4384 = vmatpush.bf16.msra.mxu0 %v595
    %4385 = vmatpush.bf16.msra.mxu0 %v594
    %4386 = vmatpush.bf16.msra.mxu0 %v593
    %4387 = vmatpush.bf16.msra.mxu0 %v592
    %4388 = vmatpush.bf16.msra.mxu0 %v591
    %4389 = vmatmul.bf16.gmra.mxu0 %v4325
    %v4390 = vpop.f32.mrf.mxu0
    %v4391 = vadd.f32 %v4378, %v4390
    %v4392 = vpop.f32.mrf.mxu0
    %4393 = vdwg.mxu0
    %4394 = vmatpush.bf16.msra.mxu0 %v606
    %4395 = vmatpush.bf16.msra.mxu0 %v605
    %4396 = vmatpush.bf16.msra.mxu0 %v604
    %4397 = vmatpush.bf16.msra.mxu0 %v603
    %4398 = vmatpush.bf16.msra.mxu0 %v602
    %4399 = vmatpush.bf16.msra.mxu0 %v601
    %4400 = vmatpush.bf16.msra.mxu0 %v600
    %4401 = vmatpush.bf16.msra.mxu0 %v599
    %4402 = vmatmul.bf16.gmra.mxu0 %v4326
    %v4403 = vpop.f32.mrf.mxu0
    %v4404 = vadd.f32 %v4391, %v4403
    %v4405 = vpop.f32.mrf.mxu0
    %4406 = vdwg.mxu0
    %4407 = vmatpush.bf16.msra.mxu0 %v614
    %4408 = vmatpush.bf16.msra.mxu0 %v613
    %4409 = vmatpush.bf16.msra.mxu0 %v612
    %4410 = vmatpush.bf16.msra.mxu0 %v611
    %4411 = vmatpush.bf16.msra.mxu0 %v610
    %4412 = vmatpush.bf16.msra.mxu0 %v609
    %4413 = vmatpush.bf16.msra.mxu0 %v608
    %4414 = vmatpush.bf16.msra.mxu0 %v607
    %4415 = vmatmul.bf16.gmra.mxu0 %v4327
    %v4416 = vpop.f32.mrf.mxu0
    %v4417 = vadd.f32 %v4404, %v4416
    %v4418 = vpop.f32.mrf.mxu0
    %4419 = vdwg.mxu0
    %4420 = vmatpush.bf16.msra.mxu0 %v622
    %4421 = vmatpush.bf16.msra.mxu0 %v621
    %4422 = vmatpush.bf16.msra.mxu0 %v620
    %4423 = vmatpush.bf16.msra.mxu0 %v619
    %4424 = vmatpush.bf16.msra.mxu0 %v618
    %4425 = vmatpush.bf16.msra.mxu0 %v617
    %4426 = vmatpush.bf16.msra.mxu0 %v616
    %4427 = vmatpush.bf16.msra.mxu0 %v615
    %4428 = vmatmul.bf16.gmra.mxu0 %v4328
    %v4429 = vpop.f32.mrf.mxu0
    %v4430 = vadd.f32 %v4417, %v4429
    %v4431 = vpop.f32.mrf.mxu0
    %4432 = vdwg.mxu0
    %v4433 = vpack.c.bf16 %v4430, %v4430
    %v4434 = vunpack.c.l.bf16 %v4433
    %v4435 = vtanh.pop %v4434
    %v4436 = vpack.c.bf16 %v4435, %v4435
    %4437 = vmatpush.bf16.msra.mxu0 %v1060
    %4438 = vmatpush.bf16.msra.mxu0 %v1052
    %4439 = vmatpush.bf16.msra.mxu0 %v1044
    %4440 = vmatpush.bf16.msra.mxu0 %v1036
    %4441 = vmatpush.bf16.msra.mxu0 %v1028
    %4442 = vmatpush.bf16.msra.mxu0 %v1020
    %4443 = vmatpush.bf16.msra.mxu0 %v1012
    %4444 = vmatpush.bf16.msra.mxu0 %v1004
    %4445 = vmatmul.bf16.gmra.mxu0 %v4436
    %v4446 = vpop.f32.mrf.mxu0
    %v4447 = vadd.f32 %v796, %v4446
    %v4448 = vpop.f32.mrf.mxu0
    %4449 = vdwg.mxu0
    %4450 = vmatpush.bf16.msra.mxu0 %v1061
    %4451 = vmatpush.bf16.msra.mxu0 %v1053
    %4452 = vmatpush.bf16.msra.mxu0 %v1045
    %4453 = vmatpush.bf16.msra.mxu0 %v1037
    %4454 = vmatpush.bf16.msra.mxu0 %v1029
    %4455 = vmatpush.bf16.msra.mxu0 %v1021
    %4456 = vmatpush.bf16.msra.mxu0 %v1013
    %4457 = vmatpush.bf16.msra.mxu0 %v1005
    %4458 = vmatmul.bf16.gmra.mxu0 %v4436
    %v4459 = vpop.f32.mrf.mxu0
    %v4460 = vadd.f32 %v797, %v4459
    %v4461 = vpop.f32.mrf.mxu0
    %4462 = vdwg.mxu0
    %4463 = vmatpush.bf16.msra.mxu0 %v1062
    %4464 = vmatpush.bf16.msra.mxu0 %v1054
    %4465 = vmatpush.bf16.msra.mxu0 %v1046
    %4466 = vmatpush.bf16.msra.mxu0 %v1038
    %4467 = vmatpush.bf16.msra.mxu0 %v1030
    %4468 = vmatpush.bf16.msra.mxu0 %v1022
    %4469 = vmatpush.bf16.msra.mxu0 %v1014
    %4470 = vmatpush.bf16.msra.mxu0 %v1006
    %4471 = vmatmul.bf16.gmra.mxu0 %v4436
    %v4472 = vpop.f32.mrf.mxu0
    %v4473 = vadd.f32 %v798, %v4472
    %v4474 = vpop.f32.mrf.mxu0
    %4475 = vdwg.mxu0
    %4476 = vmatpush.bf16.msra.mxu0 %v1063
    %4477 = vmatpush.bf16.msra.mxu0 %v1055
    %4478 = vmatpush.bf16.msra.mxu0 %v1047
    %4479 = vmatpush.bf16.msra.mxu0 %v1039
    %4480 = vmatpush.bf16.msra.mxu0 %v1031
    %4481 = vmatpush.bf16.msra.mxu0 %v1023
    %4482 = vmatpush.bf16.msra.mxu0 %v1015
    %4483 = vmatpush.bf16.msra.mxu0 %v1007
    %4484 = vmatmul.bf16.gmra.mxu0 %v4436
    %v4485 = vpop.f32.mrf.mxu0
    %v4486 = vadd.f32 %v799, %v4485
    %v4487 = vpop.f32.mrf.mxu0
    %4488 = vdwg.mxu0
    %4489 = vmatpush.bf16.msra.mxu0 %v1064
    %4490 = vmatpush.bf16.msra.mxu0 %v1056
    %4491 = vmatpush.bf16.msra.mxu0 %v1048
    %4492 = vmatpush.bf16.msra.mxu0 %v1040
    %4493 = vmatpush.bf16.msra.mxu0 %v1032
    %4494 = vmatpush.bf16.msra.mxu0 %v1024
    %4495 = vmatpush.bf16.msra.mxu0 %v1016
    %4496 = vmatpush.bf16.msra.mxu0 %v1008
    %4497 = vmatmul.bf16.gmra.mxu0 %v4436
    %v4498 = vpop.f32.mrf.mxu0
    %v4499 = vadd.f32 %v800, %v4498
    %v4500 = vpop.f32.mrf.mxu0
    %4501 = vdwg.mxu0
    %4502 = vmatpush.bf16.msra.mxu0 %v1065
    %4503 = vmatpush.bf16.msra.mxu0 %v1057
    %4504 = vmatpush.bf16.msra.mxu0 %v1049
    %4505 = vmatpush.bf16.msra.mxu0 %v1041
    %4506 = vmatpush.bf16.msra.mxu0 %v1033
    %4507 = vmatpush.bf16.msra.mxu0 %v1025
    %4508 = vmatpush.bf16.msra.mxu0 %v1017
    %4509 = vmatpush.bf16.msra.mxu0 %v1009
    %4510 = vmatmul.bf16.gmra.mxu0 %v4436
    %v4511 = vpop.f32.mrf.mxu0
    %v4512 = vadd.f32 %v801, %v4511
    %v4513 = vpop.f32.mrf.mxu0
    %4514 = vdwg.mxu0
    %4515 = vmatpush.bf16.msra.mxu0 %v1066
    %4516 = vmatpush.bf16.msra.mxu0 %v1058
    %4517 = vmatpush.bf16.msra.mxu0 %v1050
    %4518 = vmatpush.bf16.msra.mxu0 %v1042
    %4519 = vmatpush.bf16.msra.mxu0 %v1034
    %4520 = vmatpush.bf16.msra.mxu0 %v1026
    %4521 = vmatpush.bf16.msra.mxu0 %v1018
    %4522 = vmatpush.bf16.msra.mxu0 %v1010
    %4523 = vmatmul.bf16.gmra.mxu0 %v4436
    %v4524 = vpop.f32.mrf.mxu0
    %v4525 = vadd.f32 %v802, %v4524
    %v4526 = vpop.f32.mrf.mxu0
    %4527 = vdwg.mxu0
    %4528 = vmatpush.bf16.msra.mxu0 %v1067
    %4529 = vmatpush.bf16.msra.mxu0 %v1059
    %4530 = vmatpush.bf16.msra.mxu0 %v1051
    %4531 = vmatpush.bf16.msra.mxu0 %v1043
    %4532 = vmatpush.bf16.msra.mxu0 %v1035
    %4533 = vmatpush.bf16.msra.mxu0 %v1027
    %4534 = vmatpush.bf16.msra.mxu0 %v1019
    %4535 = vmatpush.bf16.msra.mxu0 %v1011
    %4536 = vmatmul.bf16.gmra.mxu0 %v4436
    %v4537 = vpop.f32.mrf.mxu0
    %v4538 = vadd.f32 %v803, %v4537
    %v4539 = vpop.f32.mrf.mxu0
    %4540 = vdwg.mxu0
    %v4541 = vmul.f32 %v4202, 0.33333334
    %v4542 = vmul.f32 %v4215, 0.33333334
    %v4543 = vmul.f32 %v4228, 0.33333334
    %v4544 = vmul.f32 %v4241, 0.33333334
    %v4545 = vmul.f32 %v4254, 0.33333334
    %v4546 = vmul.f32 %v4267, 0.33333334
    %v4547 = vmul.f32 %v4280, 0.33333334
    %v4548 = vmul.f32 %v4293, 0.33333334
    %v4549 = vsub.f32 %v4447, %v4541
    %v4550 = vsub.f32 %v4460, %v4542
    %v4551 = vsub.f32 %v4473, %v4543
    %v4552 = vsub.f32 %v4486, %v4544
    %v4553 = vsub.f32 %v4499, %v4545
    %v4554 = vsub.f32 %v4512, %v4546
    %v4555 = vsub.f32 %v4525, %v4547
    %v4556 = vsub.f32 %v4538, %v4548
    %v4557 = vmul.f32 %v4296, %v4549
    %v4558 = vmul.f32 %v4296, %v4550
    %v4559 = vmul.f32 %v4296, %v4551
    %v4560 = vmul.f32 %v4296, %v4552
    %v4561 = vmul.f32 %v4296, %v4553
    %v4562 = vmul.f32 %v4296, %v4554
    %v4563 = vmul.f32 %v4296, %v4555
    %v4564 = vmul.f32 %v4296, %v4556
    %v4565 = vadd.f32 %v4067, %v4557
    %v4566 = vadd.f32 %v4068, %v4558
    %v4567 = vadd.f32 %v4069, %v4559
    %v4568 = vadd.f32 %v4070, %v4560
    %v4569 = vadd.f32 %v4071, %v4561
    %v4570 = vadd.f32 %v4072, %v4562
    %v4571 = vadd.f32 %v4073, %v4563
    %v4572 = vadd.f32 %v4074, %v4564
    %v4573 = vpack.c.bf16 %v4565, %v4565
    %v4574 = vpack.c.bf16 %v4566, %v4566
    %v4575 = vpack.c.bf16 %v4567, %v4567
    %v4576 = vpack.c.bf16 %v4568, %v4568
    %v4577 = vpack.c.bf16 %v4569, %v4569
    %v4578 = vpack.c.bf16 %v4570, %v4570
    %v4579 = vpack.c.bf16 %v4571, %v4571
    %v4580 = vpack.c.bf16 %v4572, %v4572
    %4581 = vmatpush.bf16.msra.mxu0 %v566
    %4582 = vmatpush.bf16.msra.mxu0 %v565
    %4583 = vmatpush.bf16.msra.mxu0 %v564
    %4584 = vmatpush.bf16.msra.mxu0 %v563
    %4585 = vmatpush.bf16.msra.mxu0 %v562
    %4586 = vmatpush.bf16.msra.mxu0 %v561
    %4587 = vmatpush.bf16.msra.mxu0 %v560
    %4588 = vmatpush.bf16.msra.mxu0 %v559
    %4589 = vmatmul.bf16.gmra.mxu0 %v4573
    %v4590 = vpop.f32.mrf.mxu0
    %v4591 = vadd.f32 %v301, %v4590
    %v4592 = vpop.f32.mrf.mxu0
    %4593 = vdwg.mxu0
    %4594 = vmatpush.bf16.msra.mxu0 %v574
    %4595 = vmatpush.bf16.msra.mxu0 %v573
    %4596 = vmatpush.bf16.msra.mxu0 %v572
    %4597 = vmatpush.bf16.msra.mxu0 %v571
    %4598 = vmatpush.bf16.msra.mxu0 %v570
    %4599 = vmatpush.bf16.msra.mxu0 %v569
    %4600 = vmatpush.bf16.msra.mxu0 %v568
    %4601 = vmatpush.bf16.msra.mxu0 %v567
    %4602 = vmatmul.bf16.gmra.mxu0 %v4574
    %v4603 = vpop.f32.mrf.mxu0
    %v4604 = vadd.f32 %v4591, %v4603
    %v4605 = vpop.f32.mrf.mxu0
    %4606 = vdwg.mxu0
    %4607 = vmatpush.bf16.msra.mxu0 %v582
    %4608 = vmatpush.bf16.msra.mxu0 %v581
    %4609 = vmatpush.bf16.msra.mxu0 %v580
    %4610 = vmatpush.bf16.msra.mxu0 %v579
    %4611 = vmatpush.bf16.msra.mxu0 %v578
    %4612 = vmatpush.bf16.msra.mxu0 %v577
    %4613 = vmatpush.bf16.msra.mxu0 %v576
    %4614 = vmatpush.bf16.msra.mxu0 %v575
    %4615 = vmatmul.bf16.gmra.mxu0 %v4575
    %v4616 = vpop.f32.mrf.mxu0
    %v4617 = vadd.f32 %v4604, %v4616
    %v4618 = vpop.f32.mrf.mxu0
    %4619 = vdwg.mxu0
    %4620 = vmatpush.bf16.msra.mxu0 %v590
    %4621 = vmatpush.bf16.msra.mxu0 %v589
    %4622 = vmatpush.bf16.msra.mxu0 %v588
    %4623 = vmatpush.bf16.msra.mxu0 %v587
    %4624 = vmatpush.bf16.msra.mxu0 %v586
    %4625 = vmatpush.bf16.msra.mxu0 %v585
    %4626 = vmatpush.bf16.msra.mxu0 %v584
    %4627 = vmatpush.bf16.msra.mxu0 %v583
    %4628 = vmatmul.bf16.gmra.mxu0 %v4576
    %v4629 = vpop.f32.mrf.mxu0
    %v4630 = vadd.f32 %v4617, %v4629
    %v4631 = vpop.f32.mrf.mxu0
    %4632 = vdwg.mxu0
    %4633 = vmatpush.bf16.msra.mxu0 %v598
    %4634 = vmatpush.bf16.msra.mxu0 %v597
    %4635 = vmatpush.bf16.msra.mxu0 %v596
    %4636 = vmatpush.bf16.msra.mxu0 %v595
    %4637 = vmatpush.bf16.msra.mxu0 %v594
    %4638 = vmatpush.bf16.msra.mxu0 %v593
    %4639 = vmatpush.bf16.msra.mxu0 %v592
    %4640 = vmatpush.bf16.msra.mxu0 %v591
    %4641 = vmatmul.bf16.gmra.mxu0 %v4577
    %v4642 = vpop.f32.mrf.mxu0
    %v4643 = vadd.f32 %v4630, %v4642
    %v4644 = vpop.f32.mrf.mxu0
    %4645 = vdwg.mxu0
    %4646 = vmatpush.bf16.msra.mxu0 %v606
    %4647 = vmatpush.bf16.msra.mxu0 %v605
    %4648 = vmatpush.bf16.msra.mxu0 %v604
    %4649 = vmatpush.bf16.msra.mxu0 %v603
    %4650 = vmatpush.bf16.msra.mxu0 %v602
    %4651 = vmatpush.bf16.msra.mxu0 %v601
    %4652 = vmatpush.bf16.msra.mxu0 %v600
    %4653 = vmatpush.bf16.msra.mxu0 %v599
    %4654 = vmatmul.bf16.gmra.mxu0 %v4578
    %v4655 = vpop.f32.mrf.mxu0
    %v4656 = vadd.f32 %v4643, %v4655
    %v4657 = vpop.f32.mrf.mxu0
    %4658 = vdwg.mxu0
    %4659 = vmatpush.bf16.msra.mxu0 %v614
    %4660 = vmatpush.bf16.msra.mxu0 %v613
    %4661 = vmatpush.bf16.msra.mxu0 %v612
    %4662 = vmatpush.bf16.msra.mxu0 %v611
    %4663 = vmatpush.bf16.msra.mxu0 %v610
    %4664 = vmatpush.bf16.msra.mxu0 %v609
    %4665 = vmatpush.bf16.msra.mxu0 %v608
    %4666 = vmatpush.bf16.msra.mxu0 %v607
    %4667 = vmatmul.bf16.gmra.mxu0 %v4579
    %v4668 = vpop.f32.mrf.mxu0
    %v4669 = vadd.f32 %v4656, %v4668
    %v4670 = vpop.f32.mrf.mxu0
    %4671 = vdwg.mxu0
    %4672 = vmatpush.bf16.msra.mxu0 %v622
    %4673 = vmatpush.bf16.msra.mxu0 %v621
    %4674 = vmatpush.bf16.msra.mxu0 %v620
    %4675 = vmatpush.bf16.msra.mxu0 %v619
    %4676 = vmatpush.bf16.msra.mxu0 %v618
    %4677 = vmatpush.bf16.msra.mxu0 %v617
    %4678 = vmatpush.bf16.msra.mxu0 %v616
    %4679 = vmatpush.bf16.msra.mxu0 %v615
    %4680 = vmatmul.bf16.gmra.mxu0 %v4580
    %v4681 = vpop.f32.mrf.mxu0
    %v4682 = vadd.f32 %v4669, %v4681
    %v4683 = vpop.f32.mrf.mxu0
    %4684 = vdwg.mxu0
    %v4685 = vpack.c.bf16 %v4682, %v4682
    %v4686 = vunpack.c.l.bf16 %v4685
    %v4687 = vtanh.pop %v4686
    %v4688 = vpack.c.bf16 %v4687, %v4687
    %4689 = vmatpush.bf16.msra.mxu0 %v1060
    %4690 = vmatpush.bf16.msra.mxu0 %v1052
    %4691 = vmatpush.bf16.msra.mxu0 %v1044
    %4692 = vmatpush.bf16.msra.mxu0 %v1036
    %4693 = vmatpush.bf16.msra.mxu0 %v1028
    %4694 = vmatpush.bf16.msra.mxu0 %v1020
    %4695 = vmatpush.bf16.msra.mxu0 %v1012
    %4696 = vmatpush.bf16.msra.mxu0 %v1004
    %4697 = vmatmul.bf16.gmra.mxu0 %v4688
    %v4698 = vpop.f32.mrf.mxu0
    %v4699 = vadd.f32 %v796, %v4698
    %v4700 = vpop.f32.mrf.mxu0
    %4701 = vdwg.mxu0
    %4702 = vmatpush.bf16.msra.mxu0 %v1061
    %4703 = vmatpush.bf16.msra.mxu0 %v1053
    %4704 = vmatpush.bf16.msra.mxu0 %v1045
    %4705 = vmatpush.bf16.msra.mxu0 %v1037
    %4706 = vmatpush.bf16.msra.mxu0 %v1029
    %4707 = vmatpush.bf16.msra.mxu0 %v1021
    %4708 = vmatpush.bf16.msra.mxu0 %v1013
    %4709 = vmatpush.bf16.msra.mxu0 %v1005
    %4710 = vmatmul.bf16.gmra.mxu0 %v4688
    %v4711 = vpop.f32.mrf.mxu0
    %v4712 = vadd.f32 %v797, %v4711
    %v4713 = vpop.f32.mrf.mxu0
    %4714 = vdwg.mxu0
    %4715 = vmatpush.bf16.msra.mxu0 %v1062
    %4716 = vmatpush.bf16.msra.mxu0 %v1054
    %4717 = vmatpush.bf16.msra.mxu0 %v1046
    %4718 = vmatpush.bf16.msra.mxu0 %v1038
    %4719 = vmatpush.bf16.msra.mxu0 %v1030
    %4720 = vmatpush.bf16.msra.mxu0 %v1022
    %4721 = vmatpush.bf16.msra.mxu0 %v1014
    %4722 = vmatpush.bf16.msra.mxu0 %v1006
    %4723 = vmatmul.bf16.gmra.mxu0 %v4688
    %v4724 = vpop.f32.mrf.mxu0
    %v4725 = vadd.f32 %v798, %v4724
    %v4726 = vpop.f32.mrf.mxu0
    %4727 = vdwg.mxu0
    %4728 = vmatpush.bf16.msra.mxu0 %v1063
    %4729 = vmatpush.bf16.msra.mxu0 %v1055
    %4730 = vmatpush.bf16.msra.mxu0 %v1047
    %4731 = vmatpush.bf16.msra.mxu0 %v1039
    %4732 = vmatpush.bf16.msra.mxu0 %v1031
    %4733 = vmatpush.bf16.msra.mxu0 %v1023
    %4734 = vmatpush.bf16.msra.mxu0 %v1015
    %4735 = vmatpush.bf16.msra.mxu0 %v1007
    %4736 = vmatmul.bf16.gmra.mxu0 %v4688
    %v4737 = vpop.f32.mrf.mxu0
    %v4738 = vadd.f32 %v799, %v4737
    %v4739 = vpop.f32.mrf.mxu0
    %4740 = vdwg.mxu0
    %4741 = vmatpush.bf16.msra.mxu0 %v1064
    %4742 = vmatpush.bf16.msra.mxu0 %v1056
    %4743 = vmatpush.bf16.msra.mxu0 %v1048
    %4744 = vmatpush.bf16.msra.mxu0 %v1040
    %4745 = vmatpush.bf16.msra.mxu0 %v1032
    %4746 = vmatpush.bf16.msra.mxu0 %v1024
    %4747 = vmatpush.bf16.msra.mxu0 %v1016
    %4748 = vmatpush.bf16.msra.mxu0 %v1008
    %4749 = vmatmul.bf16.gmra.mxu0 %v4688
    %v4750 = vpop.f32.mrf.mxu0
    %v4751 = vadd.f32 %v800, %v4750
    %v4752 = vpop.f32.mrf.mxu0
    %4753 = vdwg.mxu0
    %4754 = vmatpush.bf16.msra.mxu0 %v1065
    %4755 = vmatpush.bf16.msra.mxu0 %v1057
    %4756 = vmatpush.bf16.msra.mxu0 %v1049
    %4757 = vmatpush.bf16.msra.mxu0 %v1041
    %4758 = vmatpush.bf16.msra.mxu0 %v1033
    %4759 = vmatpush.bf16.msra.mxu0 %v1025
    %4760 = vmatpush.bf16.msra.mxu0 %v1017
    %4761 = vmatpush.bf16.msra.mxu0 %v1009
    %4762 = vmatmul.bf16.gmra.mxu0 %v4688
    %v4763 = vpop.f32.mrf.mxu0
    %v4764 = vadd.f32 %v801, %v4763
    %v4765 = vpop.f32.mrf.mxu0
    %4766 = vdwg.mxu0
    %4767 = vmatpush.bf16.msra.mxu0 %v1066
    %4768 = vmatpush.bf16.msra.mxu0 %v1058
    %4769 = vmatpush.bf16.msra.mxu0 %v1050
    %4770 = vmatpush.bf16.msra.mxu0 %v1042
    %4771 = vmatpush.bf16.msra.mxu0 %v1034
    %4772 = vmatpush.bf16.msra.mxu0 %v1026
    %4773 = vmatpush.bf16.msra.mxu0 %v1018
    %4774 = vmatpush.bf16.msra.mxu0 %v1010
    %4775 = vmatmul.bf16.gmra.mxu0 %v4688
    %v4776 = vpop.f32.mrf.mxu0
    %v4777 = vadd.f32 %v802, %v4776
    %v4778 = vpop.f32.mrf.mxu0
    %4779 = vdwg.mxu0
    %4780 = vmatpush.bf16.msra.mxu0 %v1067
    %4781 = vmatpush.bf16.msra.mxu0 %v1059
    %4782 = vmatpush.bf16.msra.mxu0 %v1051
    %4783 = vmatpush.bf16.msra.mxu0 %v1043
    %4784 = vmatpush.bf16.msra.mxu0 %v1035
    %4785 = vmatpush.bf16.msra.mxu0 %v1027
    %4786 = vmatpush.bf16.msra.mxu0 %v1019
    %4787 = vmatpush.bf16.msra.mxu0 %v1011
    %4788 = vmatmul.bf16.gmra.mxu0 %v4688
    %v4789 = vpop.f32.mrf.mxu0
    %v4790 = vadd.f32 %v803, %v4789
    %v4791 = vpop.f32.mrf.mxu0
    %4792 = vdwg.mxu0
    %v4793 = vsub.f32 %v4202, %v4447
    %v4794 = vsub.f32 %v4215, %v4460
    %v4795 = vsub.f32 %v4228, %v4473
    %v4796 = vsub.f32 %v4241, %v4486
    %v4797 = vsub.f32 %v4254, %v4499
    %v4798 = vsub.f32 %v4267, %v4512
    %v4799 = vsub.f32 %v4280, %v4525
    %v4800 = vsub.f32 %v4293, %v4538
    %v4801 = vadd.f32 %v4793, %v4699
    %v4802 = vadd.f32 %v4794, %v4712
    %v4803 = vadd.f32 %v4795, %v4725
    %v4804 = vadd.f32 %v4796, %v4738
    %v4805 = vadd.f32 %v4797, %v4751
    %v4806 = vadd.f32 %v4798, %v4764
    %v4807 = vadd.f32 %v4799, %v4777
    %v4808 = vadd.f32 %v4800, %v4790
    %v4809 = vmul.f32 %v4296, %v4801
    %v4810 = vmul.f32 %v4296, %v4802
    %v4811 = vmul.f32 %v4296, %v4803
    %v4812 = vmul.f32 %v4296, %v4804
    %v4813 = vmul.f32 %v4296, %v4805
    %v4814 = vmul.f32 %v4296, %v4806
    %v4815 = vmul.f32 %v4296, %v4807
    %v4816 = vmul.f32 %v4296, %v4808
    %v4817 = vadd.f32 %v4067, %v4809
    %v4818 = vadd.f32 %v4068, %v4810
    %v4819 = vadd.f32 %v4069, %v4811
    %v4820 = vadd.f32 %v4070, %v4812
    %v4821 = vadd.f32 %v4071, %v4813
    %v4822 = vadd.f32 %v4072, %v4814
    %v4823 = vadd.f32 %v4073, %v4815
    %v4824 = vadd.f32 %v4074, %v4816
    %v4825 = vpack.c.bf16 %v4817, %v4817
    %v4826 = vpack.c.bf16 %v4818, %v4818
    %v4827 = vpack.c.bf16 %v4819, %v4819
    %v4828 = vpack.c.bf16 %v4820, %v4820
    %v4829 = vpack.c.bf16 %v4821, %v4821
    %v4830 = vpack.c.bf16 %v4822, %v4822
    %v4831 = vpack.c.bf16 %v4823, %v4823
    %v4832 = vpack.c.bf16 %v4824, %v4824
    %4833 = vmatpush.bf16.msra.mxu0 %v566
    %4834 = vmatpush.bf16.msra.mxu0 %v565
    %4835 = vmatpush.bf16.msra.mxu0 %v564
    %4836 = vmatpush.bf16.msra.mxu0 %v563
    %4837 = vmatpush.bf16.msra.mxu0 %v562
    %4838 = vmatpush.bf16.msra.mxu0 %v561
    %4839 = vmatpush.bf16.msra.mxu0 %v560
    %4840 = vmatpush.bf16.msra.mxu0 %v559
    %4841 = vmatmul.bf16.gmra.mxu0 %v4825
    %v4842 = vpop.f32.mrf.mxu0
    %v4843 = vadd.f32 %v301, %v4842
    %v4844 = vpop.f32.mrf.mxu0
    %4845 = vdwg.mxu0
    %4846 = vmatpush.bf16.msra.mxu0 %v574
    %4847 = vmatpush.bf16.msra.mxu0 %v573
    %4848 = vmatpush.bf16.msra.mxu0 %v572
    %4849 = vmatpush.bf16.msra.mxu0 %v571
    %4850 = vmatpush.bf16.msra.mxu0 %v570
    %4851 = vmatpush.bf16.msra.mxu0 %v569
    %4852 = vmatpush.bf16.msra.mxu0 %v568
    %4853 = vmatpush.bf16.msra.mxu0 %v567
    %4854 = vmatmul.bf16.gmra.mxu0 %v4826
    %v4855 = vpop.f32.mrf.mxu0
    %v4856 = vadd.f32 %v4843, %v4855
    %v4857 = vpop.f32.mrf.mxu0
    %4858 = vdwg.mxu0
    %4859 = vmatpush.bf16.msra.mxu0 %v582
    %4860 = vmatpush.bf16.msra.mxu0 %v581
    %4861 = vmatpush.bf16.msra.mxu0 %v580
    %4862 = vmatpush.bf16.msra.mxu0 %v579
    %4863 = vmatpush.bf16.msra.mxu0 %v578
    %4864 = vmatpush.bf16.msra.mxu0 %v577
    %4865 = vmatpush.bf16.msra.mxu0 %v576
    %4866 = vmatpush.bf16.msra.mxu0 %v575
    %4867 = vmatmul.bf16.gmra.mxu0 %v4827
    %v4868 = vpop.f32.mrf.mxu0
    %v4869 = vadd.f32 %v4856, %v4868
    %v4870 = vpop.f32.mrf.mxu0
    %4871 = vdwg.mxu0
    %4872 = vmatpush.bf16.msra.mxu0 %v590
    %4873 = vmatpush.bf16.msra.mxu0 %v589
    %4874 = vmatpush.bf16.msra.mxu0 %v588
    %4875 = vmatpush.bf16.msra.mxu0 %v587
    %4876 = vmatpush.bf16.msra.mxu0 %v586
    %4877 = vmatpush.bf16.msra.mxu0 %v585
    %4878 = vmatpush.bf16.msra.mxu0 %v584
    %4879 = vmatpush.bf16.msra.mxu0 %v583
    %4880 = vmatmul.bf16.gmra.mxu0 %v4828
    %v4881 = vpop.f32.mrf.mxu0
    %v4882 = vadd.f32 %v4869, %v4881
    %v4883 = vpop.f32.mrf.mxu0
    %4884 = vdwg.mxu0
    %4885 = vmatpush.bf16.msra.mxu0 %v598
    %4886 = vmatpush.bf16.msra.mxu0 %v597
    %4887 = vmatpush.bf16.msra.mxu0 %v596
    %4888 = vmatpush.bf16.msra.mxu0 %v595
    %4889 = vmatpush.bf16.msra.mxu0 %v594
    %4890 = vmatpush.bf16.msra.mxu0 %v593
    %4891 = vmatpush.bf16.msra.mxu0 %v592
    %4892 = vmatpush.bf16.msra.mxu0 %v591
    %4893 = vmatmul.bf16.gmra.mxu0 %v4829
    %v4894 = vpop.f32.mrf.mxu0
    %v4895 = vadd.f32 %v4882, %v4894
    %v4896 = vpop.f32.mrf.mxu0
    %4897 = vdwg.mxu0
    %4898 = vmatpush.bf16.msra.mxu0 %v606
    %4899 = vmatpush.bf16.msra.mxu0 %v605
    %4900 = vmatpush.bf16.msra.mxu0 %v604
    %4901 = vmatpush.bf16.msra.mxu0 %v603
    %4902 = vmatpush.bf16.msra.mxu0 %v602
    %4903 = vmatpush.bf16.msra.mxu0 %v601
    %4904 = vmatpush.bf16.msra.mxu0 %v600
    %4905 = vmatpush.bf16.msra.mxu0 %v599
    %4906 = vmatmul.bf16.gmra.mxu0 %v4830
    %v4907 = vpop.f32.mrf.mxu0
    %v4908 = vadd.f32 %v4895, %v4907
    %v4909 = vpop.f32.mrf.mxu0
    %4910 = vdwg.mxu0
    %4911 = vmatpush.bf16.msra.mxu0 %v614
    %4912 = vmatpush.bf16.msra.mxu0 %v613
    %4913 = vmatpush.bf16.msra.mxu0 %v612
    %4914 = vmatpush.bf16.msra.mxu0 %v611
    %4915 = vmatpush.bf16.msra.mxu0 %v610
    %4916 = vmatpush.bf16.msra.mxu0 %v609
    %4917 = vmatpush.bf16.msra.mxu0 %v608
    %4918 = vmatpush.bf16.msra.mxu0 %v607
    %4919 = vmatmul.bf16.gmra.mxu0 %v4831
    %v4920 = vpop.f32.mrf.mxu0
    %v4921 = vadd.f32 %v4908, %v4920
    %v4922 = vpop.f32.mrf.mxu0
    %4923 = vdwg.mxu0
    %4924 = vmatpush.bf16.msra.mxu0 %v622
    %4925 = vmatpush.bf16.msra.mxu0 %v621
    %4926 = vmatpush.bf16.msra.mxu0 %v620
    %4927 = vmatpush.bf16.msra.mxu0 %v619
    %4928 = vmatpush.bf16.msra.mxu0 %v618
    %4929 = vmatpush.bf16.msra.mxu0 %v617
    %4930 = vmatpush.bf16.msra.mxu0 %v616
    %4931 = vmatpush.bf16.msra.mxu0 %v615
    %4932 = vmatmul.bf16.gmra.mxu0 %v4832
    %v4933 = vpop.f32.mrf.mxu0
    %v4934 = vadd.f32 %v4921, %v4933
    %v4935 = vpop.f32.mrf.mxu0
    %4936 = vdwg.mxu0
    %v4937 = vpack.c.bf16 %v4934, %v4934
    %v4938 = vunpack.c.l.bf16 %v4937
    %v4939 = vtanh.pop %v4938
    %v4940 = vpack.c.bf16 %v4939, %v4939
    %4941 = vmatpush.bf16.msra.mxu0 %v1060
    %4942 = vmatpush.bf16.msra.mxu0 %v1052
    %4943 = vmatpush.bf16.msra.mxu0 %v1044
    %4944 = vmatpush.bf16.msra.mxu0 %v1036
    %4945 = vmatpush.bf16.msra.mxu0 %v1028
    %4946 = vmatpush.bf16.msra.mxu0 %v1020
    %4947 = vmatpush.bf16.msra.mxu0 %v1012
    %4948 = vmatpush.bf16.msra.mxu0 %v1004
    %4949 = vmatmul.bf16.gmra.mxu0 %v4940
    %v4950 = vpop.f32.mrf.mxu0
    %v4951 = vadd.f32 %v796, %v4950
    %v4952 = vpop.f32.mrf.mxu0
    %4953 = vdwg.mxu0
    %4954 = vmatpush.bf16.msra.mxu0 %v1061
    %4955 = vmatpush.bf16.msra.mxu0 %v1053
    %4956 = vmatpush.bf16.msra.mxu0 %v1045
    %4957 = vmatpush.bf16.msra.mxu0 %v1037
    %4958 = vmatpush.bf16.msra.mxu0 %v1029
    %4959 = vmatpush.bf16.msra.mxu0 %v1021
    %4960 = vmatpush.bf16.msra.mxu0 %v1013
    %4961 = vmatpush.bf16.msra.mxu0 %v1005
    %4962 = vmatmul.bf16.gmra.mxu0 %v4940
    %v4963 = vpop.f32.mrf.mxu0
    %v4964 = vadd.f32 %v797, %v4963
    %v4965 = vpop.f32.mrf.mxu0
    %4966 = vdwg.mxu0
    %4967 = vmatpush.bf16.msra.mxu0 %v1062
    %4968 = vmatpush.bf16.msra.mxu0 %v1054
    %4969 = vmatpush.bf16.msra.mxu0 %v1046
    %4970 = vmatpush.bf16.msra.mxu0 %v1038
    %4971 = vmatpush.bf16.msra.mxu0 %v1030
    %4972 = vmatpush.bf16.msra.mxu0 %v1022
    %4973 = vmatpush.bf16.msra.mxu0 %v1014
    %4974 = vmatpush.bf16.msra.mxu0 %v1006
    %4975 = vmatmul.bf16.gmra.mxu0 %v4940
    %v4976 = vpop.f32.mrf.mxu0
    %v4977 = vadd.f32 %v798, %v4976
    %v4978 = vpop.f32.mrf.mxu0
    %4979 = vdwg.mxu0
    %4980 = vmatpush.bf16.msra.mxu0 %v1063
    %4981 = vmatpush.bf16.msra.mxu0 %v1055
    %4982 = vmatpush.bf16.msra.mxu0 %v1047
    %4983 = vmatpush.bf16.msra.mxu0 %v1039
    %4984 = vmatpush.bf16.msra.mxu0 %v1031
    %4985 = vmatpush.bf16.msra.mxu0 %v1023
    %4986 = vmatpush.bf16.msra.mxu0 %v1015
    %4987 = vmatpush.bf16.msra.mxu0 %v1007
    %4988 = vmatmul.bf16.gmra.mxu0 %v4940
    %v4989 = vpop.f32.mrf.mxu0
    %v4990 = vadd.f32 %v799, %v4989
    %v4991 = vpop.f32.mrf.mxu0
    %4992 = vdwg.mxu0
    %4993 = vmatpush.bf16.msra.mxu0 %v1064
    %4994 = vmatpush.bf16.msra.mxu0 %v1056
    %4995 = vmatpush.bf16.msra.mxu0 %v1048
    %4996 = vmatpush.bf16.msra.mxu0 %v1040
    %4997 = vmatpush.bf16.msra.mxu0 %v1032
    %4998 = vmatpush.bf16.msra.mxu0 %v1024
    %4999 = vmatpush.bf16.msra.mxu0 %v1016
    %5000 = vmatpush.bf16.msra.mxu0 %v1008
    %5001 = vmatmul.bf16.gmra.mxu0 %v4940
    %v5002 = vpop.f32.mrf.mxu0
    %v5003 = vadd.f32 %v800, %v5002
    %v5004 = vpop.f32.mrf.mxu0
    %5005 = vdwg.mxu0
    %5006 = vmatpush.bf16.msra.mxu0 %v1065
    %5007 = vmatpush.bf16.msra.mxu0 %v1057
    %5008 = vmatpush.bf16.msra.mxu0 %v1049
    %5009 = vmatpush.bf16.msra.mxu0 %v1041
    %5010 = vmatpush.bf16.msra.mxu0 %v1033
    %5011 = vmatpush.bf16.msra.mxu0 %v1025
    %5012 = vmatpush.bf16.msra.mxu0 %v1017
    %5013 = vmatpush.bf16.msra.mxu0 %v1009
    %5014 = vmatmul.bf16.gmra.mxu0 %v4940
    %v5015 = vpop.f32.mrf.mxu0
    %v5016 = vadd.f32 %v801, %v5015
    %v5017 = vpop.f32.mrf.mxu0
    %5018 = vdwg.mxu0
    %5019 = vmatpush.bf16.msra.mxu0 %v1066
    %5020 = vmatpush.bf16.msra.mxu0 %v1058
    %5021 = vmatpush.bf16.msra.mxu0 %v1050
    %5022 = vmatpush.bf16.msra.mxu0 %v1042
    %5023 = vmatpush.bf16.msra.mxu0 %v1034
    %5024 = vmatpush.bf16.msra.mxu0 %v1026
    %5025 = vmatpush.bf16.msra.mxu0 %v1018
    %5026 = vmatpush.bf16.msra.mxu0 %v1010
    %5027 = vmatmul.bf16.gmra.mxu0 %v4940
    %v5028 = vpop.f32.mrf.mxu0
    %v5029 = vadd.f32 %v802, %v5028
    %v5030 = vpop.f32.mrf.mxu0
    %5031 = vdwg.mxu0
    %5032 = vmatpush.bf16.msra.mxu0 %v1067
    %5033 = vmatpush.bf16.msra.mxu0 %v1059
    %5034 = vmatpush.bf16.msra.mxu0 %v1051
    %5035 = vmatpush.bf16.msra.mxu0 %v1043
    %5036 = vmatpush.bf16.msra.mxu0 %v1035
    %5037 = vmatpush.bf16.msra.mxu0 %v1027
    %5038 = vmatpush.bf16.msra.mxu0 %v1019
    %5039 = vmatpush.bf16.msra.mxu0 %v1011
    %5040 = vmatmul.bf16.gmra.mxu0 %v4940
    %v5041 = vpop.f32.mrf.mxu0
    %v5042 = vadd.f32 %v803, %v5041
    %v5043 = vpop.f32.mrf.mxu0
    %5044 = vdwg.mxu0
    %v5045 = vadd.f32 %v4447, %v4699
    %v5046 = vadd.f32 %v4460, %v4712
    %v5047 = vadd.f32 %v4473, %v4725
    %v5048 = vadd.f32 %v4486, %v4738
    %v5049 = vadd.f32 %v4499, %v4751
    %v5050 = vadd.f32 %v4512, %v4764
    %v5051 = vadd.f32 %v4525, %v4777
    %v5052 = vadd.f32 %v4538, %v4790
    %v5053 = vmul.f32 %v5045, 3.0
    %v5054 = vmul.f32 %v5046, 3.0
    %v5055 = vmul.f32 %v5047, 3.0
    %v5056 = vmul.f32 %v5048, 3.0
    %v5057 = vmul.f32 %v5049, 3.0
    %v5058 = vmul.f32 %v5050, 3.0
    %v5059 = vmul.f32 %v5051, 3.0
    %v5060 = vmul.f32 %v5052, 3.0
    %v5061 = vadd.f32 %v4202, %v5053
    %v5062 = vadd.f32 %v4215, %v5054
    %v5063 = vadd.f32 %v4228, %v5055
    %v5064 = vadd.f32 %v4241, %v5056
    %v5065 = vadd.f32 %v4254, %v5057
    %v5066 = vadd.f32 %v4267, %v5058
    %v5067 = vadd.f32 %v4280, %v5059
    %v5068 = vadd.f32 %v4293, %v5060
    %v5069 = vadd.f32 %v5061, %v4951
    %v5070 = vadd.f32 %v5062, %v4964
    %v5071 = vadd.f32 %v5063, %v4977
    %v5072 = vadd.f32 %v5064, %v4990
    %v5073 = vadd.f32 %v5065, %v5003
    %v5074 = vadd.f32 %v5066, %v5016
    %v5075 = vadd.f32 %v5067, %v5029
    %v5076 = vadd.f32 %v5068, %v5042
    %s5077 = smul.f32 %s4075, 0.125
    %v5078 = vstv %s5077
    %v5079 = vmul.f32 %v5069, %v5078
    %v5080 = vmul.f32 %v5070, %v5078
    %v5081 = vmul.f32 %v5071, %v5078
    %v5082 = vmul.f32 %v5072, %v5078
    %v5083 = vmul.f32 %v5073, %v5078
    %v5084 = vmul.f32 %v5074, %v5078
    %v5085 = vmul.f32 %v5075, %v5078
    %v5086 = vmul.f32 %v5076, %v5078
    %v5087 = vadd.f32 %v4067, %v5079
    %v5088 = vadd.f32 %v4068, %v5080
    %v5089 = vadd.f32 %v4069, %v5081
    %v5090 = vadd.f32 %v4070, %v5082
    %v5091 = vadd.f32 %v4071, %v5083
    %v5092 = vadd.f32 %v4072, %v5084
    %v5093 = vadd.f32 %v4073, %v5085
    %v5094 = vadd.f32 %v4074, %v5086
    %5095 = vst [vmem:[#allocation12] sm:$0xff] %v5087
    %5096 = vst [vmem:[#allocation12 + $0x8] sm:$0xff] %v5088
    %5097 = vst [vmem:[#allocation12 + $0x10] sm:$0xff] %v5089
    %5098 = vst [vmem:[#allocation12 + $0x18] sm:$0xff] %v5090
    %5099 = vst [vmem:[#allocation12 + $0x20] sm:$0xff] %v5091
    %5100 = vst [vmem:[#allocation12 + $0x28] sm:$0xff] %v5092
    %5101 = vst [vmem:[#allocation12 + $0x30] sm:$0xff] %v5093
    %5102 = vst [vmem:[#allocation12 + $0x38] sm:$0xff] %v5094
    // Predicated region
    $region38: #{tpu_custom_call.1} parent=1 // pred_check
      _
    $region39: #{tpu_custom_call.1} parent=1 // pred_check_branch
      %5104 = sbr.rel (0) target = $region41
    $region40: #{tpu_custom_call.1} parent=1 // pred_region
      %5106 = vsyncadd [#allocation6], 0
      %s5108 = sshll.u32 [#allocation12], 4
      %s5109 = int_to_ptr.vmem [resolvable:$true] %s5108
      %s5110 = sshll.u32 %s6, 4
      %s5111 = int_to_ptr.hbm [resolvable:$true] %s5110
      %5113 = dma.vmem_to_hbm [thread:$0]  %s5109, 1024, %s5111, [#allocation6]
    $region41: #{tpu_custom_call.1} parent=1 // pred_fallthru
      _
    // Predicated region
    $region42: #{tpu_custom_call.1} parent=1 // pred_check
      _
    $region43: #{tpu_custom_call.1} parent=1 // pred_check_branch
      %5115 = sbr.rel (0) target = $region45
    $region44: #{tpu_custom_call.1} parent=1 // pred_region
      %5117 = dma.done [#allocation6], 1024
    $region45: #{tpu_custom_call.1} parent=1 // pred_fallthru
      _
    %5118 = vsyncpa [#allocation5], 1
    %5119 = vsyncpa [#allocation8], 1
    %5120 = vsyncpa [#allocation11], 1
    %5121 = vsyncpa [#allocation6], 1

</llo_original>
